<compile_context>
chip_gen: v7x
topology: tpu7x:2x2x1
jax: 0.10.0
libtpu: 0.0.40
codegen_flags: <defaults>
</compile_context>

<pallas_src>
import functools

import jax
import jax.numpy as jnp
from jax.experimental import pallas as pl
from jax.experimental.pallas import tpu as pltpu


def _round_up(x, m):
    return (x + m - 1) // m * m


# ----------------------------------------------------------------------------
# Fused kernel
# ----------------------------------------------------------------------------
def _make_fused_kernel(*, num_blocks, hidden, cin0p, width, pixels, pad_l):
    P = pixels

    def kernel(x_ref, w0_ref, b0_ref, wb_ref, bb_ref, gam_ref, bet_ref,
               wo_ref, bo_ref, o_ref, xpad_ref, patch_ref):
        # Zero the padded row buffer once per batch item; its left/right zero
        # columns provide the conv's spatial zero padding for every layer.
        xpad_ref[...] = jnp.zeros_like(xpad_ref)

        # Horizontal-edge masks.  The flat H*W pixel axis wraps rows, so a
        # +/-1 pixel shift must be masked at the left/right image borders;
        # vertical out-of-range shifts land in the zero pad columns.
        pix = jax.lax.broadcasted_iota(jnp.int32, (1, P), 1)
        col = pix % width
        not_left = col != 0
        not_right = col != (width - 1)

        def conv3x3(cin, w_bf16, bias_col):
            # im2col: nine shifted windows of the padded row buffer are
            # written (sublane-aligned) into the patch scratch -> (9*cin, P),
            # then ONE bf16 matmul with K = 9*cin on the MXU.
            for tap in range(9):
                dy, dx = tap // 3, tap % 3
                shift = (dy - 1) * width + (dx - 1)
                win = xpad_ref[0:cin, pad_l + shift:pad_l + shift + P]
                if dx == 0:
                    win = jnp.where(not_left, win, 0.0)
                elif dx == 2:
                    win = jnp.where(not_right, win, 0.0)
                patch_ref[tap * cin:(tap + 1) * cin, :] = win
            patches = patch_ref[0:9 * cin, :].astype(jnp.bfloat16)
            acc = jnp.dot(w_bf16, patches, preferred_element_type=jnp.float32)
            return acc + bias_col                     # (Cout, P) f32

        # ---- initial conv + folded BN + ReLU (no FiLM) ----------------------
        xpad_ref[0:cin0p, pad_l:pad_l + P] = x_ref[0]
        h = jnp.maximum(conv3x3(cin0p, w0_ref[...], b0_ref[...]), 0.0)

        # ---- FiLM conditional blocks ----------------------------------------
        for k in range(num_blocks):
            xpad_ref[0:hidden, pad_l:pad_l + P] = h
            z = jnp.maximum(conv3x3(hidden, wb_ref[k], bb_ref[k]), 0.0)
            h = gam_ref[k, 0] * z + bet_ref[k, 0]     # per-channel FiLM

        # ---- 1x1 output conv (fused; h already resident in VMEM) ------------
        o_ref[0] = (jnp.dot(wo_ref[...], h.astype(jnp.bfloat16),
                            preferred_element_type=jnp.float32) + bo_ref[...])

    return kernel


# ----------------------------------------------------------------------------
# Parameter construction (torch-layout, deterministic) and kernel packing
# ----------------------------------------------------------------------------
def init_params(key, collab_bev_channels, granularity_coeff_dim,
                semantic_coeff_dim, bandwidth_vector_dim,
                output_granularity_channels=3, hidden_channels=64,
                num_blocks=2):
    cond_dim = granularity_coeff_dim + semantic_coeff_dim + bandwidth_vector_dim
    cin0 = collab_bev_channels + 1
    keys = jax.random.split(key, 4 * num_blocks + 4)
    kit = iter(keys)

    def bn_init(c):
        # nn.BatchNorm2d fresh running stats, evaluated in inference mode.
        return {"gamma": jnp.ones((c,), jnp.float32),
                "beta": jnp.zeros((c,), jnp.float32),
                "mean": jnp.zeros((c,), jnp.float32),
                "var": jnp.ones((c,), jnp.float32)}

    def conv_w(k, cout, cin, ksz):
        return 0.05 * jax.random.normal(k, (cout, cin, ksz, ksz), jnp.float32)

    params = {
        "hidden": hidden_channels,
        "bn_eps": 1e-5,
        "init": {"w": conv_w(next(kit), hidden_channels, cin0, 3),
                 "b": 0.02 * jax.random.normal(next(kit), (hidden_channels,),
                                               jnp.float32),
                 "bn": bn_init(hidden_channels)},
        "blocks": [],
        "out": {"w": conv_w(next(kit), output_granularity_channels,
                            hidden_channels, 1),
                "b": 0.02 * jax.random.normal(
                    next(kit), (output_granularity_channels,), jnp.float32)},
    }
    for _ in range(num_blocks):
        params["blocks"].append({
            "w": conv_w(next(kit), hidden_channels, hidden_channels, 3),
            "b": 0.02 * jax.random.normal(next(kit), (hidden_channels,),
                                          jnp.float32),
            "bn": bn_init(hidden_channels),
            "film_w": 0.1 * jax.random.normal(
                next(kit), (2 * hidden_channels, cond_dim), jnp.float32),
            "film_b": 0.01 * jax.random.normal(
                next(kit), (2 * hidden_channels,), jnp.float32),
        })
    return params


def _prepare_kernel_params(params, cin0p):
    """Fold BN into conv weights/bias and pack to the kernel layouts (bf16)."""
    eps = params["bn_eps"]
    C = params["hidden"]

    def fold(w, b, bn, cin_pad):
        # BN(Wx + b) = (W*s) x + (b*s + t),  s = gamma/sqrt(var+eps),
        #                                    t = beta - mean*s
        s = bn["gamma"] * jax.lax.rsqrt(bn["var"] + eps)
        t = bn["beta"] - bn["mean"] * s
        w_f = w * s[:, None, None, None]
        b_f = b * s + t
        cout, cin = w_f.shape[0], w_f.shape[1]
        if cin_pad > cin:
            w_f = jnp.pad(w_f, ((0, 0), (0, cin_pad - cin), (0, 0), (0, 0)))
        # (Cout, Cin, ky, kx) -> (Cout, ky, kx, Cin) -> (Cout, 9*Cin);
        # K order (tap-major, channel-minor) matches the im2col assembly.
        wk = jnp.transpose(w_f, (0, 2, 3, 1)).reshape(cout, 9 * cin_pad)
        return wk.astype(jnp.bfloat16), b_f.reshape(cout, 1).astype(jnp.float32)

    w0, b0 = fold(params["init"]["w"], params["init"]["b"],
                  params["init"]["bn"], cin0p)
    wbs, bbs = [], []
    for blk in params["blocks"]:
        wk, bk = fold(blk["w"], blk["b"], blk["bn"], C)
        wbs.append(wk)
        bbs.append(bk)
    kout = params["out"]["w"].shape[0]
    return {
        "w0": w0, "b0": b0,
        "wb": jnp.stack(wbs, axis=0), "bb": jnp.stack(bbs, axis=0),
        "wo": params["out"]["w"].reshape(kout, C).astype(jnp.bfloat16),
        "bo": params["out"]["b"].reshape(kout, 1).astype(jnp.float32),
    }


# ----------------------------------------------------------------------------
# Forward pass
# ----------------------------------------------------------------------------
def utility_network_forward(params, collab_fused_bev, spatial_coefficient,
                            granularity_coefficient, semantic_coefficient,
                            bandwidth_vector):
    """Maps are NCHW, vectors (B, D).  Returns (B, H, W, out_channels),
    matching torch's final permute(0, 2, 3, 1)."""
    C = params["hidden"]
    num_blocks = len(params["blocks"])
    kout = params["out"]["w"].shape[0]

    x_nchw = jnp.concatenate([collab_fused_bev, spatial_coefficient], axis=1)
    B, cin0, H, W = x_nchw.shape
    P = H * W
    cin0p = _round_up(cin0, 8)               # sublane-aligned input channels
    cmax = max(cin0p, C)
    pad_l = _round_up(W + 1, 128)            # lane-aligned interior offset
    row_w = pad_l + P + pad_l

    # Channel-major flat-pixel layout (free reshape from NCHW), zero-padded
    # channels.
    x = x_nchw.reshape(B, cin0, P).astype(jnp.float32)
    x = jnp.pad(x, ((0, 0), (0, cin0p - cin0), (0, 0)))

    # BN folding / weight packing (constant-folded under jit).
    kp = _prepare_kernel_params(params, cin0p)

    # FiLM projections: tiny (B, cond)@(cond, 2C) matmuls in plain JAX.
    cond = jnp.concatenate([granularity_coefficient, semantic_coefficient,
                            bandwidth_vector], axis=1).astype(jnp.float32)
    gammas, betas = [], []
    for blk in params["blocks"]:
        gb = cond @ blk["film_w"].T + blk["film_b"][None, :]
        gammas.append(gb[:, :C])
        betas.append(gb[:, C:])
    gam = jnp.stack(gammas, axis=0)[..., None]   # (NB, B, C, 1)
    bet = jnp.stack(betas, axis=0)[..., None]    # (NB, B, C, 1)

    kernel = _make_fused_kernel(num_blocks=num_blocks, hidden=C, cin0p=cin0p,
                                width=W, pixels=P, pad_l=pad_l)

    out = pl.pallas_call(
        kernel,
        out_shape=jax.ShapeDtypeStruct((B, kout, P), jnp.float32),
        grid_spec=pltpu.PrefetchScalarGridSpec(
            num_scalar_prefetch=0,
            grid=(B,),
            in_specs=[
                pl.BlockSpec((1, cin0p, P), lambda b: (b, 0, 0)),          # x
                pl.BlockSpec((C, 9 * cin0p), lambda b: (0, 0)),            # w0
                pl.BlockSpec((C, 1), lambda b: (0, 0)),                    # b0
                pl.BlockSpec((num_blocks, C, 9 * C), lambda b: (0, 0, 0)),  # wb
                pl.BlockSpec((num_blocks, C, 1), lambda b: (0, 0, 0)),      # bb
                pl.BlockSpec((num_blocks, 1, C, 1), lambda b: (0, b, 0, 0)),  # gamma
                pl.BlockSpec((num_blocks, 1, C, 1), lambda b: (0, b, 0, 0)),  # beta
                pl.BlockSpec((kout, C), lambda b: (0, 0)),                 # wo
                pl.BlockSpec((kout, 1), lambda b: (0, 0)),                 # bo
            ],
            out_specs=pl.BlockSpec((1, kout, P), lambda b: (b, 0, 0)),
            scratch_shapes=[
                pltpu.VMEM((cmax, row_w), jnp.float32),      # padded act rows
                pltpu.VMEM((9 * cmax, P), jnp.float32),      # im2col patches
            ],
        ),
        compiler_params=pltpu.CompilerParams(
            dimension_semantics=("parallel",)),
    )(x, kp["w0"], kp["b0"], kp["wb"], kp["bb"], gam, bet, kp["wo"], kp["bo"])

    # (B, kout, H*W) -> (B, H, W, kout)  (== torch's permute(0, 2, 3, 1))
    return jnp.transpose(out.reshape(B, kout, H, W), (0, 2, 3, 1))


# ----------------------------------------------------------------------------
# Pure-JAX (XLA conv) reference for correctness checking
# ----------------------------------------------------------------------------
def _reference_forward(params, bev, spat, gran, sem, bw):
    eps = params["bn_eps"]
    C = params["hidden"]

    def conv_bn_relu(x, w, b, bn):
        y = jax.lax.conv_general_dilated(
            x, w, window_strides=(1, 1), padding=((1, 1), (1, 1)),
            dimension_numbers=("NCHW", "OIHW", "NCHW"))
        y = y + b[None, :, None, None]
        s = bn["gamma"] / jnp.sqrt(bn["var"] + eps)
        t = bn["beta"] - bn["mean"] * s
        y = y * s[None, :, None, None] + t[None, :, None, None]
        return jnp.maximum(y, 0.0)

    x = jnp.concatenate([bev, spat], axis=1).astype(jnp.float32)
    x = conv_bn_relu(x, params["init"]["w"], params["init"]["b"],
                     params["init"]["bn"])
    cond = jnp.concatenate([gran, sem, bw], axis=1).astype(jnp.float32)
    for blk in params["blocks"]:
        y = conv_bn_relu(x, blk["w"], blk["b"], blk["bn"])
        gb = cond @ blk["film_w"].T + blk["film_b"][None, :]
        x = gb[:, :C, None, None] * y + gb[:, C:, None, None]
    y = jax.lax.conv_general_dilated(
        x, params["out"]["w"], window_strides=(1, 1), padding=((0, 0), (0, 0)),
        dimension_numbers=("NCHW", "OIHW", "NCHW"))
    y = y + params["out"]["b"][None, :, None, None]
    return jnp.transpose(y, (0, 2, 3, 1))


# ----------------------------------------------------------------------------
if __name__ == "__main__":
    key = jax.random.PRNGKey(0)
    k_in, k_par = jax.random.split(key)

    # Small shapes consistent with the module.
    B, C_BEV, H, W = 2, 4, 16, 16
    GRAN_DIM, SEM_DIM, BW_DIM = 3, 3, 2
    HIDDEN, OUT_GRAN, NUM_BLOCKS = 32, 3, 2

    ks = jax.random.split(k_in, 5)
    collab_fused_bev = jax.random.normal(ks[0], (B, C_BEV, H, W), jnp.float32)
    spatial_coefficient = jax.random.uniform(ks[1], (B, 1, H, W), jnp.float32)
    granularity_coefficient = jax.random.normal(ks[2], (B, GRAN_DIM), jnp.float32)
    semantic_coefficient = jax.random.normal(ks[3], (B, SEM_DIM), jnp.float32)
    bandwidth_vector = jax.random.uniform(ks[4], (B, BW_DIM), jnp.float32)

    params = init_params(k_par, C_BEV, GRAN_DIM, SEM_DIM, BW_DIM,
                         output_granularity_channels=OUT_GRAN,
                         hidden_channels=HIDDEN, num_blocks=NUM_BLOCKS)

    fwd = jax.jit(functools.partial(utility_network_forward, params))
    out = jax.block_until_ready(
        fwd(collab_fused_bev, spatial_coefficient, granularity_coefficient,
            semantic_coefficient, bandwidth_vector))
    assert out.shape == (B, H, W, OUT_GRAN), out.shape

    ref = _reference_forward(params, collab_fused_bev, spatial_coefficient,
                             granularity_coefficient, semantic_coefficient,
                             bandwidth_vector)
    max_err = float(jnp.max(jnp.abs(out - ref)))
    # bf16 MXU inputs with f32 accumulation: observed error is ~1e-4 at these
    # magnitudes; 1e-2 gives comfortable headroom.
    assert max_err < 1e-2, max_err

    print("KERNEL_OK")
</pallas_src>

<mosaic_0001>
module attributes {stable_mosaic.version = 11 : i64} {
  func.func @kernel(%arg0: i32, %arg1: memref<1x8x256xf32, #tpu.memory_space<vmem>>, %arg2: memref<32x72xbf16, #tpu.memory_space<vmem>>, %arg3: memref<32x1xf32, #tpu.memory_space<vmem>>, %arg4: memref<2x32x288xbf16, #tpu.memory_space<vmem>>, %arg5: memref<2x32x1xf32, #tpu.memory_space<vmem>>, %arg6: memref<2x1x32x1xf32, #tpu.memory_space<vmem>>, %arg7: memref<2x1x32x1xf32, #tpu.memory_space<vmem>>, %arg8: memref<3x32xbf16, #tpu.memory_space<vmem>>, %arg9: memref<3x1xf32, #tpu.memory_space<vmem>>, %arg10: memref<1x3x256xf32, #tpu.memory_space<vmem>>, %arg11: memref<32x512xf32, #tpu.memory_space<vmem>>, %arg12: memref<288x256xf32, #tpu.memory_space<vmem>>) attributes {dimension_semantics = [#tpu.dimension_semantics<parallel>], iteration_bounds = array<i64: 2>, scalar_prefetch = 0 : i64, scratch_operands = 2 : i64, tpu.core_type = #tpu.core_type<tc>, window_params = [{transform_indices = @transform_0, window_bounds = array<i64: 1, 8, 256>}, {pipeline_mode = #tpu.pipeline_mode<synchronous>, transform_indices = @transform_1, window_bounds = array<i64: 32, 72>}, {pipeline_mode = #tpu.pipeline_mode<synchronous>, transform_indices = @transform_2, window_bounds = array<i64: 32, 1>}, {pipeline_mode = #tpu.pipeline_mode<synchronous>, transform_indices = @transform_3, window_bounds = array<i64: 2, 32, 288>}, {pipeline_mode = #tpu.pipeline_mode<synchronous>, transform_indices = @transform_4, window_bounds = array<i64: 2, 32, 1>}, {transform_indices = @transform_5, window_bounds = array<i64: 2, 1, 32, 1>}, {transform_indices = @transform_6, window_bounds = array<i64: 2, 1, 32, 1>}, {pipeline_mode = #tpu.pipeline_mode<synchronous>, transform_indices = @transform_7, window_bounds = array<i64: 3, 32>}, {pipeline_mode = #tpu.pipeline_mode<synchronous>, transform_indices = @transform_8, window_bounds = array<i64: 3, 1>}, {transform_indices = @transform_9, window_bounds = array<i64: 1, 3, 256>}]} {
    %cst = arith.constant 0.000000e+00 : f32
    %0 = vector.broadcast %cst : f32 to vector<32x512xf32>
    %c0 = arith.constant 0 : index
    %c0_0 = arith.constant 0 : index
    %1 = vector.load %arg11[%c0, %c0_0] : memref<32x512xf32, #tpu.memory_space<vmem>>, vector<32x512xf32>
    tpu.vector_store %arg11[%c0, %c0_0], %0 {strides = array<i32>} : memref<32x512xf32, #tpu.memory_space<vmem>>, vector<32x512xf32>,
    %2 = tpu.iota {dimensions = array<i32: 1>} : vector<1x256xi32>
    %c16_i32 = arith.constant 16 : i32
    %c0_i32 = arith.constant 0 : i32
    %3 = arith.cmpi eq, %c16_i32, %c0_i32 : i32
    %c1_i32 = arith.constant 1 : i32
    %4 = arith.select %3, %c1_i32, %c16_i32 : i32
    %5 = vector.broadcast %4 : i32 to vector<1x256xi32>
    %6 = arith.remsi %2, %5 : vector<1x256xi32>
    %c0_i32_1 = arith.constant 0 : i32
    %7 = vector.broadcast %c0_i32_1 : i32 to vector<1x256xi32>
    %8 = arith.cmpi ne, %6, %7 : vector<1x256xi32>
    %c0_i32_2 = arith.constant 0 : i32
    %9 = vector.broadcast %c0_i32_2 : i32 to vector<1x256xi32>
    %10 = arith.cmpi slt, %6, %9 : vector<1x256xi32>
    %c0_i32_3 = arith.constant 0 : i32
    %11 = arith.cmpi slt, %4, %c0_i32_3 : i32
    %12 = vector.broadcast %11 : i1 to vector<1x256xi1>
    %13 = vector.broadcast %12 : vector<1x256xi1> to vector<1x256xi1>
    %14 = arith.xori %10, %13 : vector<1x256xi1>
    %15 = arith.andi %14, %8 : vector<1x256xi1>
    %16 = vector.broadcast %4 : i32 to vector<1x256xi32>
    %17 = arith.addi %6, %16 : vector<1x256xi32>
    %18 = arith.select %15, %17, %6 : vector<1x256xi1>, vector<1x256xi32>
    %c0_i32_4 = arith.constant 0 : i32
    %19 = vector.broadcast %c0_i32_4 : i32 to vector<1x256xi32>
    %20 = arith.cmpi ne, %18, %19 : vector<1x256xi32>
    %c15_i32 = arith.constant 15 : i32
    %21 = vector.broadcast %c15_i32 : i32 to vector<1x256xi32>
    %22 = arith.cmpi ne, %18, %21 : vector<1x256xi32>
    %c0_5 = arith.constant 0 : index
    %c0_6 = arith.constant 0 : index
    %c0_7 = arith.constant 0 : index
    %23 = vector.load %arg1[%c0_5, %c0_6, %c0_7] : memref<1x8x256xf32, #tpu.memory_space<vmem>>, vector<1x8x256xf32>
    %24 = vector.shape_cast %23 : vector<1x8x256xf32> to vector<8x256xf32>
    %c0_8 = arith.constant 0 : index
    %c128 = arith.constant 128 : index
    %25 = vector.load %arg11[%c0_8, %c128] : memref<32x512xf32, #tpu.memory_space<vmem>>, vector<8x256xf32>
    tpu.vector_store %arg11[%c0_8, %c128], %24 {strides = array<i32>} : memref<32x512xf32, #tpu.memory_space<vmem>>, vector<8x256xf32>,
    %c0_9 = arith.constant 0 : index
    %c0_10 = arith.constant 0 : index
    %26 = vector.load %arg2[%c0_9, %c0_10] : memref<32x72xbf16, #tpu.memory_space<vmem>>, vector<32x72xbf16>
    %c0_11 = arith.constant 0 : index
    %c0_12 = arith.constant 0 : index
    %27 = vector.load %arg3[%c0_11, %c0_12] : memref<32x1xf32, #tpu.memory_space<vmem>>, vector<32x1xf32>
    %c0_13 = arith.constant 0 : index
    %c111 = arith.constant 111 : index
    %28 = vector.load %arg11[%c0_13, %c111] : memref<32x512xf32, #tpu.memory_space<vmem>>, vector<8x256xf32>
    %cst_14 = arith.constant 0.000000e+00 : f32
    %29 = vector.shape_cast %20 : vector<1x256xi1> to vector<1x256xi1>
    %30 = vector.broadcast %29 : vector<1x256xi1> to vector<8x256xi1>
    %31 = vector.broadcast %cst_14 : f32 to vector<8x256xf32>
    %32 = arith.select %30, %28, %31 : vector<8x256xi1>, vector<8x256xf32>
    %c0_15 = arith.constant 0 : index
    %c0_16 = arith.constant 0 : index
    %33 = vector.load %arg12[%c0_15, %c0_16] : memref<288x256xf32, #tpu.memory_space<vmem>>, vector<8x256xf32>
    tpu.vector_store %arg12[%c0_15, %c0_16], %32 {strides = array<i32>} : memref<288x256xf32, #tpu.memory_space<vmem>>, vector<8x256xf32>,
    %c0_17 = arith.constant 0 : index
    %c112 = arith.constant 112 : index
    %34 = vector.load %arg11[%c0_17, %c112] : memref<32x512xf32, #tpu.memory_space<vmem>>, vector<8x256xf32>
    %c8 = arith.constant 8 : index
    %c0_18 = arith.constant 0 : index
    %35 = vector.load %arg12[%c8, %c0_18] : memref<288x256xf32, #tpu.memory_space<vmem>>, vector<8x256xf32>
    tpu.vector_store %arg12[%c8, %c0_18], %34 {strides = array<i32>} : memref<288x256xf32, #tpu.memory_space<vmem>>, vector<8x256xf32>,
    %c0_19 = arith.constant 0 : index
    %c113 = arith.constant 113 : index
    %36 = vector.load %arg11[%c0_19, %c113] : memref<32x512xf32, #tpu.memory_space<vmem>>, vector<8x256xf32>
    %cst_20 = arith.constant 0.000000e+00 : f32
    %37 = vector.shape_cast %22 : vector<1x256xi1> to vector<1x256xi1>
    %38 = vector.broadcast %37 : vector<1x256xi1> to vector<8x256xi1>
    %39 = vector.broadcast %cst_20 : f32 to vector<8x256xf32>
    %40 = arith.select %38, %36, %39 : vector<8x256xi1>, vector<8x256xf32>
    %c16 = arith.constant 16 : index
    %c0_21 = arith.constant 0 : index
    %41 = vector.load %arg12[%c16, %c0_21] : memref<288x256xf32, #tpu.memory_space<vmem>>, vector<8x256xf32>
    tpu.vector_store %arg12[%c16, %c0_21], %40 {strides = array<i32>} : memref<288x256xf32, #tpu.memory_space<vmem>>, vector<8x256xf32>,
    %c0_22 = arith.constant 0 : index
    %c127 = arith.constant 127 : index
    %42 = vector.load %arg11[%c0_22, %c127] : memref<32x512xf32, #tpu.memory_space<vmem>>, vector<8x256xf32>
    %cst_23 = arith.constant 0.000000e+00 : f32
    %43 = vector.shape_cast %20 : vector<1x256xi1> to vector<1x256xi1>
    %44 = vector.broadcast %43 : vector<1x256xi1> to vector<8x256xi1>
    %45 = vector.broadcast %cst_23 : f32 to vector<8x256xf32>
    %46 = arith.select %44, %42, %45 : vector<8x256xi1>, vector<8x256xf32>
    %c24 = arith.constant 24 : index
    %c0_24 = arith.constant 0 : index
    %47 = vector.load %arg12[%c24, %c0_24] : memref<288x256xf32, #tpu.memory_space<vmem>>, vector<8x256xf32>
    tpu.vector_store %arg12[%c24, %c0_24], %46 {strides = array<i32>} : memref<288x256xf32, #tpu.memory_space<vmem>>, vector<8x256xf32>,
    %c0_25 = arith.constant 0 : index
    %c128_26 = arith.constant 128 : index
    %48 = vector.load %arg11[%c0_25, %c128_26] : memref<32x512xf32, #tpu.memory_space<vmem>>, vector<8x256xf32>
    %c32 = arith.constant 32 : index
    %c0_27 = arith.constant 0 : index
    %49 = vector.load %arg12[%c32, %c0_27] : memref<288x256xf32, #tpu.memory_space<vmem>>, vector<8x256xf32>
    tpu.vector_store %arg12[%c32, %c0_27], %48 {strides = array<i32>} : memref<288x256xf32, #tpu.memory_space<vmem>>, vector<8x256xf32>,
    %c0_28 = arith.constant 0 : index
    %c129 = arith.constant 129 : index
    %50 = vector.load %arg11[%c0_28, %c129] : memref<32x512xf32, #tpu.memory_space<vmem>>, vector<8x256xf32>
    %cst_29 = arith.constant 0.000000e+00 : f32
    %51 = vector.shape_cast %22 : vector<1x256xi1> to vector<1x256xi1>
    %52 = vector.broadcast %51 : vector<1x256xi1> to vector<8x256xi1>
    %53 = vector.broadcast %cst_29 : f32 to vector<8x256xf32>
    %54 = arith.select %52, %50, %53 : vector<8x256xi1>, vector<8x256xf32>
    %c40 = arith.constant 40 : index
    %c0_30 = arith.constant 0 : index
    %55 = vector.load %arg12[%c40, %c0_30] : memref<288x256xf32, #tpu.memory_space<vmem>>, vector<8x256xf32>
    tpu.vector_store %arg12[%c40, %c0_30], %54 {strides = array<i32>} : memref<288x256xf32, #tpu.memory_space<vmem>>, vector<8x256xf32>,
    %c0_31 = arith.constant 0 : index
    %c143 = arith.constant 143 : index
    %56 = vector.load %arg11[%c0_31, %c143] : memref<32x512xf32, #tpu.memory_space<vmem>>, vector<8x256xf32>
    %cst_32 = arith.constant 0.000000e+00 : f32
    %57 = vector.shape_cast %20 : vector<1x256xi1> to vector<1x256xi1>
    %58 = vector.broadcast %57 : vector<1x256xi1> to vector<8x256xi1>
    %59 = vector.broadcast %cst_32 : f32 to vector<8x256xf32>
    %60 = arith.select %58, %56, %59 : vector<8x256xi1>, vector<8x256xf32>
    %c48 = arith.constant 48 : index
    %c0_33 = arith.constant 0 : index
    %61 = vector.load %arg12[%c48, %c0_33] : memref<288x256xf32, #tpu.memory_space<vmem>>, vector<8x256xf32>
    tpu.vector_store %arg12[%c48, %c0_33], %60 {strides = array<i32>} : memref<288x256xf32, #tpu.memory_space<vmem>>, vector<8x256xf32>,
    %c0_34 = arith.constant 0 : index
    %c144 = arith.constant 144 : index
    %62 = vector.load %arg11[%c0_34, %c144] : memref<32x512xf32, #tpu.memory_space<vmem>>, vector<8x256xf32>
    %c56 = arith.constant 56 : index
    %c0_35 = arith.constant 0 : index
    %63 = vector.load %arg12[%c56, %c0_35] : memref<288x256xf32, #tpu.memory_space<vmem>>, vector<8x256xf32>
    tpu.vector_store %arg12[%c56, %c0_35], %62 {strides = array<i32>} : memref<288x256xf32, #tpu.memory_space<vmem>>, vector<8x256xf32>,
    %c0_36 = arith.constant 0 : index
    %c145 = arith.constant 145 : index
    %64 = vector.load %arg11[%c0_36, %c145] : memref<32x512xf32, #tpu.memory_space<vmem>>, vector<8x256xf32>
    %cst_37 = arith.constant 0.000000e+00 : f32
    %65 = vector.shape_cast %22 : vector<1x256xi1> to vector<1x256xi1>
    %66 = vector.broadcast %65 : vector<1x256xi1> to vector<8x256xi1>
    %67 = vector.broadcast %cst_37 : f32 to vector<8x256xf32>
    %68 = arith.select %66, %64, %67 : vector<8x256xi1>, vector<8x256xf32>
    %c64 = arith.constant 64 : index
    %c0_38 = arith.constant 0 : index
    %69 = vector.load %arg12[%c64, %c0_38] : memref<288x256xf32, #tpu.memory_space<vmem>>, vector<8x256xf32>
    tpu.vector_store %arg12[%c64, %c0_38], %68 {strides = array<i32>} : memref<288x256xf32, #tpu.memory_space<vmem>>, vector<8x256xf32>,
    %c0_39 = arith.constant 0 : index
    %c0_40 = arith.constant 0 : index
    %70 = vector.load %arg12[%c0_39, %c0_40] : memref<288x256xf32, #tpu.memory_space<vmem>>, vector<72x256xf32>
    %71 = arith.truncf %70 : vector<72x256xf32> to vector<72x256xbf16>
    %cst_41 = arith.constant dense<0.000000e+00> : vector<32x256xf32>
    %72 = tpu.matmul %26, %71, %cst_41 {dimension_numbers = #tpu.dot_dimension_numbers<[1], [0], [0], [1], [0, 0, 1, 1], [], []>} : vector<32x72xbf16>, vector<72x256xbf16>, vector<32x256xf32> -> vector<32x256xf32>
    %73 = vector.broadcast %27 : vector<32x1xf32> to vector<32x256xf32>
    %74 = arith.addf %72, %73 : vector<32x256xf32>
    %cst_42 = arith.constant 0.000000e+00 : f32
    %75 = vector.broadcast %cst_42 : f32 to vector<32x256xf32>
    %76 = arith.maximumf %74, %75 : vector<32x256xf32>
    %c0_43 = arith.constant 0 : index
    %c128_44 = arith.constant 128 : index
    %77 = vector.load %arg11[%c0_43, %c128_44] : memref<32x512xf32, #tpu.memory_space<vmem>>, vector<32x256xf32>
    tpu.vector_store %arg11[%c0_43, %c128_44], %76 {strides = array<i32>} : memref<32x512xf32, #tpu.memory_space<vmem>>, vector<32x256xf32>,
    %c0_45 = arith.constant 0 : index
    %c0_46 = arith.constant 0 : index
    %c0_47 = arith.constant 0 : index
    %78 = vector.load %arg4[%c0_45, %c0_46, %c0_47] : memref<2x32x288xbf16, #tpu.memory_space<vmem>>, vector<1x32x288xbf16>
    %79 = vector.shape_cast %78 : vector<1x32x288xbf16> to vector<32x288xbf16>
    %c0_48 = arith.constant 0 : index
    %c0_49 = arith.constant 0 : index
    %c0_50 = arith.constant 0 : index
    %80 = vector.load %arg5[%c0_48, %c0_49, %c0_50] : memref<2x32x1xf32, #tpu.memory_space<vmem>>, vector<1x32x1xf32>
    %81 = vector.shape_cast %80 : vector<1x32x1xf32> to vector<32x1xf32>
    %c0_51 = arith.constant 0 : index
    %c111_52 = arith.constant 111 : index
    %82 = vector.load %arg11[%c0_51, %c111_52] : memref<32x512xf32, #tpu.memory_space<vmem>>, vector<32x256xf32>
    %cst_53 = arith.constant 0.000000e+00 : f32
    %83 = vector.shape_cast %20 : vector<1x256xi1> to vector<1x256xi1>
    %84 = vector.broadcast %83 : vector<1x256xi1> to vector<32x256xi1>
    %85 = vector.broadcast %cst_53 : f32 to vector<32x256xf32>
    %86 = arith.select %84, %82, %85 : vector<32x256xi1>, vector<32x256xf32>
    %c0_54 = arith.constant 0 : index
    %c0_55 = arith.constant 0 : index
    %87 = vector.load %arg12[%c0_54, %c0_55] : memref<288x256xf32, #tpu.memory_space<vmem>>, vector<32x256xf32>
    tpu.vector_store %arg12[%c0_54, %c0_55], %86 {strides = array<i32>} : memref<288x256xf32, #tpu.memory_space<vmem>>, vector<32x256xf32>,
    %c0_56 = arith.constant 0 : index
    %c112_57 = arith.constant 112 : index
    %88 = vector.load %arg11[%c0_56, %c112_57] : memref<32x512xf32, #tpu.memory_space<vmem>>, vector<32x256xf32>
    %c32_58 = arith.constant 32 : index
    %c0_59 = arith.constant 0 : index
    %89 = vector.load %arg12[%c32_58, %c0_59] : memref<288x256xf32, #tpu.memory_space<vmem>>, vector<32x256xf32>
    tpu.vector_store %arg12[%c32_58, %c0_59], %88 {strides = array<i32>} : memref<288x256xf32, #tpu.memory_space<vmem>>, vector<32x256xf32>,
    %c0_60 = arith.constant 0 : index
    %c113_61 = arith.constant 113 : index
    %90 = vector.load %arg11[%c0_60, %c113_61] : memref<32x512xf32, #tpu.memory_space<vmem>>, vector<32x256xf32>
    %cst_62 = arith.constant 0.000000e+00 : f32
    %91 = vector.shape_cast %22 : vector<1x256xi1> to vector<1x256xi1>
    %92 = vector.broadcast %91 : vector<1x256xi1> to vector<32x256xi1>
    %93 = vector.broadcast %cst_62 : f32 to vector<32x256xf32>
    %94 = arith.select %92, %90, %93 : vector<32x256xi1>, vector<32x256xf32>
    %c64_63 = arith.constant 64 : index
    %c0_64 = arith.constant 0 : index
    %95 = vector.load %arg12[%c64_63, %c0_64] : memref<288x256xf32, #tpu.memory_space<vmem>>, vector<32x256xf32>
    tpu.vector_store %arg12[%c64_63, %c0_64], %94 {strides = array<i32>} : memref<288x256xf32, #tpu.memory_space<vmem>>, vector<32x256xf32>,
    %c0_65 = arith.constant 0 : index
    %c127_66 = arith.constant 127 : index
    %96 = vector.load %arg11[%c0_65, %c127_66] : memref<32x512xf32, #tpu.memory_space<vmem>>, vector<32x256xf32>
    %cst_67 = arith.constant 0.000000e+00 : f32
    %97 = vector.shape_cast %20 : vector<1x256xi1> to vector<1x256xi1>
    %98 = vector.broadcast %97 : vector<1x256xi1> to vector<32x256xi1>
    %99 = vector.broadcast %cst_67 : f32 to vector<32x256xf32>
    %100 = arith.select %98, %96, %99 : vector<32x256xi1>, vector<32x256xf32>
    %c96 = arith.constant 96 : index
    %c0_68 = arith.constant 0 : index
    %101 = vector.load %arg12[%c96, %c0_68] : memref<288x256xf32, #tpu.memory_space<vmem>>, vector<32x256xf32>
    tpu.vector_store %arg12[%c96, %c0_68], %100 {strides = array<i32>} : memref<288x256xf32, #tpu.memory_space<vmem>>, vector<32x256xf32>,
    %c0_69 = arith.constant 0 : index
    %c128_70 = arith.constant 128 : index
    %102 = vector.load %arg11[%c0_69, %c128_70] : memref<32x512xf32, #tpu.memory_space<vmem>>, vector<32x256xf32>
    %c128_71 = arith.constant 128 : index
    %c0_72 = arith.constant 0 : index
    %103 = vector.load %arg12[%c128_71, %c0_72] : memref<288x256xf32, #tpu.memory_space<vmem>>, vector<32x256xf32>
    tpu.vector_store %arg12[%c128_71, %c0_72], %102 {strides = array<i32>} : memref<288x256xf32, #tpu.memory_space<vmem>>, vector<32x256xf32>,
    %c0_73 = arith.constant 0 : index
    %c129_74 = arith.constant 129 : index
    %104 = vector.load %arg11[%c0_73, %c129_74] : memref<32x512xf32, #tpu.memory_space<vmem>>, vector<32x256xf32>
    %cst_75 = arith.constant 0.000000e+00 : f32
    %105 = vector.shape_cast %22 : vector<1x256xi1> to vector<1x256xi1>
    %106 = vector.broadcast %105 : vector<1x256xi1> to vector<32x256xi1>
    %107 = vector.broadcast %cst_75 : f32 to vector<32x256xf32>
    %108 = arith.select %106, %104, %107 : vector<32x256xi1>, vector<32x256xf32>
    %c160 = arith.constant 160 : index
    %c0_76 = arith.constant 0 : index
    %109 = vector.load %arg12[%c160, %c0_76] : memref<288x256xf32, #tpu.memory_space<vmem>>, vector<32x256xf32>
    tpu.vector_store %arg12[%c160, %c0_76], %108 {strides = array<i32>} : memref<288x256xf32, #tpu.memory_space<vmem>>, vector<32x256xf32>,
    %c0_77 = arith.constant 0 : index
    %c143_78 = arith.constant 143 : index
    %110 = vector.load %arg11[%c0_77, %c143_78] : memref<32x512xf32, #tpu.memory_space<vmem>>, vector<32x256xf32>
    %cst_79 = arith.constant 0.000000e+00 : f32
    %111 = vector.shape_cast %20 : vector<1x256xi1> to vector<1x256xi1>
    %112 = vector.broadcast %111 : vector<1x256xi1> to vector<32x256xi1>
    %113 = vector.broadcast %cst_79 : f32 to vector<32x256xf32>
    %114 = arith.select %112, %110, %113 : vector<32x256xi1>, vector<32x256xf32>
    %c192 = arith.constant 192 : index
    %c0_80 = arith.constant 0 : index
    %115 = vector.load %arg12[%c192, %c0_80] : memref<288x256xf32, #tpu.memory_space<vmem>>, vector<32x256xf32>
    tpu.vector_store %arg12[%c192, %c0_80], %114 {strides = array<i32>} : memref<288x256xf32, #tpu.memory_space<vmem>>, vector<32x256xf32>,
    %c0_81 = arith.constant 0 : index
    %c144_82 = arith.constant 144 : index
    %116 = vector.load %arg11[%c0_81, %c144_82] : memref<32x512xf32, #tpu.memory_space<vmem>>, vector<32x256xf32>
    %c224 = arith.constant 224 : index
    %c0_83 = arith.constant 0 : index
    %117 = vector.load %arg12[%c224, %c0_83] : memref<288x256xf32, #tpu.memory_space<vmem>>, vector<32x256xf32>
    tpu.vector_store %arg12[%c224, %c0_83], %116 {strides = array<i32>} : memref<288x256xf32, #tpu.memory_space<vmem>>, vector<32x256xf32>,
    %c0_84 = arith.constant 0 : index
    %c145_85 = arith.constant 145 : index
    %118 = vector.load %arg11[%c0_84, %c145_85] : memref<32x512xf32, #tpu.memory_space<vmem>>, vector<32x256xf32>
    %cst_86 = arith.constant 0.000000e+00 : f32
    %119 = vector.shape_cast %22 : vector<1x256xi1> to vector<1x256xi1>
    %120 = vector.broadcast %119 : vector<1x256xi1> to vector<32x256xi1>
    %121 = vector.broadcast %cst_86 : f32 to vector<32x256xf32>
    %122 = arith.select %120, %118, %121 : vector<32x256xi1>, vector<32x256xf32>
    %c256 = arith.constant 256 : index
    %c0_87 = arith.constant 0 : index
    %123 = vector.load %arg12[%c256, %c0_87] : memref<288x256xf32, #tpu.memory_space<vmem>>, vector<32x256xf32>
    tpu.vector_store %arg12[%c256, %c0_87], %122 {strides = array<i32>} : memref<288x256xf32, #tpu.memory_space<vmem>>, vector<32x256xf32>,
    %c0_88 = arith.constant 0 : index
    %c0_89 = arith.constant 0 : index
    %124 = vector.load %arg12[%c0_88, %c0_89] : memref<288x256xf32, #tpu.memory_space<vmem>>, vector<288x256xf32>
    %125 = arith.truncf %124 : vector<288x256xf32> to vector<288x256xbf16>
    %cst_90 = arith.constant dense<0.000000e+00> : vector<32x256xf32>
    %126 = tpu.matmul %79, %125, %cst_90 {dimension_numbers = #tpu.dot_dimension_numbers<[1], [0], [0], [1], [0, 0, 1, 1], [], []>} : vector<32x288xbf16>, vector<288x256xbf16>, vector<32x256xf32> -> vector<32x256xf32>
    %127 = vector.broadcast %81 : vector<32x1xf32> to vector<32x256xf32>
    %128 = arith.addf %126, %127 : vector<32x256xf32>
    %cst_91 = arith.constant 0.000000e+00 : f32
    %129 = vector.broadcast %cst_91 : f32 to vector<32x256xf32>
    %130 = arith.maximumf %128, %129 : vector<32x256xf32>
    %c0_92 = arith.constant 0 : index
    %c0_93 = arith.constant 0 : index
    %c0_94 = arith.constant 0 : index
    %c0_95 = arith.constant 0 : index
    %131 = vector.load %arg6[%c0_92, %c0_93, %c0_94, %c0_95] : memref<2x1x32x1xf32, #tpu.memory_space<vmem>>, vector<1x1x32x1xf32>
    %132 = vector.shape_cast %131 : vector<1x1x32x1xf32> to vector<32x1xf32>
    %133 = vector.broadcast %132 : vector<32x1xf32> to vector<32x256xf32>
    %134 = arith.mulf %133, %130 : vector<32x256xf32>
    %c0_96 = arith.constant 0 : index
    %c0_97 = arith.constant 0 : index
    %c0_98 = arith.constant 0 : index
    %c0_99 = arith.constant 0 : index
    %135 = vector.load %arg7[%c0_96, %c0_97, %c0_98, %c0_99] : memref<2x1x32x1xf32, #tpu.memory_space<vmem>>, vector<1x1x32x1xf32>
    %136 = vector.shape_cast %135 : vector<1x1x32x1xf32> to vector<32x1xf32>
    %137 = vector.broadcast %136 : vector<32x1xf32> to vector<32x256xf32>
    %138 = arith.addf %134, %137 : vector<32x256xf32>
    %c0_100 = arith.constant 0 : index
    %c128_101 = arith.constant 128 : index
    %139 = vector.load %arg11[%c0_100, %c128_101] : memref<32x512xf32, #tpu.memory_space<vmem>>, vector<32x256xf32>
    tpu.vector_store %arg11[%c0_100, %c128_101], %138 {strides = array<i32>} : memref<32x512xf32, #tpu.memory_space<vmem>>, vector<32x256xf32>,
    %c1 = arith.constant 1 : index
    %c0_102 = arith.constant 0 : index
    %c0_103 = arith.constant 0 : index
    %140 = vector.load %arg4[%c1, %c0_102, %c0_103] : memref<2x32x288xbf16, #tpu.memory_space<vmem>>, vector<1x32x288xbf16>
    %141 = vector.shape_cast %140 : vector<1x32x288xbf16> to vector<32x288xbf16>
    %c1_104 = arith.constant 1 : index
    %c0_105 = arith.constant 0 : index
    %c0_106 = arith.constant 0 : index
    %142 = vector.load %arg5[%c1_104, %c0_105, %c0_106] : memref<2x32x1xf32, #tpu.memory_space<vmem>>, vector<1x32x1xf32>
    %143 = vector.shape_cast %142 : vector<1x32x1xf32> to vector<32x1xf32>
    %c0_107 = arith.constant 0 : index
    %c111_108 = arith.constant 111 : index
    %144 = vector.load %arg11[%c0_107, %c111_108] : memref<32x512xf32, #tpu.memory_space<vmem>>, vector<32x256xf32>
    %cst_109 = arith.constant 0.000000e+00 : f32
    %145 = vector.shape_cast %20 : vector<1x256xi1> to vector<1x256xi1>
    %146 = vector.broadcast %145 : vector<1x256xi1> to vector<32x256xi1>
    %147 = vector.broadcast %cst_109 : f32 to vector<32x256xf32>
    %148 = arith.select %146, %144, %147 : vector<32x256xi1>, vector<32x256xf32>
    %c0_110 = arith.constant 0 : index
    %c0_111 = arith.constant 0 : index
    %149 = vector.load %arg12[%c0_110, %c0_111] : memref<288x256xf32, #tpu.memory_space<vmem>>, vector<32x256xf32>
    tpu.vector_store %arg12[%c0_110, %c0_111], %148 {strides = array<i32>} : memref<288x256xf32, #tpu.memory_space<vmem>>, vector<32x256xf32>,
    %c0_112 = arith.constant 0 : index
    %c112_113 = arith.constant 112 : index
    %150 = vector.load %arg11[%c0_112, %c112_113] : memref<32x512xf32, #tpu.memory_space<vmem>>, vector<32x256xf32>
    %c32_114 = arith.constant 32 : index
    %c0_115 = arith.constant 0 : index
    %151 = vector.load %arg12[%c32_114, %c0_115] : memref<288x256xf32, #tpu.memory_space<vmem>>, vector<32x256xf32>
    tpu.vector_store %arg12[%c32_114, %c0_115], %150 {strides = array<i32>} : memref<288x256xf32, #tpu.memory_space<vmem>>, vector<32x256xf32>,
    %c0_116 = arith.constant 0 : index
    %c113_117 = arith.constant 113 : index
    %152 = vector.load %arg11[%c0_116, %c113_117] : memref<32x512xf32, #tpu.memory_space<vmem>>, vector<32x256xf32>
    %cst_118 = arith.constant 0.000000e+00 : f32
    %153 = vector.shape_cast %22 : vector<1x256xi1> to vector<1x256xi1>
    %154 = vector.broadcast %153 : vector<1x256xi1> to vector<32x256xi1>
    %155 = vector.broadcast %cst_118 : f32 to vector<32x256xf32>
    %156 = arith.select %154, %152, %155 : vector<32x256xi1>, vector<32x256xf32>
    %c64_119 = arith.constant 64 : index
    %c0_120 = arith.constant 0 : index
    %157 = vector.load %arg12[%c64_119, %c0_120] : memref<288x256xf32, #tpu.memory_space<vmem>>, vector<32x256xf32>
    tpu.vector_store %arg12[%c64_119, %c0_120], %156 {strides = array<i32>} : memref<288x256xf32, #tpu.memory_space<vmem>>, vector<32x256xf32>,
    %c0_121 = arith.constant 0 : index
    %c127_122 = arith.constant 127 : index
    %158 = vector.load %arg11[%c0_121, %c127_122] : memref<32x512xf32, #tpu.memory_space<vmem>>, vector<32x256xf32>
    %cst_123 = arith.constant 0.000000e+00 : f32
    %159 = vector.shape_cast %20 : vector<1x256xi1> to vector<1x256xi1>
    %160 = vector.broadcast %159 : vector<1x256xi1> to vector<32x256xi1>
    %161 = vector.broadcast %cst_123 : f32 to vector<32x256xf32>
    %162 = arith.select %160, %158, %161 : vector<32x256xi1>, vector<32x256xf32>
    %c96_124 = arith.constant 96 : index
    %c0_125 = arith.constant 0 : index
    %163 = vector.load %arg12[%c96_124, %c0_125] : memref<288x256xf32, #tpu.memory_space<vmem>>, vector<32x256xf32>
    tpu.vector_store %arg12[%c96_124, %c0_125], %162 {strides = array<i32>} : memref<288x256xf32, #tpu.memory_space<vmem>>, vector<32x256xf32>,
    %c0_126 = arith.constant 0 : index
    %c128_127 = arith.constant 128 : index
    %164 = vector.load %arg11[%c0_126, %c128_127] : memref<32x512xf32, #tpu.memory_space<vmem>>, vector<32x256xf32>
    %c128_128 = arith.constant 128 : index
    %c0_129 = arith.constant 0 : index
    %165 = vector.load %arg12[%c128_128, %c0_129] : memref<288x256xf32, #tpu.memory_space<vmem>>, vector<32x256xf32>
    tpu.vector_store %arg12[%c128_128, %c0_129], %164 {strides = array<i32>} : memref<288x256xf32, #tpu.memory_space<vmem>>, vector<32x256xf32>,
    %c0_130 = arith.constant 0 : index
    %c129_131 = arith.constant 129 : index
    %166 = vector.load %arg11[%c0_130, %c129_131] : memref<32x512xf32, #tpu.memory_space<vmem>>, vector<32x256xf32>
    %cst_132 = arith.constant 0.000000e+00 : f32
    %167 = vector.shape_cast %22 : vector<1x256xi1> to vector<1x256xi1>
    %168 = vector.broadcast %167 : vector<1x256xi1> to vector<32x256xi1>
    %169 = vector.broadcast %cst_132 : f32 to vector<32x256xf32>
    %170 = arith.select %168, %166, %169 : vector<32x256xi1>, vector<32x256xf32>
    %c160_133 = arith.constant 160 : index
    %c0_134 = arith.constant 0 : index
    %171 = vector.load %arg12[%c160_133, %c0_134] : memref<288x256xf32, #tpu.memory_space<vmem>>, vector<32x256xf32>
    tpu.vector_store %arg12[%c160_133, %c0_134], %170 {strides = array<i32>} : memref<288x256xf32, #tpu.memory_space<vmem>>, vector<32x256xf32>,
    %c0_135 = arith.constant 0 : index
    %c143_136 = arith.constant 143 : index
    %172 = vector.load %arg11[%c0_135, %c143_136] : memref<32x512xf32, #tpu.memory_space<vmem>>, vector<32x256xf32>
    %cst_137 = arith.constant 0.000000e+00 : f32
    %173 = vector.shape_cast %20 : vector<1x256xi1> to vector<1x256xi1>
    %174 = vector.broadcast %173 : vector<1x256xi1> to vector<32x256xi1>
    %175 = vector.broadcast %cst_137 : f32 to vector<32x256xf32>
    %176 = arith.select %174, %172, %175 : vector<32x256xi1>, vector<32x256xf32>
    %c192_138 = arith.constant 192 : index
    %c0_139 = arith.constant 0 : index
    %177 = vector.load %arg12[%c192_138, %c0_139] : memref<288x256xf32, #tpu.memory_space<vmem>>, vector<32x256xf32>
    tpu.vector_store %arg12[%c192_138, %c0_139], %176 {strides = array<i32>} : memref<288x256xf32, #tpu.memory_space<vmem>>, vector<32x256xf32>,
    %c0_140 = arith.constant 0 : index
    %c144_141 = arith.constant 144 : index
    %178 = vector.load %arg11[%c0_140, %c144_141] : memref<32x512xf32, #tpu.memory_space<vmem>>, vector<32x256xf32>
    %c224_142 = arith.constant 224 : index
    %c0_143 = arith.constant 0 : index
    %179 = vector.load %arg12[%c224_142, %c0_143] : memref<288x256xf32, #tpu.memory_space<vmem>>, vector<32x256xf32>
    tpu.vector_store %arg12[%c224_142, %c0_143], %178 {strides = array<i32>} : memref<288x256xf32, #tpu.memory_space<vmem>>, vector<32x256xf32>,
    %c0_144 = arith.constant 0 : index
    %c145_145 = arith.constant 145 : index
    %180 = vector.load %arg11[%c0_144, %c145_145] : memref<32x512xf32, #tpu.memory_space<vmem>>, vector<32x256xf32>
    %cst_146 = arith.constant 0.000000e+00 : f32
    %181 = vector.shape_cast %22 : vector<1x256xi1> to vector<1x256xi1>
    %182 = vector.broadcast %181 : vector<1x256xi1> to vector<32x256xi1>
    %183 = vector.broadcast %cst_146 : f32 to vector<32x256xf32>
    %184 = arith.select %182, %180, %183 : vector<32x256xi1>, vector<32x256xf32>
    %c256_147 = arith.constant 256 : index
    %c0_148 = arith.constant 0 : index
    %185 = vector.load %arg12[%c256_147, %c0_148] : memref<288x256xf32, #tpu.memory_space<vmem>>, vector<32x256xf32>
    tpu.vector_store %arg12[%c256_147, %c0_148], %184 {strides = array<i32>} : memref<288x256xf32, #tpu.memory_space<vmem>>, vector<32x256xf32>,
    %c0_149 = arith.constant 0 : index
    %c0_150 = arith.constant 0 : index
    %186 = vector.load %arg12[%c0_149, %c0_150] : memref<288x256xf32, #tpu.memory_space<vmem>>, vector<288x256xf32>
    %187 = arith.truncf %186 : vector<288x256xf32> to vector<288x256xbf16>
    %cst_151 = arith.constant dense<0.000000e+00> : vector<32x256xf32>
    %188 = tpu.matmul %141, %187, %cst_151 {dimension_numbers = #tpu.dot_dimension_numbers<[1], [0], [0], [1], [0, 0, 1, 1], [], []>} : vector<32x288xbf16>, vector<288x256xbf16>, vector<32x256xf32> -> vector<32x256xf32>
    %189 = vector.broadcast %143 : vector<32x1xf32> to vector<32x256xf32>
    %190 = arith.addf %188, %189 : vector<32x256xf32>
    %cst_152 = arith.constant 0.000000e+00 : f32
    %191 = vector.broadcast %cst_152 : f32 to vector<32x256xf32>
    %192 = arith.maximumf %190, %191 : vector<32x256xf32>
    %c1_153 = arith.constant 1 : index
    %c0_154 = arith.constant 0 : index
    %c0_155 = arith.constant 0 : index
    %c0_156 = arith.constant 0 : index
    %193 = vector.load %arg6[%c1_153, %c0_154, %c0_155, %c0_156] : memref<2x1x32x1xf32, #tpu.memory_space<vmem>>, vector<1x1x32x1xf32>
    %194 = vector.shape_cast %193 : vector<1x1x32x1xf32> to vector<32x1xf32>
    %195 = vector.broadcast %194 : vector<32x1xf32> to vector<32x256xf32>
    %196 = arith.mulf %195, %192 : vector<32x256xf32>
    %c1_157 = arith.constant 1 : index
    %c0_158 = arith.constant 0 : index
    %c0_159 = arith.constant 0 : index
    %c0_160 = arith.constant 0 : index
    %197 = vector.load %arg7[%c1_157, %c0_158, %c0_159, %c0_160] : memref<2x1x32x1xf32, #tpu.memory_space<vmem>>, vector<1x1x32x1xf32>
    %198 = vector.shape_cast %197 : vector<1x1x32x1xf32> to vector<32x1xf32>
    %199 = vector.broadcast %198 : vector<32x1xf32> to vector<32x256xf32>
    %200 = arith.addf %196, %199 : vector<32x256xf32>
    %c0_161 = arith.constant 0 : index
    %c0_162 = arith.constant 0 : index
    %201 = vector.load %arg8[%c0_161, %c0_162] : memref<3x32xbf16, #tpu.memory_space<vmem>>, vector<3x32xbf16>
    %202 = arith.truncf %200 : vector<32x256xf32> to vector<32x256xbf16>
    %cst_163 = arith.constant dense<0.000000e+00> : vector<3x256xf32>
    %203 = tpu.matmul %201, %202, %cst_163 {dimension_numbers = #tpu.dot_dimension_numbers<[1], [0], [0], [1], [0, 0, 1, 1], [], []>} : vector<3x32xbf16>, vector<32x256xbf16>, vector<3x256xf32> -> vector<3x256xf32>
    %c0_164 = arith.constant 0 : index
    %c0_165 = arith.constant 0 : index
    %204 = vector.load %arg9[%c0_164, %c0_165] : memref<3x1xf32, #tpu.memory_space<vmem>>, vector<3x1xf32>
    %205 = vector.broadcast %204 : vector<3x1xf32> to vector<3x256xf32>
    %206 = arith.addf %203, %205 : vector<3x256xf32>
    %c0_166 = arith.constant 0 : index
    %c0_167 = arith.constant 0 : index
    %c0_168 = arith.constant 0 : index
    %207 = vector.load %arg10[%c0_166, %c0_167, %c0_168] : memref<1x3x256xf32, #tpu.memory_space<vmem>>, vector<1x3x256xf32>
    %208 = vector.shape_cast %207 : vector<1x3x256xf32> to vector<3x256xf32>
    %209 = vector.shape_cast %206 : vector<3x256xf32> to vector<1x3x256xf32>
    tpu.vector_store %arg10[%c0_166, %c0_167, %c0_168], %209 {strides = array<i32>} : memref<1x3x256xf32, #tpu.memory_space<vmem>>, vector<1x3x256xf32>,
    return
  }
  func.func @transform_0(%arg0: i32) -> (i32, i32, i32) {
    %c0_i32 = arith.constant 0 : i32
    %c0_i32_0 = arith.constant 0 : i32
    %c0_i32_1 = arith.constant 0 : i32
    return %arg0, %c0_i32, %c0_i32_0 : i32, i32, i32
  }
  func.func @transform_1(%arg0: i32) -> (i32, i32) {
    %c0_i32 = arith.constant 0 : i32
    %c0_i32_0 = arith.constant 0 : i32
    %c0_i32_1 = arith.constant 0 : i32
    return %c0_i32, %c0_i32_0 : i32, i32
  }
  func.func @transform_2(%arg0: i32) -> (i32, i32) {
    %c0_i32 = arith.constant 0 : i32
    %c0_i32_0 = arith.constant 0 : i32
    %c0_i32_1 = arith.constant 0 : i32
    return %c0_i32, %c0_i32_0 : i32, i32
  }
  func.func @transform_3(%arg0: i32) -> (i32, i32, i32) {
    %c0_i32 = arith.constant 0 : i32
    %c0_i32_0 = arith.constant 0 : i32
    %c0_i32_1 = arith.constant 0 : i32
    %c0_i32_2 = arith.constant 0 : i32
    return %c0_i32, %c0_i32_0, %c0_i32_1 : i32, i32, i32
  }
  func.func @transform_4(%arg0: i32) -> (i32, i32, i32) {
    %c0_i32 = arith.constant 0 : i32
    %c0_i32_0 = arith.constant 0 : i32
    %c0_i32_1 = arith.constant 0 : i32
    %c0_i32_2 = arith.constant 0 : i32
    return %c0_i32, %c0_i32_0, %c0_i32_1 : i32, i32, i32
  }
  func.func @transform_5(%arg0: i32) -> (i32, i32, i32, i32) {
    %c0_i32 = arith.constant 0 : i32
    %c0_i32_0 = arith.constant 0 : i32
    %c0_i32_1 = arith.constant 0 : i32
    %c0_i32_2 = arith.constant 0 : i32
    return %c0_i32, %arg0, %c0_i32_0, %c0_i32_1 : i32, i32, i32, i32
  }
  func.func @transform_6(%arg0: i32) -> (i32, i32, i32, i32) {
    %c0_i32 = arith.constant 0 : i32
    %c0_i32_0 = arith.constant 0 : i32
    %c0_i32_1 = arith.constant 0 : i32
    %c0_i32_2 = arith.constant 0 : i32
    return %c0_i32, %arg0, %c0_i32_0, %c0_i32_1 : i32, i32, i32, i32
  }
  func.func @transform_7(%arg0: i32) -> (i32, i32) {
    %c0_i32 = arith.constant 0 : i32
    %c0_i32_0 = arith.constant 0 : i32
    %c0_i32_1 = arith.constant 0 : i32
    return %c0_i32, %c0_i32_0 : i32, i32
  }
  func.func @transform_8(%arg0: i32) -> (i32, i32) {
    %c0_i32 = arith.constant 0 : i32
    %c0_i32_0 = arith.constant 0 : i32
    %c0_i32_1 = arith.constant 0 : i32
    return %c0_i32, %c0_i32_0 : i32, i32
  }
  func.func @transform_9(%arg0: i32) -> (i32, i32, i32) {
    %c0_i32 = arith.constant 0 : i32
    %c0_i32_0 = arith.constant 0 : i32
    %c0_i32_1 = arith.constant 0 : i32
    return %arg0, %c0_i32, %c0_i32_0 : i32, i32, i32
  }
}

</mosaic_0001>

<llo_original>
// kernel: utility_network_forward.1
$region0: #{utility_network_forward.1}
  #allocation0 [shape = 'u32[]', space=smem, size = 0x4, offset = 0x4, fixed_abs, tag = 'smem constant byte address 0x4 - core index']
  #allocation1 [shape = 'u32[144,128]{1,0:T(1,128)}', space=vmem, size = 0x12000, scoped, tag = 'internal scratch']
  #allocation2 [shape = 'f32[32,512]{1,0:T(8,128)}', space=vmem, size = 0x10000, scoped, tag = 'scratch operand']
  #allocation3 [shape = 'f32[288,256]{1,0:T(8,128)}', space=vmem, size = 0x48000, scoped, tag = 'scratch operand']
  %s0 = inlined_call_operand.vmem [shape: f32[2,8,256], index: 0, kind: input, shape index: {}]
  %s1 = inlined_call_operand.vmem [shape: bf16[32,72], index: 1, kind: input, shape index: {}]
  %s2 = inlined_call_operand.vmem [shape: f32[32,1], index: 2, kind: input, shape index: {}]
  %s3 = inlined_call_operand.vmem [shape: bf16[2,32,288], index: 3, kind: input, shape index: {}]
  %s4 = inlined_call_operand.vmem [shape: f32[2,32,1], index: 4, kind: input, shape index: {}]
  %s5 = inlined_call_operand.vmem [shape: f32[2,2,32,1], index: 5, kind: input, shape index: {}]
  %s6 = inlined_call_operand.vmem [shape: f32[2,2,32,1], index: 6, kind: input, shape index: {}]
  %s7 = inlined_call_operand.vmem [shape: bf16[3,32], index: 7, kind: input, shape index: {}]
  %s8 = inlined_call_operand.vmem [shape: f32[3,1], index: 8, kind: input, shape index: {}]
  %s9 = inlined_call_operand.vmem [shape: f32[2,3,256], index: 9, kind: output, shape index: {}]
  %s10 = sld [smem:[#allocation0]]
  $region145: #{utility_network_forward.1} parent=0
    _
  %s12 = ssub.s32 1, %s10
  %s13 = scalar_select 0, %s12, %s10
  $region1: #{utility_network_forward.1} parent=0
    #allocation4 [shape = 'u8[65536]{0}', space=vmem, size = 0x10000, scoped, tag = 'input window, operand 5']
    #allocation5 [shape = 'u8[65536]{0}', space=vmem, size = 0x10000, scoped, tag = 'input window, operand 6']
    loop: start=0, step=1, limit=4
    $region2: #{utility_network_forward.1} parent=1 // loop_pre_header
      _
    $region3: #{utility_network_forward.1} parent=1 // loop_header
      %s15 = sphi 0, %s19
      %p16 = scmp.ge.s32.totalorder %s15, 4
      %s25 = sphi 0, %s27
      %s28 = sphi 0, %s25
      %s29 = sphi 0, %s28
      %s45 = sphi 0, %s29
      %s49 = sphi 0, %s49
      %s51 = sphi 0, %s49
      %s52 = sphi 0, %s51
      %s66 = sphi 0, %s52
      %s70 = sphi 0, %s70
      %s72 = sphi 0, %s70
      %s73 = sphi 0, %s72
      %s87 = sphi 0, %s73
      %s91 = sphi 0, %s91
      %s93 = sphi 0, %s91
      %s94 = sphi 0, %s93
      %s108 = sphi 0, %s94
      %s112 = sphi 0, %s112
      %s114 = sphi 0, %s112
      %s115 = sphi 0, %s114
      %s129 = sphi 0, %s115
      %s135 = sphi 0, %s137
      %s138 = sphi 0, %s135
      %s139 = sphi 0, %s138
      %s155 = sphi 0, %s139
      %s161 = sphi 0, %s163
      %s164 = sphi 0, %s161
      %s165 = sphi 0, %s164
      %s181 = sphi 0, %s165
      %s185 = sphi 0, %s185
      %s187 = sphi 0, %s185
      %s188 = sphi 0, %s187
      %s202 = sphi 0, %s188
      %s206 = sphi 0, %s206
      %s208 = sphi 0, %s206
      %s209 = sphi 0, %s208
      %s223 = sphi 0, %s209
      %s229 = sphi 0, %s231
      %s232 = sphi 0, %s229
      %s233 = sphi 0, %s232
      %s249 = sphi 0, %s233
    $region4: #{utility_network_forward.1} parent=1 // loop_header_branch
      %18 = sbr.rel (%p16) target = $region8
    $region5: #{utility_network_forward.1} parent=1 // loop_body
      %s20 = ssub.s32 %s15, 1
      %s21 = ssub.s32 %s15, 2
      %s22 = sadd.s32 %s15, 1
      %s23 = ssub.s32 %s15, %s22
      %p24 = scmp.eq.s32.totalorder %s23, 0
      %s26 = sadd.s32 %s25, 1
      %s27 = scalar_select %p24, %s25, %s26
      %p30 = pneg %p24
      %p31 = scmp.eq.s32.totalorder %s15, 1
      %p32 = por %p30, %p31
      %p33 = scmp.ne.s32.totalorder %s25, %s28
      %p34 = scmp.eq.s32.totalorder %s15, 0
      %p35 = por %p33, %p34
      %p36 = scmp.ne.s32.totalorder %s25, %s28
      %p37 = scmp.eq.s32.totalorder %s20, 1
      %p38 = por %p36, %p37
      %p39 = scmp.ne.s32.totalorder %s28, %s29
      %p40 = scmp.eq.s32.totalorder %s20, 0
      %p41 = por %p39, %p40
      %p42 = scmp.ne.s32.totalorder %s28, %s29
      %p43 = scmp.eq.s32.totalorder %s21, 1
      %p44 = por %p42, %p43
      %p46 = scmp.ne.s32.totalorder %s29, %s45
      %p47 = scmp.eq.s32.totalorder %s21, 0
      %p48 = por %p46, %p47
      %s50 = sadd.s32 %s49, 1
      %p53 = scmp.eq.s32.totalorder %s15, 1
      %p54 = scmp.ne.s32.totalorder %s49, %s51
      %p55 = scmp.eq.s32.totalorder %s15, 0
      %p56 = por %p54, %p55
      %p57 = scmp.ne.s32.totalorder %s49, %s51
      %p58 = scmp.eq.s32.totalorder %s20, 1
      %p59 = por %p57, %p58
      %p60 = scmp.ne.s32.totalorder %s51, %s52
      %p61 = scmp.eq.s32.totalorder %s20, 0
      %p62 = por %p60, %p61
      %p63 = scmp.ne.s32.totalorder %s51, %s52
      %p64 = scmp.eq.s32.totalorder %s21, 1
      %p65 = por %p63, %p64
      %p67 = scmp.ne.s32.totalorder %s52, %s66
      %p68 = scmp.eq.s32.totalorder %s21, 0
      %p69 = por %p67, %p68
      %s71 = sadd.s32 %s70, 1
      %p74 = scmp.eq.s32.totalorder %s15, 1
      %p75 = scmp.ne.s32.totalorder %s70, %s72
      %p76 = scmp.eq.s32.totalorder %s15, 0
      %p77 = por %p75, %p76
      %p78 = scmp.ne.s32.totalorder %s70, %s72
      %p79 = scmp.eq.s32.totalorder %s20, 1
      %p80 = por %p78, %p79
      %p81 = scmp.ne.s32.totalorder %s72, %s73
      %p82 = scmp.eq.s32.totalorder %s20, 0
      %p83 = por %p81, %p82
      %p84 = scmp.ne.s32.totalorder %s72, %s73
      %p85 = scmp.eq.s32.totalorder %s21, 1
      %p86 = por %p84, %p85
      %p88 = scmp.ne.s32.totalorder %s73, %s87
      %p89 = scmp.eq.s32.totalorder %s21, 0
      %p90 = por %p88, %p89
      %s92 = sadd.s32 %s91, 1
      %p95 = scmp.eq.s32.totalorder %s15, 1
      %p96 = scmp.ne.s32.totalorder %s91, %s93
      %p97 = scmp.eq.s32.totalorder %s15, 0
      %p98 = por %p96, %p97
      %p99 = scmp.ne.s32.totalorder %s91, %s93
      %p100 = scmp.eq.s32.totalorder %s20, 1
      %p101 = por %p99, %p100
      %p102 = scmp.ne.s32.totalorder %s93, %s94
      %p103 = scmp.eq.s32.totalorder %s20, 0
      %p104 = por %p102, %p103
      %p105 = scmp.ne.s32.totalorder %s93, %s94
      %p106 = scmp.eq.s32.totalorder %s21, 1
      %p107 = por %p105, %p106
      %p109 = scmp.ne.s32.totalorder %s94, %s108
      %p110 = scmp.eq.s32.totalorder %s21, 0
      %p111 = por %p109, %p110
      %s113 = sadd.s32 %s112, 1
      %p116 = scmp.eq.s32.totalorder %s15, 1
      %p117 = scmp.ne.s32.totalorder %s112, %s114
      %p118 = scmp.eq.s32.totalorder %s15, 0
      %p119 = por %p117, %p118
      %p120 = scmp.ne.s32.totalorder %s112, %s114
      %p121 = scmp.eq.s32.totalorder %s20, 1
      %p122 = por %p120, %p121
      %p123 = scmp.ne.s32.totalorder %s114, %s115
      %p124 = scmp.eq.s32.totalorder %s20, 0
      %p125 = por %p123, %p124
      %p126 = scmp.ne.s32.totalorder %s114, %s115
      %p127 = scmp.eq.s32.totalorder %s21, 1
      %p128 = por %p126, %p127
      %p130 = scmp.ne.s32.totalorder %s115, %s129
      %p131 = scmp.eq.s32.totalorder %s21, 0
      %p132 = por %p130, %p131
      %s133 = ssub.s32 %s15, %s22
      %p134 = scmp.eq.s32.totalorder %s133, 0
      %s136 = sadd.s32 %s135, 1
      %s137 = scalar_select %p134, %s135, %s136
      %p140 = pneg %p134
      %p141 = scmp.eq.s32.totalorder %s15, 1
      %p142 = por %p140, %p141
      %p143 = scmp.ne.s32.totalorder %s135, %s138
      %p144 = scmp.eq.s32.totalorder %s15, 0
      %p145 = por %p143, %p144
      %p146 = scmp.ne.s32.totalorder %s135, %s138
      %p147 = scmp.eq.s32.totalorder %s20, 1
      %p148 = por %p146, %p147
      %p149 = scmp.ne.s32.totalorder %s138, %s139
      %p150 = scmp.eq.s32.totalorder %s20, 0
      %p151 = por %p149, %p150
      %p152 = scmp.ne.s32.totalorder %s138, %s139
      %p153 = scmp.eq.s32.totalorder %s21, 1
      %p154 = por %p152, %p153
      %p156 = scmp.ne.s32.totalorder %s139, %s155
      %p157 = scmp.eq.s32.totalorder %s21, 0
      %p158 = por %p156, %p157
      %s159 = ssub.s32 %s15, %s22
      %p160 = scmp.eq.s32.totalorder %s159, 0
      %s162 = sadd.s32 %s161, 1
      %s163 = scalar_select %p160, %s161, %s162
      %p166 = pneg %p160
      %p167 = scmp.eq.s32.totalorder %s15, 1
      %p168 = por %p166, %p167
      %p169 = scmp.ne.s32.totalorder %s161, %s164
      %p170 = scmp.eq.s32.totalorder %s15, 0
      %p171 = por %p169, %p170
      %p172 = scmp.ne.s32.totalorder %s161, %s164
      %p173 = scmp.eq.s32.totalorder %s20, 1
      %p174 = por %p172, %p173
      %p175 = scmp.ne.s32.totalorder %s164, %s165
      %p176 = scmp.eq.s32.totalorder %s20, 0
      %p177 = por %p175, %p176
      %p178 = scmp.ne.s32.totalorder %s164, %s165
      %p179 = scmp.eq.s32.totalorder %s21, 1
      %p180 = por %p178, %p179
      %p182 = scmp.ne.s32.totalorder %s165, %s181
      %p183 = scmp.eq.s32.totalorder %s21, 0
      %p184 = por %p182, %p183
      %s186 = sadd.s32 %s185, 1
      %p189 = scmp.eq.s32.totalorder %s15, 1
      %p190 = scmp.ne.s32.totalorder %s185, %s187
      %p191 = scmp.eq.s32.totalorder %s15, 0
      %p192 = por %p190, %p191
      %p193 = scmp.ne.s32.totalorder %s185, %s187
      %p194 = scmp.eq.s32.totalorder %s20, 1
      %p195 = por %p193, %p194
      %p196 = scmp.ne.s32.totalorder %s187, %s188
      %p197 = scmp.eq.s32.totalorder %s20, 0
      %p198 = por %p196, %p197
      %p199 = scmp.ne.s32.totalorder %s187, %s188
      %p200 = scmp.eq.s32.totalorder %s21, 1
      %p201 = por %p199, %p200
      %p203 = scmp.ne.s32.totalorder %s188, %s202
      %p204 = scmp.eq.s32.totalorder %s21, 0
      %p205 = por %p203, %p204
      %s207 = sadd.s32 %s206, 1
      %p210 = scmp.eq.s32.totalorder %s15, 1
      %p211 = scmp.ne.s32.totalorder %s206, %s208
      %p212 = scmp.eq.s32.totalorder %s15, 0
      %p213 = por %p211, %p212
      %p214 = scmp.ne.s32.totalorder %s206, %s208
      %p215 = scmp.eq.s32.totalorder %s20, 1
      %p216 = por %p214, %p215
      %p217 = scmp.ne.s32.totalorder %s208, %s209
      %p218 = scmp.eq.s32.totalorder %s20, 0
      %p219 = por %p217, %p218
      %p220 = scmp.ne.s32.totalorder %s208, %s209
      %p221 = scmp.eq.s32.totalorder %s21, 1
      %p222 = por %p220, %p221
      %p224 = scmp.ne.s32.totalorder %s209, %s223
      %p225 = scmp.eq.s32.totalorder %s21, 0
      %p226 = por %p224, %p225
      %s227 = ssub.s32 %s15, %s22
      %p228 = scmp.eq.s32.totalorder %s227, 0
      %s230 = sadd.s32 %s229, 1
      %s231 = scalar_select %p228, %s229, %s230
      %p234 = pneg %p228
      %p235 = scmp.eq.s32.totalorder %s15, 1
      %p236 = por %p234, %p235
      %p237 = scmp.ne.s32.totalorder %s229, %s232
      %p238 = scmp.eq.s32.totalorder %s15, 0
      %p239 = por %p237, %p238
      %p240 = scmp.ne.s32.totalorder %s229, %s232
      %p241 = scmp.eq.s32.totalorder %s20, 1
      %p242 = por %p240, %p241
      %p243 = scmp.ne.s32.totalorder %s232, %s233
      %p244 = scmp.eq.s32.totalorder %s20, 0
      %p245 = por %p243, %p244
      %p246 = scmp.ne.s32.totalorder %s232, %s233
      %p247 = scmp.eq.s32.totalorder %s21, 1
      %p248 = por %p246, %p247
      %p250 = scmp.ne.s32.totalorder %s233, %s249
      %p251 = scmp.eq.s32.totalorder %s21, 0
      %p252 = por %p250, %p251
      %p253 = scmp.le.s32.totalorder 1, %s15
      %p254 = scmp.lt.s32.totalorder %s15, 3
      %p255 = pnand %p253, %p254
      %p256 = pneg %p255
      // Predicated region
      $region9: #{utility_network_forward.1} parent=5 // pred_check
        _
      $region10: #{utility_network_forward.1} parent=5 // pred_check_branch
        %258 = sbr.rel (%p255) target = $region12
      $region11: #{utility_network_forward.1} parent=5 // pred_region
        %s259 = ssub.s32 %s15, 1
        // Predicated region
        $region13: #{utility_network_forward.1} parent=11 // pred_check
          %p260 = pneg %p62
        $region14: #{utility_network_forward.1} parent=11 // pred_check_branch
          %262 = sbr.rel (%p260) target = $region16
        $region15: #{utility_network_forward.1} parent=11 // pred_region
          _
        $region16: #{utility_network_forward.1} parent=11 // pred_fallthru
          _
        // Predicated region
        $region17: #{utility_network_forward.1} parent=11 // pred_check
          %p263 = pneg %p83
        $region18: #{utility_network_forward.1} parent=11 // pred_check_branch
          %265 = sbr.rel (%p263) target = $region20
        $region19: #{utility_network_forward.1} parent=11 // pred_region
          _
        $region20: #{utility_network_forward.1} parent=11 // pred_fallthru
          _
        // Predicated region
        $region21: #{utility_network_forward.1} parent=11 // pred_check
          %p266 = pneg %p104
        $region22: #{utility_network_forward.1} parent=11 // pred_check_branch
          %268 = sbr.rel (%p266) target = $region24
        $region23: #{utility_network_forward.1} parent=11 // pred_region
          _
        $region24: #{utility_network_forward.1} parent=11 // pred_fallthru
          _
        // Predicated region
        $region25: #{utility_network_forward.1} parent=11 // pred_check
          %p269 = pneg %p125
        $region26: #{utility_network_forward.1} parent=11 // pred_check_branch
          %271 = sbr.rel (%p269) target = $region28
        $region27: #{utility_network_forward.1} parent=11 // pred_region
          _
        $region28: #{utility_network_forward.1} parent=11 // pred_fallthru
          _
        // Predicated region
        $region29: #{utility_network_forward.1} parent=11 // pred_check
          %p272 = pneg %p198
        $region30: #{utility_network_forward.1} parent=11 // pred_check_branch
          %274 = sbr.rel (%p272) target = $region32
        $region31: #{utility_network_forward.1} parent=11 // pred_region
          _
        $region32: #{utility_network_forward.1} parent=11 // pred_fallthru
          _
        // Predicated region
        $region33: #{utility_network_forward.1} parent=11 // pred_check
          %p275 = pneg %p219
        $region34: #{utility_network_forward.1} parent=11 // pred_check_branch
          %277 = sbr.rel (%p275) target = $region36
        $region35: #{utility_network_forward.1} parent=11 // pred_region
          _
        $region36: #{utility_network_forward.1} parent=11 // pred_fallthru
          _
      $region12: #{utility_network_forward.1} parent=5 // pred_fallthru
        _
      %p278 = scmp.lt.s32.totalorder %s15, 2
      // Predicated region
      $region37: #{utility_network_forward.1} parent=5 // pred_check
        %p279 = pneg %p278
      $region38: #{utility_network_forward.1} parent=5 // pred_check_branch
        %281 = sbr.rel (%p279) target = $region40
      $region39: #{utility_network_forward.1} parent=5 // pred_region
        // Predicated region
        $region41: #{utility_network_forward.1} parent=39 // pred_check
          %p282 = pneg %p35
        $region42: #{utility_network_forward.1} parent=39 // pred_check_branch
          %284 = sbr.rel (%p282) target = $region44
        $region43: #{utility_network_forward.1} parent=39 // pred_region
          %p285 = scmp.lt.s32.totalorder %s15, 1
          %s286 = scalar_select %p285, %s15, 1
          %s287 = smul.addr %s286, 2
          %s288 = smul.addr %s287, 8
          %s289 = scalar_lea.vmem %s0, %s288
        $region44: #{utility_network_forward.1} parent=39 // pred_fallthru
          _
        // Predicated region
        $region45: #{utility_network_forward.1} parent=39 // pred_check
          %p290 = pneg %p145
        $region46: #{utility_network_forward.1} parent=39 // pred_check_branch
          %292 = sbr.rel (%p290) target = $region48
        $region47: #{utility_network_forward.1} parent=39 // pred_region
          %s293 = sand.u32 %s135, 1
          %s294 = sand.u32 %s135, 1
          %s295 = smul.addr %s294, 64
          %s296 = scalar_lea.vmem [#allocation4], %s295
          %s297 = smul.addr %s15, 4
          %s298 = smul.addr %s297, 8
          %s299 = scalar_lea.vmem %s5, %s298
          // Predicated region
          $region49: #{utility_network_forward.1} parent=47 // pred_check
            _
          $region50: #{utility_network_forward.1} parent=47 // pred_check_branch
            %301 = sbr.rel (0) target = $region52
          $region51: #{utility_network_forward.1} parent=47 // pred_region
            // Predicated region
            $region53: #{utility_network_forward.1} parent=51 // pred_check
              _
            $region54: #{utility_network_forward.1} parent=51 // pred_check_branch
              %303 = sbr.rel (0) target = $region56
            $region55: #{utility_network_forward.1} parent=51 // pred_region
              // Predicated region
              $region68: #{utility_network_forward.1} parent=55 // pred_check
                _
              $region69: #{utility_network_forward.1} parent=55 // pred_check_branch
                %332 = sbr.rel (0) target = $region71
              $region70: #{utility_network_forward.1} parent=55 // pred_region
                loop: start=0, step=1, limit=1
                $region72: #{utility_network_forward.1} parent=70 // loop_pre_header
                  _
                $region73: #{utility_network_forward.1} parent=70 // loop_header
                  %s334 = sphi 0, %s338
                  %p335 = scmp.ge.s32.totalorder %s334, 1
                  %s339 = sphi %s299, %s299
                  %s340 = sphi %s296, %s296
                $region74: #{utility_network_forward.1} parent=70 // loop_header_branch
                  %337 = sbr.rel (%p335) target = $region78
                $region75: #{utility_network_forward.1} parent=70 // loop_body
                  %v341 = vld [vmem:[%s339] sm:$0xff]
                  %342 = vst [vmem:[%s340] sm:$0xff] %v341
                  %v343 = vld [vmem:[%s339 + $0x8] sm:$0xff]
                  %344 = vst [vmem:[%s340 + $0x8] sm:$0xff] %v343
                  %v345 = vld [vmem:[%s339 + $0x10] sm:$0xff]
                  %346 = vst [vmem:[%s340 + $0x10] sm:$0xff] %v345
                  %v347 = vld [vmem:[%s339 + $0x18] sm:$0xff]
                  %348 = vst [vmem:[%s340 + $0x18] sm:$0xff] %v347
                  %v349 = vld [vmem:[%s339 + $0x40] sm:$0xff]
                  %350 = vst [vmem:[%s340 + $0x20] sm:$0xff] %v349
                  %v351 = vld [vmem:[%s339 + $0x48] sm:$0xff]
                  %352 = vst [vmem:[%s340 + $0x28] sm:$0xff] %v351
                  %v353 = vld [vmem:[%s339 + $0x50] sm:$0xff]
                  %354 = vst [vmem:[%s340 + $0x30] sm:$0xff] %v353
                  %v355 = vld [vmem:[%s339 + $0x58] sm:$0xff]
                  %356 = vst [vmem:[%s340 + $0x38] sm:$0xff] %v355
                $region76: #{utility_network_forward.1} parent=70 // loop_footer
                  %s338 = sadd.s32 1, %s334
                $region77: #{utility_network_forward.1} parent=70 // loop_footer_branch
                  %333 = sbr.rel target = $region73
                $region78: #{utility_network_forward.1} parent=70 // loop_exit
                  _
              $region71: #{utility_network_forward.1} parent=55 // pred_fallthru
                _
              // Predicated region
              $region79: #{utility_network_forward.1} parent=55 // pred_check
                _
              $region80: #{utility_network_forward.1} parent=55 // pred_check_branch
                %358 = sbr.rel target = $region82
              $region81: #{utility_network_forward.1} parent=55 // pred_region
                _
              $region82: #{utility_network_forward.1} parent=55 // pred_fallthru
                _
            $region56: #{utility_network_forward.1} parent=51 // pred_fallthru
              _
            // Predicated region
            $region57: #{utility_network_forward.1} parent=51 // pred_check
              _
            $region58: #{utility_network_forward.1} parent=51 // pred_check_branch
              %305 = sbr.rel target = $region60
            $region59: #{utility_network_forward.1} parent=51 // pred_region
              loop: start=0, step=1, limit=1
              $region61: #{utility_network_forward.1} parent=59 // loop_pre_header
                _
              $region62: #{utility_network_forward.1} parent=59 // loop_header
                %s308 = sphi 0, %s312
                %p309 = scmp.ge.s32.totalorder %s308, 1
                %s313 = sphi %s299, %s299
                %s314 = sphi %s296, %s296
              $region63: #{utility_network_forward.1} parent=59 // loop_header_branch
                %311 = sbr.rel (%p309) target = $region67
              $region64: #{utility_network_forward.1} parent=59 // loop_body
                %v315 = vld [vmem:[%s313] sm:$0xff]
                %316 = vst [vmem:[%s314] sm:$0xff] %v315
                %v317 = vld [vmem:[%s313 + $0x8] sm:$0xff]
                %318 = vst [vmem:[%s314 + $0x8] sm:$0xff] %v317
                %v319 = vld [vmem:[%s313 + $0x10] sm:$0xff]
                %320 = vst [vmem:[%s314 + $0x10] sm:$0xff] %v319
                %v321 = vld [vmem:[%s313 + $0x18] sm:$0xff]
                %322 = vst [vmem:[%s314 + $0x18] sm:$0xff] %v321
                %v323 = vld [vmem:[%s313 + $0x40] sm:$0xff]
                %324 = vst [vmem:[%s314 + $0x20] sm:$0xff] %v323
                %v325 = vld [vmem:[%s313 + $0x48] sm:$0xff]
                %326 = vst [vmem:[%s314 + $0x28] sm:$0xff] %v325
                %v327 = vld [vmem:[%s313 + $0x50] sm:$0xff]
                %328 = vst [vmem:[%s314 + $0x30] sm:$0xff] %v327
                %v329 = vld [vmem:[%s313 + $0x58] sm:$0xff]
                %330 = vst [vmem:[%s314 + $0x38] sm:$0xff] %v329
              $region65: #{utility_network_forward.1} parent=59 // loop_footer
                %s312 = sadd.s32 1, %s308
              $region66: #{utility_network_forward.1} parent=59 // loop_footer_branch
                %307 = sbr.rel target = $region62
              $region67: #{utility_network_forward.1} parent=59 // loop_exit
                _
            $region60: #{utility_network_forward.1} parent=51 // pred_fallthru
              _
          $region52: #{utility_network_forward.1} parent=47 // pred_fallthru
            _
          %359 = vnop
        $region48: #{utility_network_forward.1} parent=39 // pred_fallthru
          _
        // Predicated region
        $region83: #{utility_network_forward.1} parent=39 // pred_check
          %p360 = pneg %p171
        $region84: #{utility_network_forward.1} parent=39 // pred_check_branch
          %362 = sbr.rel (%p360) target = $region86
        $region85: #{utility_network_forward.1} parent=39 // pred_region
          %s363 = sand.u32 %s161, 1
          %s364 = sand.u32 %s161, 1
          %s365 = smul.addr %s364, 64
          %s366 = scalar_lea.vmem [#allocation5], %s365
          %s367 = smul.addr %s15, 4
          %s368 = smul.addr %s367, 8
          %s369 = scalar_lea.vmem %s6, %s368
          // Predicated region
          $region87: #{utility_network_forward.1} parent=85 // pred_check
            _
          $region88: #{utility_network_forward.1} parent=85 // pred_check_branch
            %371 = sbr.rel (0) target = $region90
          $region89: #{utility_network_forward.1} parent=85 // pred_region
            // Predicated region
            $region91: #{utility_network_forward.1} parent=89 // pred_check
              _
            $region92: #{utility_network_forward.1} parent=89 // pred_check_branch
              %373 = sbr.rel (0) target = $region94
            $region93: #{utility_network_forward.1} parent=89 // pred_region
              // Predicated region
              $region106: #{utility_network_forward.1} parent=93 // pred_check
                _
              $region107: #{utility_network_forward.1} parent=93 // pred_check_branch
                %402 = sbr.rel (0) target = $region109
              $region108: #{utility_network_forward.1} parent=93 // pred_region
                loop: start=0, step=1, limit=1
                $region110: #{utility_network_forward.1} parent=108 // loop_pre_header
                  _
                $region111: #{utility_network_forward.1} parent=108 // loop_header
                  %s404 = sphi 0, %s408
                  %p405 = scmp.ge.s32.totalorder %s404, 1
                  %s409 = sphi %s369, %s369
                  %s410 = sphi %s366, %s366
                $region112: #{utility_network_forward.1} parent=108 // loop_header_branch
                  %407 = sbr.rel (%p405) target = $region116
                $region113: #{utility_network_forward.1} parent=108 // loop_body
                  %v411 = vld [vmem:[%s409] sm:$0xff]
                  %412 = vst [vmem:[%s410] sm:$0xff] %v411
                  %v413 = vld [vmem:[%s409 + $0x8] sm:$0xff]
                  %414 = vst [vmem:[%s410 + $0x8] sm:$0xff] %v413
                  %v415 = vld [vmem:[%s409 + $0x10] sm:$0xff]
                  %416 = vst [vmem:[%s410 + $0x10] sm:$0xff] %v415
                  %v417 = vld [vmem:[%s409 + $0x18] sm:$0xff]
                  %418 = vst [vmem:[%s410 + $0x18] sm:$0xff] %v417
                  %v419 = vld [vmem:[%s409 + $0x40] sm:$0xff]
                  %420 = vst [vmem:[%s410 + $0x20] sm:$0xff] %v419
                  %v421 = vld [vmem:[%s409 + $0x48] sm:$0xff]
                  %422 = vst [vmem:[%s410 + $0x28] sm:$0xff] %v421
                  %v423 = vld [vmem:[%s409 + $0x50] sm:$0xff]
                  %424 = vst [vmem:[%s410 + $0x30] sm:$0xff] %v423
                  %v425 = vld [vmem:[%s409 + $0x58] sm:$0xff]
                  %426 = vst [vmem:[%s410 + $0x38] sm:$0xff] %v425
                $region114: #{utility_network_forward.1} parent=108 // loop_footer
                  %s408 = sadd.s32 1, %s404
                $region115: #{utility_network_forward.1} parent=108 // loop_footer_branch
                  %403 = sbr.rel target = $region111
                $region116: #{utility_network_forward.1} parent=108 // loop_exit
                  _
              $region109: #{utility_network_forward.1} parent=93 // pred_fallthru
                _
              // Predicated region
              $region117: #{utility_network_forward.1} parent=93 // pred_check
                _
              $region118: #{utility_network_forward.1} parent=93 // pred_check_branch
                %428 = sbr.rel target = $region120
              $region119: #{utility_network_forward.1} parent=93 // pred_region
                _
              $region120: #{utility_network_forward.1} parent=93 // pred_fallthru
                _
            $region94: #{utility_network_forward.1} parent=89 // pred_fallthru
              _
            // Predicated region
            $region95: #{utility_network_forward.1} parent=89 // pred_check
              _
            $region96: #{utility_network_forward.1} parent=89 // pred_check_branch
              %375 = sbr.rel target = $region98
            $region97: #{utility_network_forward.1} parent=89 // pred_region
              loop: start=0, step=1, limit=1
              $region99: #{utility_network_forward.1} parent=97 // loop_pre_header
                _
              $region100: #{utility_network_forward.1} parent=97 // loop_header
                %s378 = sphi 0, %s382
                %p379 = scmp.ge.s32.totalorder %s378, 1
                %s383 = sphi %s369, %s369
                %s384 = sphi %s366, %s366
              $region101: #{utility_network_forward.1} parent=97 // loop_header_branch
                %381 = sbr.rel (%p379) target = $region105
              $region102: #{utility_network_forward.1} parent=97 // loop_body
                %v385 = vld [vmem:[%s383] sm:$0xff]
                %386 = vst [vmem:[%s384] sm:$0xff] %v385
                %v387 = vld [vmem:[%s383 + $0x8] sm:$0xff]
                %388 = vst [vmem:[%s384 + $0x8] sm:$0xff] %v387
                %v389 = vld [vmem:[%s383 + $0x10] sm:$0xff]
                %390 = vst [vmem:[%s384 + $0x10] sm:$0xff] %v389
                %v391 = vld [vmem:[%s383 + $0x18] sm:$0xff]
                %392 = vst [vmem:[%s384 + $0x18] sm:$0xff] %v391
                %v393 = vld [vmem:[%s383 + $0x40] sm:$0xff]
                %394 = vst [vmem:[%s384 + $0x20] sm:$0xff] %v393
                %v395 = vld [vmem:[%s383 + $0x48] sm:$0xff]
                %396 = vst [vmem:[%s384 + $0x28] sm:$0xff] %v395
                %v397 = vld [vmem:[%s383 + $0x50] sm:$0xff]
                %398 = vst [vmem:[%s384 + $0x30] sm:$0xff] %v397
                %v399 = vld [vmem:[%s383 + $0x58] sm:$0xff]
                %400 = vst [vmem:[%s384 + $0x38] sm:$0xff] %v399
              $region103: #{utility_network_forward.1} parent=97 // loop_footer
                %s382 = sadd.s32 1, %s378
              $region104: #{utility_network_forward.1} parent=97 // loop_footer_branch
                %377 = sbr.rel target = $region100
              $region105: #{utility_network_forward.1} parent=97 // loop_exit
                _
            $region98: #{utility_network_forward.1} parent=89 // pred_fallthru
              _
          $region90: #{utility_network_forward.1} parent=85 // pred_fallthru
            _
          %429 = vnop
        $region86: #{utility_network_forward.1} parent=39 // pred_fallthru
          _
      $region40: #{utility_network_forward.1} parent=5 // pred_fallthru
        _
      %p430 = scmp.le.s32.totalorder 1, %s15
      %p431 = scmp.lt.s32.totalorder %s15, 3
      %p432 = pnand %p430, %p431
      %p433 = pneg %p432
      // Predicated region
      $region121: #{utility_network_forward.1} parent=5 // pred_check
        _
      $region122: #{utility_network_forward.1} parent=5 // pred_check_branch
        %435 = sbr.rel (%p432) target = $region124
      $region123: #{utility_network_forward.1} parent=5 // pred_region
        %s436 = ssub.s32 %s15, 1
        %s437 = sand.u32 %s138, 1
        %s438 = sand.u32 %s138, 1
        %s439 = smul.addr %s438, 64
        %s440 = scalar_lea.vmem [#allocation4], %s439
        // Predicated region
        $region125: #{utility_network_forward.1} parent=123 // pred_check
          %p441 = pneg %p151
        $region126: #{utility_network_forward.1} parent=123 // pred_check_branch
          %443 = sbr.rel (%p441) target = $region128
        $region127: #{utility_network_forward.1} parent=123 // pred_region
          _
        $region128: #{utility_network_forward.1} parent=123 // pred_fallthru
          _
        %s444 = sand.u32 %s164, 1
        %s445 = sand.u32 %s164, 1
        %s446 = smul.addr %s445, 64
        %s447 = scalar_lea.vmem [#allocation5], %s446
        // Predicated region
        $region129: #{utility_network_forward.1} parent=123 // pred_check
          %p448 = pneg %p177
        $region130: #{utility_network_forward.1} parent=123 // pred_check_branch
          %450 = sbr.rel (%p448) target = $region132
        $region131: #{utility_network_forward.1} parent=123 // pred_region
          _
        $region132: #{utility_network_forward.1} parent=123 // pred_fallthru
          _
        %p451 = scmp.lt.s32.totalorder %s20, 1
        %s452 = scalar_select %p451, %s20, 1
        %s453 = smul.addr %s452, 2
        %s454 = smul.addr %s453, 8
        %s455 = scalar_lea.vmem %s0, %s454
        %p456 = pneg %p41
        %p457 = pneg %p38
        %p458 = pneg %p62
        %p459 = pneg %p59
        %p460 = pneg %p83
        %p461 = pneg %p80
        %p462 = pneg %p104
        %p463 = pneg %p101
        %p464 = pneg %p125
        %p465 = pneg %p122
        %s466 = sand.u32 %s138, 1
        %s467 = sand.u32 %s138, 1
        %s468 = smul.addr %s467, 64
        %s469 = scalar_lea.vmem [#allocation4], %s468
        %p470 = pneg %p151
        %p471 = pneg %p148
        %s472 = sand.u32 %s164, 1
        %s473 = sand.u32 %s164, 1
        %s474 = smul.addr %s473, 64
        %s475 = scalar_lea.vmem [#allocation5], %s474
        %p476 = pneg %p177
        %p477 = pneg %p174
        %p478 = pneg %p198
        %p479 = pneg %p195
        %p480 = pneg %p219
        %p481 = pneg %p216
        %p482 = pneg %p245
        %p483 = pneg %p242
        %p484 = scmp.lt.s32.totalorder %s20, 1
        %s485 = scalar_select %p484, %s20, 1
        %s486 = smul.addr %s485, 2
        %s487 = smul.addr %s486, 4
        %s488 = scalar_lea.vmem %s9, %s487
        %p489 = scmp.lt.s32.totalorder %s20, 1
        %s490 = scalar_select %p489, %s20, 1
        %s491 = smul.addr %s490, 2
        %s492 = smul.addr %s491, 8
        %s493 = scalar_lea.vmem %s0, %s492
        %p494 = scmp.lt.s32.totalorder %s20, 1
        %s495 = scalar_select %p494, %s20, 1
        %s496 = smul.addr %s495, 2
        %s497 = smul.addr %s496, 4
        %s498 = scalar_lea.vmem %s9, %s497
        %500 = vst [vmem:[#allocation2] sm:$0xff] 0.0
        %501 = vst [vmem:[#allocation2 + $0x8] sm:$0xff] 0.0
        %502 = vst [vmem:[#allocation2 + $0x10] sm:$0xff] 0.0
        %503 = vst [vmem:[#allocation2 + $0x18] sm:$0xff] 0.0
        %504 = vst [vmem:[#allocation2 + $0x20] sm:$0xff] 0.0
        %505 = vst [vmem:[#allocation2 + $0x28] sm:$0xff] 0.0
        %506 = vst [vmem:[#allocation2 + $0x30] sm:$0xff] 0.0
        %507 = vst [vmem:[#allocation2 + $0x38] sm:$0xff] 0.0
        %508 = vst [vmem:[#allocation2 + $0x40] sm:$0xff] 0.0
        %509 = vst [vmem:[#allocation2 + $0x48] sm:$0xff] 0.0
        %510 = vst [vmem:[#allocation2 + $0x50] sm:$0xff] 0.0
        %511 = vst [vmem:[#allocation2 + $0x58] sm:$0xff] 0.0
        %512 = vst [vmem:[#allocation2 + $0x60] sm:$0xff] 0.0
        %513 = vst [vmem:[#allocation2 + $0x68] sm:$0xff] 0.0
        %514 = vst [vmem:[#allocation2 + $0x70] sm:$0xff] 0.0
        %515 = vst [vmem:[#allocation2 + $0x78] sm:$0xff] 0.0
        %v516 = vlaneseq
        %v517 = vand.u32 %v516, 127
        %v518 = vadd.s32 %v517, 128
        %vm519 = vcmp.lt.s32.totalorder %v517, 0
        %v520 = vsub.s32 0, %v517
        %v521 = vsel %vm519, %v520, %v517
        %v522 = vshrl.u32 %v521, 4
        %v523 = vand.u32 %v521, 15
        %v524 = vsub.s32 0, %v523
        %v525 = vsel %vm519, %v524, %v523
        %vm526 = vcmp.lt.s32.totalorder %v518, 0
        %v527 = vsub.s32 0, %v518
        %v528 = vsel %vm526, %v527, %v518
        %v529 = vshrl.u32 %v528, 4
        %v530 = vand.u32 %v528, 15
        %v531 = vsub.s32 0, %v530
        %v532 = vsel %vm526, %v531, %v530
        %vm533 = vcmp.ne.s32.totalorder %v525, 0
        %vm534 = vcmp.ne.s32.totalorder %v532, 0
        %vm535 = vcmp.lt.s32.totalorder %v525, 0
        %vm536 = vcmp.lt.s32.totalorder %v532, 0
        %vm537 = vmand %vm535, %vm533
        %vm538 = vmand %vm536, %vm534
        %v539 = vadd.s32 %v525, 16
        %v540 = vadd.s32 %v532, 16
        %v541 = vsel %vm537, %v539, %v525
        %v542 = vsel %vm538, %v540, %v532
        %vm543 = vcmp.ne.s32.totalorder %v541, 0
        %vm544 = vcmp.ne.s32.totalorder %v542, 0
        %vm545 = vcmp.ne.s32.totalorder %v541, 15
        %vm546 = vcmp.ne.s32.totalorder %v542, 15
        %v547 = vld [vmem:[%s493] sm:$0xff]
        %v548 = vld [vmem:[%s493 + $0x8] sm:$0xff]
        %549 = vst [vmem:[#allocation2 + $0x8] sm:$0xff] %v547
        %550 = vst [vmem:[#allocation2 + $0x10] sm:$0xff] %v548
        %v551 = vld [vmem:[%s1] sm:$0xf]
        %v552 = vld [vmem:[%s1 + $0x4] sm:$0xf]
        %v553 = vld [vmem:[%s1 + $0x8] sm:$0xf]
        %v554 = vld [vmem:[%s1 + $0xc] sm:$0xf]
        %v555 = vld [vmem:[%s2] sm:$0xff]
        %v556 = vld [vmem:[%s2 + $0x8] sm:$0xff]
        %v557 = vld [vmem:[%s2 + $0x10] sm:$0xff]
        %v558 = vld [vmem:[%s2 + $0x18] sm:$0xff]
        %v559 = vld [vmem:[#allocation2] sm:$0xff]
        %v560 = vld [vmem:[#allocation2 + $0x8] sm:$0xff]
        %v561 = vld [vmem:[#allocation2 + $0x10] sm:$0xff]
        %v562 = vsel %vm543, 1, 0
        %v563 = vsel %vm544, 1, 0
        %vm564 = vcmp.eq.s32.totalorder %v562, 1
        %vm565 = vcmp.eq.s32.totalorder %v563, 1
        %569 = vrot.lane.b32.xlu0 %v559, 17
        %v570 = vpop.permute.xlu0 %569
        %571 = vrot.lane.b32.xlu0 %v560, 17
        %v572 = vpop.permute.xlu0 %571
        %573 = vrot.lane.b32.xlu0 %v561, 17
        %v574 = vpop.permute.xlu0 %573
        %vm575 = vcmask 138240
        %v576 = vsel %vm575, %v570, %v572
        %v577 = vsel %vm575, %v572, %v574
        %v580 = vsel %vm564, %v576, 0.0
        %v581 = vsel %vm565, %v577, 0.0
        %582 = vst [vmem:[#allocation3] sm:$0xff] %v580
        %583 = vst [vmem:[#allocation3 + $0x8] sm:$0xff] %v581
        %v584 = vld [vmem:[#allocation2] sm:$0xff]
        %v585 = vld [vmem:[#allocation2 + $0x8] sm:$0xff]
        %v586 = vld [vmem:[#allocation2 + $0x10] sm:$0xff]
        %590 = vrot.lane.b32.xlu0 %v584, 16
        %v591 = vpop.permute.xlu0 %590
        %592 = vrot.lane.b32.xlu0 %v585, 16
        %v593 = vpop.permute.xlu0 %592
        %594 = vrot.lane.b32.xlu0 %v586, 16
        %v595 = vpop.permute.xlu0 %594
        %vm596 = vcmask 130048
        %v597 = vsel %vm596, %v591, %v593
        %v598 = vsel %vm596, %v593, %v595
        %601 = vst [vmem:[#allocation3 + $0x10] sm:$0xff] %v597
        %602 = vst [vmem:[#allocation3 + $0x18] sm:$0xff] %v598
        %v603 = vld [vmem:[#allocation2] sm:$0xff]
        %v604 = vld [vmem:[#allocation2 + $0x8] sm:$0xff]
        %v605 = vld [vmem:[#allocation2 + $0x10] sm:$0xff]
        %v606 = vsel %vm545, 1, 0
        %v607 = vsel %vm546, 1, 0
        %vm608 = vcmp.eq.s32.totalorder %v606, 1
        %vm609 = vcmp.eq.s32.totalorder %v607, 1
        %613 = vrot.lane.b32.xlu0 %v603, 15
        %v614 = vpop.permute.xlu0 %613
        %615 = vrot.lane.b32.xlu0 %v604, 15
        %v616 = vpop.permute.xlu0 %615
        %617 = vrot.lane.b32.xlu0 %v605, 15
        %v618 = vpop.permute.xlu0 %617
        %vm619 = vcmask 121856
        %v620 = vsel %vm619, %v614, %v616
        %v621 = vsel %vm619, %v616, %v618
        %v624 = vsel %vm608, %v620, 0.0
        %v625 = vsel %vm609, %v621, 0.0
        %626 = vst [vmem:[#allocation3 + $0x20] sm:$0xff] %v624
        %627 = vst [vmem:[#allocation3 + $0x28] sm:$0xff] %v625
        %v628 = vld [vmem:[#allocation2] sm:$0xff]
        %v629 = vld [vmem:[#allocation2 + $0x8] sm:$0xff]
        %v630 = vld [vmem:[#allocation2 + $0x10] sm:$0xff]
        %634 = vrot.lane.b32.xlu0 %v628, 1
        %v635 = vpop.permute.xlu0 %634
        %636 = vrot.lane.b32.xlu0 %v629, 1
        %v637 = vpop.permute.xlu0 %636
        %638 = vrot.lane.b32.xlu0 %v630, 1
        %v639 = vpop.permute.xlu0 %638
        %vm640 = vcmask 7168
        %v641 = vsel %vm640, %v635, %v637
        %v642 = vsel %vm640, %v637, %v639
        %v645 = vsel %vm564, %v641, 0.0
        %v646 = vsel %vm565, %v642, 0.0
        %647 = vst [vmem:[#allocation3 + $0x30] sm:$0xff] %v645
        %648 = vst [vmem:[#allocation3 + $0x38] sm:$0xff] %v646
        %v649 = vld [vmem:[#allocation2 + $0x8] sm:$0xff]
        %v650 = vld [vmem:[#allocation2 + $0x10] sm:$0xff]
        %651 = vst [vmem:[#allocation3 + $0x40] sm:$0xff] %v649
        %652 = vst [vmem:[#allocation3 + $0x48] sm:$0xff] %v650
        %v653 = vld [vmem:[#allocation2 + $0x8] sm:$0xff]
        %v654 = vld [vmem:[#allocation2 + $0x10] sm:$0xff]
        %v655 = vld [vmem:[#allocation2 + $0x18] sm:$0xff]
        %659 = vrot.lane.b32.xlu0 %v653, 127
        %v660 = vpop.permute.xlu0 %659
        %661 = vrot.lane.b32.xlu0 %v654, 127
        %v662 = vpop.permute.xlu0 %661
        %663 = vrot.lane.b32.xlu0 %v655, 127
        %v664 = vpop.permute.xlu0 %663
        %vm665 = vcmask 1039360
        %v666 = vsel %vm665, %v660, %v662
        %v667 = vsel %vm665, %v662, %v664
        %v670 = vsel %vm608, %v666, 0.0
        %v671 = vsel %vm609, %v667, 0.0
        %672 = vst [vmem:[#allocation3 + $0x50] sm:$0xff] %v670
        %673 = vst [vmem:[#allocation3 + $0x58] sm:$0xff] %v671
        %v674 = vld [vmem:[#allocation2 + $0x8] sm:$0xff]
        %v675 = vld [vmem:[#allocation2 + $0x10] sm:$0xff]
        %v676 = vld [vmem:[#allocation2 + $0x18] sm:$0xff]
        %680 = vrot.lane.b32.xlu0 %v674, 113
        %v681 = vpop.permute.xlu0 %680
        %682 = vrot.lane.b32.xlu0 %v675, 113
        %v683 = vpop.permute.xlu0 %682
        %684 = vrot.lane.b32.xlu0 %v676, 113
        %v685 = vpop.permute.xlu0 %684
        %vm686 = vcmask 924672
        %v687 = vsel %vm686, %v681, %v683
        %v688 = vsel %vm686, %v683, %v685
        %v691 = vsel %vm564, %v687, 0.0
        %v692 = vsel %vm565, %v688, 0.0
        %693 = vst [vmem:[#allocation3 + $0x60] sm:$0xff] %v691
        %694 = vst [vmem:[#allocation3 + $0x68] sm:$0xff] %v692
        %v695 = vld [vmem:[#allocation2 + $0x8] sm:$0xff]
        %v696 = vld [vmem:[#allocation2 + $0x10] sm:$0xff]
        %v697 = vld [vmem:[#allocation2 + $0x18] sm:$0xff]
        %701 = vrot.lane.b32.xlu0 %v695, 112
        %v702 = vpop.permute.xlu0 %701
        %703 = vrot.lane.b32.xlu0 %v696, 112
        %v704 = vpop.permute.xlu0 %703
        %705 = vrot.lane.b32.xlu0 %v697, 112
        %v706 = vpop.permute.xlu0 %705
        %vm707 = vcmask 916480
        %v708 = vsel %vm707, %v702, %v704
        %v709 = vsel %vm707, %v704, %v706
        %712 = vst [vmem:[#allocation3 + $0x70] sm:$0xff] %v708
        %713 = vst [vmem:[#allocation3 + $0x78] sm:$0xff] %v709
        %v714 = vld [vmem:[#allocation2 + $0x8] sm:$0xff]
        %v715 = vld [vmem:[#allocation2 + $0x10] sm:$0xff]
        %v716 = vld [vmem:[#allocation2 + $0x18] sm:$0xff]
        %720 = vrot.lane.b32.xlu0 %v714, 111
        %v721 = vpop.permute.xlu0 %720
        %722 = vrot.lane.b32.xlu0 %v715, 111
        %v723 = vpop.permute.xlu0 %722
        %724 = vrot.lane.b32.xlu0 %v716, 111
        %v725 = vpop.permute.xlu0 %724
        %vm726 = vcmask 908288
        %v727 = vsel %vm726, %v721, %v723
        %v728 = vsel %vm726, %v723, %v725
        %v731 = vsel %vm608, %v727, 0.0
        %v732 = vsel %vm609, %v728, 0.0
        %733 = vst [vmem:[#allocation3 + $0x80] sm:$0xff] %v731
        %734 = vst [vmem:[#allocation3 + $0x88] sm:$0xff] %v732
        %v735 = vld [vmem:[#allocation3] sm:$0xff]
        %v736 = vld [vmem:[#allocation3 + $0x8] sm:$0xff]
        %v737 = vld [vmem:[#allocation3 + $0x10] sm:$0xff]
        %v738 = vld [vmem:[#allocation3 + $0x18] sm:$0xff]
        %v739 = vld [vmem:[#allocation3 + $0x20] sm:$0xff]
        %v740 = vld [vmem:[#allocation3 + $0x28] sm:$0xff]
        %v741 = vld [vmem:[#allocation3 + $0x30] sm:$0xff]
        %v742 = vld [vmem:[#allocation3 + $0x38] sm:$0xff]
        %v743 = vld [vmem:[#allocation3 + $0x40] sm:$0xff]
        %v744 = vld [vmem:[#allocation3 + $0x48] sm:$0xff]
        %v745 = vld [vmem:[#allocation3 + $0x50] sm:$0xff]
        %v746 = vld [vmem:[#allocation3 + $0x58] sm:$0xff]
        %v747 = vld [vmem:[#allocation3 + $0x60] sm:$0xff]
        %v748 = vld [vmem:[#allocation3 + $0x68] sm:$0xff]
        %v749 = vld [vmem:[#allocation3 + $0x70] sm:$0xff]
        %v750 = vld [vmem:[#allocation3 + $0x78] sm:$0xff]
        %v751 = vld [vmem:[#allocation3 + $0x80] sm:$0xff]
        %v752 = vld [vmem:[#allocation3 + $0x88] sm:$0xff]
        %v753 = vpack.c.bf16 %v737, %v735
        %v754 = vpack.c.bf16 %v738, %v736
        %v755 = vpack.c.bf16 %v741, %v739
        %v756 = vpack.c.bf16 %v742, %v740
        %v757 = vpack.c.bf16 %v745, %v743
        %v758 = vpack.c.bf16 %v746, %v744
        %v759 = vpack.c.bf16 %v749, %v747
        %v760 = vpack.c.bf16 %v750, %v748
        %v761 = vpack.c.bf16 %v751, %v751
        %v762 = vpack.c.bf16 %v752, %v752
        %764 = vset.pattern.permute.xlu0 0
        %765 = vperm.xlu0 %764, %v555
        %v766 = vpop.permute.xlu0 %765
        %769 = vset.pattern.permute.xlu0 0
        %770 = vperm.xlu0 %769, %v556
        %v771 = vpop.permute.xlu0 %770
        %774 = vset.pattern.permute.xlu0 0
        %775 = vperm.xlu0 %774, %v557
        %v776 = vpop.permute.xlu0 %775
        %779 = vset.pattern.permute.xlu0 0
        %780 = vperm.xlu0 %779, %v558
        %v781 = vpop.permute.xlu0 %780
        %v787 = vunpack.c.l.b16 %v551
        %v788 = vunpack.c.l.b16 %v552
        %v789 = vunpack.c.l.b16 %v553
        %v790 = vunpack.c.l.b16 %v554
        %v791 = vpack.c.b16 %v788, %v787
        %v792 = vpack.c.b16 %v790, %v789
        %vm793 = vcmask 588800
        %v795 = vsel %vm793, %v791, 0
        %v798 = vsel %vm793, %v792, 0
        %vm800 = vcmask 1043456
        %v802 = vsel %vm800, %v761, 0
        %v805 = vsel %vm800, %v762, 0
        %807 = vmatprep.subr.bf16.mxu0 %v754
        %808 = vmatpush1.bf16.msra.mxu0 %v753
        %809 = vmatprep.subr.bf16.mxu0 %v756
        %810 = vmatpush1.bf16.msra.mxu0 %v755
        %811 = vmatprep.subr.bf16.mxu0 %v758
        %812 = vmatpush1.bf16.msra.mxu0 %v757
        %813 = vmatprep.subr.bf16.mxu0 %v760
        %814 = vmatpush1.bf16.msra.mxu0 %v759
        %815 = vmatprep.subr.bf16.mxu0 %v805
        %816 = vmatpush1.bf16.msra.mxu0 %v802
        %817 = vmatprep.subr.bf16.mxu0 0
        %818 = vmatpush1.bf16.msra.mxu0 0
        %819 = vmatprep.subr.bf16.mxu0 0
        %820 = vmatpush1.bf16.msra.mxu0 0
        %821 = vmatprep.subr.bf16.mxu0 0
        %822 = vmatpush1.bf16.msra.mxu0 0
        %823 = vmatprep.subr.bf16.mxu0 0
        %824 = vmatpush1.bf16.msra.mxu0 0
        %825 = vmatprep.subr.bf16.mxu0 0
        %826 = vmatpush1.bf16.msra.mxu0 0
        %827 = vmatprep.subr.bf16.mxu0 0
        %828 = vmatpush1.bf16.msra.mxu0 0
        %829 = vmatprep.subr.bf16.mxu0 0
        %830 = vmatpush1.bf16.msra.mxu0 0
        %831 = vmatprep.subr.bf16.mxu0 0
        %832 = vmatpush1.bf16.msra.mxu0 0
        %833 = vmatprep.subr.bf16.mxu0 0
        %834 = vmatpush1.bf16.msra.mxu0 0
        %835 = vmatprep.subr.bf16.mxu0 0
        %836 = vmatpush1.bf16.msra.mxu0 0
        %837 = vmatprep.subr.bf16.mxu0 0
        %838 = vmatpush1.bf16.msra.mxu0 0
        %839 = vmatprep.mubr.bf16.mxu0 0
        %840 = vmatmul.mubr.bf16.gmra.mrb[0].mxu0 %v795
        %v841 = vpop.f32.mrb[0].mxu0
        %v842 = vadd.f32 %v766, %v841
        %v843 = vpop.f32.mrb[0].mxu0
        %v844 = vadd.f32 %v766, %v843
        %v845 = vpop.f32.mrb[0].mxu0
        %v846 = vadd.f32 %v771, %v845
        %v847 = vpop.f32.mrb[0].mxu0
        %v848 = vadd.f32 %v771, %v847
        %849 = vmatprep.mubr.bf16.mxu0 0
        %850 = vmatmul.mubr.bf16.gmra.mrb[0].mxu0 %v798
        %v851 = vpop.f32.mrb[0].mxu0
        %v852 = vadd.f32 %v776, %v851
        %v853 = vpop.f32.mrb[0].mxu0
        %v854 = vadd.f32 %v776, %v853
        %v855 = vpop.f32.mrb[0].mxu0
        %v856 = vadd.f32 %v781, %v855
        %v857 = vpop.f32.mrb[0].mxu0
        %v858 = vadd.f32 %v781, %v857
        %859 = vdwg.mxu0
        %v860 = vmax.f32 %v842, 0.0
        %v861 = vmax.f32 %v844, 0.0
        %v862 = vmax.f32 %v846, 0.0
        %v863 = vmax.f32 %v848, 0.0
        %v864 = vmax.f32 %v852, 0.0
        %v865 = vmax.f32 %v854, 0.0
        %v866 = vmax.f32 %v856, 0.0
        %v867 = vmax.f32 %v858, 0.0
        %868 = vst [vmem:[#allocation2 + $0x8] sm:$0xff] %v860
        %869 = vst [vmem:[#allocation2 + $0x10] sm:$0xff] %v861
        %870 = vst [vmem:[#allocation2 + $0x28] sm:$0xff] %v862
        %871 = vst [vmem:[#allocation2 + $0x30] sm:$0xff] %v863
        %872 = vst [vmem:[#allocation2 + $0x48] sm:$0xff] %v864
        %873 = vst [vmem:[#allocation2 + $0x50] sm:$0xff] %v865
        %874 = vst [vmem:[#allocation2 + $0x68] sm:$0xff] %v866
        %875 = vst [vmem:[#allocation2 + $0x70] sm:$0xff] %v867
        %v876 = vld [vmem:[%s3] sm:$0xff]
        %v877 = vld [vmem:[%s3 + $0x8] sm:$0xf]
        %v878 = vld [vmem:[%s3 + $0xc] sm:$0xff]
        %v879 = vld [vmem:[%s3 + $0x14] sm:$0xf]
        %v880 = vld [vmem:[%s3 + $0x18] sm:$0xff]
        %v881 = vld [vmem:[%s3 + $0x20] sm:$0xf]
        %v882 = vld [vmem:[%s3 + $0x24] sm:$0xff]
        %v883 = vld [vmem:[%s3 + $0x2c] sm:$0xf]
        %v884 = vld [vmem:[%s4] sm:$0xff]
        %v885 = vld [vmem:[%s4 + $0x8] sm:$0xff]
        %v886 = vld [vmem:[%s4 + $0x10] sm:$0xff]
        %v887 = vld [vmem:[%s4 + $0x18] sm:$0xff]
        %v888 = vld [vmem:[#allocation2] sm:$0xff]
        %v889 = vld [vmem:[#allocation2 + $0x8] sm:$0xff]
        %v890 = vld [vmem:[#allocation2 + $0x10] sm:$0xff]
        %v891 = vld [vmem:[#allocation2 + $0x20] sm:$0xff]
        %v892 = vld [vmem:[#allocation2 + $0x28] sm:$0xff]
        %v893 = vld [vmem:[#allocation2 + $0x30] sm:$0xff]
        %v894 = vld [vmem:[#allocation2 + $0x40] sm:$0xff]
        %v895 = vld [vmem:[#allocation2 + $0x48] sm:$0xff]
        %v896 = vld [vmem:[#allocation2 + $0x50] sm:$0xff]
        %v897 = vld [vmem:[#allocation2 + $0x60] sm:$0xff]
        %v898 = vld [vmem:[#allocation2 + $0x68] sm:$0xff]
        %v899 = vld [vmem:[#allocation2 + $0x70] sm:$0xff]
        %912 = vrot.lane.b32.xlu0 %v888, 17
        %v913 = vpop.permute.xlu0 %912
        %914 = vrot.lane.b32.xlu0 %v889, 17
        %v915 = vpop.permute.xlu0 %914
        %916 = vrot.lane.b32.xlu0 %v890, 17
        %v917 = vpop.permute.xlu0 %916
        %918 = vrot.lane.b32.xlu0 %v891, 17
        %v919 = vpop.permute.xlu0 %918
        %920 = vrot.lane.b32.xlu0 %v892, 17
        %v921 = vpop.permute.xlu0 %920
        %922 = vrot.lane.b32.xlu0 %v893, 17
        %v923 = vpop.permute.xlu0 %922
        %924 = vrot.lane.b32.xlu0 %v894, 17
        %v925 = vpop.permute.xlu0 %924
        %926 = vrot.lane.b32.xlu0 %v895, 17
        %v927 = vpop.permute.xlu0 %926
        %928 = vrot.lane.b32.xlu0 %v896, 17
        %v929 = vpop.permute.xlu0 %928
        %930 = vrot.lane.b32.xlu0 %v897, 17
        %v931 = vpop.permute.xlu0 %930
        %932 = vrot.lane.b32.xlu0 %v898, 17
        %v933 = vpop.permute.xlu0 %932
        %934 = vrot.lane.b32.xlu0 %v899, 17
        %v935 = vpop.permute.xlu0 %934
        %v936 = vsel %vm575, %v913, %v915
        %v937 = vsel %vm575, %v915, %v917
        %v938 = vsel %vm575, %v919, %v921
        %v939 = vsel %vm575, %v921, %v923
        %v940 = vsel %vm575, %v925, %v927
        %v941 = vsel %vm575, %v927, %v929
        %v942 = vsel %vm575, %v931, %v933
        %v943 = vsel %vm575, %v933, %v935
        %v952 = vsel %vm564, %v936, 0.0
        %v953 = vsel %vm565, %v937, 0.0
        %v954 = vsel %vm564, %v938, 0.0
        %v955 = vsel %vm565, %v939, 0.0
        %v956 = vsel %vm564, %v940, 0.0
        %v957 = vsel %vm565, %v941, 0.0
        %v958 = vsel %vm564, %v942, 0.0
        %v959 = vsel %vm565, %v943, 0.0
        %960 = vst [vmem:[#allocation3] sm:$0xff] %v952
        %961 = vst [vmem:[#allocation3 + $0x8] sm:$0xff] %v953
        %962 = vst [vmem:[#allocation3 + $0x10] sm:$0xff] %v954
        %963 = vst [vmem:[#allocation3 + $0x18] sm:$0xff] %v955
        %964 = vst [vmem:[#allocation3 + $0x20] sm:$0xff] %v956
        %965 = vst [vmem:[#allocation3 + $0x28] sm:$0xff] %v957
        %966 = vst [vmem:[#allocation3 + $0x30] sm:$0xff] %v958
        %967 = vst [vmem:[#allocation3 + $0x38] sm:$0xff] %v959
        %v968 = vld [vmem:[#allocation2] sm:$0xff]
        %v969 = vld [vmem:[#allocation2 + $0x8] sm:$0xff]
        %v970 = vld [vmem:[#allocation2 + $0x10] sm:$0xff]
        %v971 = vld [vmem:[#allocation2 + $0x20] sm:$0xff]
        %v972 = vld [vmem:[#allocation2 + $0x28] sm:$0xff]
        %v973 = vld [vmem:[#allocation2 + $0x30] sm:$0xff]
        %v974 = vld [vmem:[#allocation2 + $0x40] sm:$0xff]
        %v975 = vld [vmem:[#allocation2 + $0x48] sm:$0xff]
        %v976 = vld [vmem:[#allocation2 + $0x50] sm:$0xff]
        %v977 = vld [vmem:[#allocation2 + $0x60] sm:$0xff]
        %v978 = vld [vmem:[#allocation2 + $0x68] sm:$0xff]
        %v979 = vld [vmem:[#allocation2 + $0x70] sm:$0xff]
        %992 = vrot.lane.b32.xlu0 %v968, 16
        %v993 = vpop.permute.xlu0 %992
        %994 = vrot.lane.b32.xlu0 %v969, 16
        %v995 = vpop.permute.xlu0 %994
        %996 = vrot.lane.b32.xlu0 %v970, 16
        %v997 = vpop.permute.xlu0 %996
        %998 = vrot.lane.b32.xlu0 %v971, 16
        %v999 = vpop.permute.xlu0 %998
        %1000 = vrot.lane.b32.xlu0 %v972, 16
        %v1001 = vpop.permute.xlu0 %1000
        %1002 = vrot.lane.b32.xlu0 %v973, 16
        %v1003 = vpop.permute.xlu0 %1002
        %1004 = vrot.lane.b32.xlu0 %v974, 16
        %v1005 = vpop.permute.xlu0 %1004
        %1006 = vrot.lane.b32.xlu0 %v975, 16
        %v1007 = vpop.permute.xlu0 %1006
        %1008 = vrot.lane.b32.xlu0 %v976, 16
        %v1009 = vpop.permute.xlu0 %1008
        %1010 = vrot.lane.b32.xlu0 %v977, 16
        %v1011 = vpop.permute.xlu0 %1010
        %1012 = vrot.lane.b32.xlu0 %v978, 16
        %v1013 = vpop.permute.xlu0 %1012
        %1014 = vrot.lane.b32.xlu0 %v979, 16
        %v1015 = vpop.permute.xlu0 %1014
        %v1016 = vsel %vm596, %v993, %v995
        %v1017 = vsel %vm596, %v995, %v997
        %v1018 = vsel %vm596, %v999, %v1001
        %v1019 = vsel %vm596, %v1001, %v1003
        %v1020 = vsel %vm596, %v1005, %v1007
        %v1021 = vsel %vm596, %v1007, %v1009
        %v1022 = vsel %vm596, %v1011, %v1013
        %v1023 = vsel %vm596, %v1013, %v1015
        %1032 = vst [vmem:[#allocation3 + $0x40] sm:$0xff] %v1016
        %1033 = vst [vmem:[#allocation3 + $0x48] sm:$0xff] %v1017
        %1034 = vst [vmem:[#allocation3 + $0x50] sm:$0xff] %v1018
        %1035 = vst [vmem:[#allocation3 + $0x58] sm:$0xff] %v1019
        %1036 = vst [vmem:[#allocation3 + $0x60] sm:$0xff] %v1020
        %1037 = vst [vmem:[#allocation3 + $0x68] sm:$0xff] %v1021
        %1038 = vst [vmem:[#allocation3 + $0x70] sm:$0xff] %v1022
        %1039 = vst [vmem:[#allocation3 + $0x78] sm:$0xff] %v1023
        %v1040 = vld [vmem:[#allocation2] sm:$0xff]
        %v1041 = vld [vmem:[#allocation2 + $0x8] sm:$0xff]
        %v1042 = vld [vmem:[#allocation2 + $0x10] sm:$0xff]
        %v1043 = vld [vmem:[#allocation2 + $0x20] sm:$0xff]
        %v1044 = vld [vmem:[#allocation2 + $0x28] sm:$0xff]
        %v1045 = vld [vmem:[#allocation2 + $0x30] sm:$0xff]
        %v1046 = vld [vmem:[#allocation2 + $0x40] sm:$0xff]
        %v1047 = vld [vmem:[#allocation2 + $0x48] sm:$0xff]
        %v1048 = vld [vmem:[#allocation2 + $0x50] sm:$0xff]
        %v1049 = vld [vmem:[#allocation2 + $0x60] sm:$0xff]
        %v1050 = vld [vmem:[#allocation2 + $0x68] sm:$0xff]
        %v1051 = vld [vmem:[#allocation2 + $0x70] sm:$0xff]
        %1064 = vrot.lane.b32.xlu0 %v1040, 15
        %v1065 = vpop.permute.xlu0 %1064
        %1066 = vrot.lane.b32.xlu0 %v1041, 15
        %v1067 = vpop.permute.xlu0 %1066
        %1068 = vrot.lane.b32.xlu0 %v1042, 15
        %v1069 = vpop.permute.xlu0 %1068
        %1070 = vrot.lane.b32.xlu0 %v1043, 15
        %v1071 = vpop.permute.xlu0 %1070
        %1072 = vrot.lane.b32.xlu0 %v1044, 15
        %v1073 = vpop.permute.xlu0 %1072
        %1074 = vrot.lane.b32.xlu0 %v1045, 15
        %v1075 = vpop.permute.xlu0 %1074
        %1076 = vrot.lane.b32.xlu0 %v1046, 15
        %v1077 = vpop.permute.xlu0 %1076
        %1078 = vrot.lane.b32.xlu0 %v1047, 15
        %v1079 = vpop.permute.xlu0 %1078
        %1080 = vrot.lane.b32.xlu0 %v1048, 15
        %v1081 = vpop.permute.xlu0 %1080
        %1082 = vrot.lane.b32.xlu0 %v1049, 15
        %v1083 = vpop.permute.xlu0 %1082
        %1084 = vrot.lane.b32.xlu0 %v1050, 15
        %v1085 = vpop.permute.xlu0 %1084
        %1086 = vrot.lane.b32.xlu0 %v1051, 15
        %v1087 = vpop.permute.xlu0 %1086
        %v1088 = vsel %vm619, %v1065, %v1067
        %v1089 = vsel %vm619, %v1067, %v1069
        %v1090 = vsel %vm619, %v1071, %v1073
        %v1091 = vsel %vm619, %v1073, %v1075
        %v1092 = vsel %vm619, %v1077, %v1079
        %v1093 = vsel %vm619, %v1079, %v1081
        %v1094 = vsel %vm619, %v1083, %v1085
        %v1095 = vsel %vm619, %v1085, %v1087
        %v1104 = vsel %vm608, %v1088, 0.0
        %v1105 = vsel %vm609, %v1089, 0.0
        %v1106 = vsel %vm608, %v1090, 0.0
        %v1107 = vsel %vm609, %v1091, 0.0
        %v1108 = vsel %vm608, %v1092, 0.0
        %v1109 = vsel %vm609, %v1093, 0.0
        %v1110 = vsel %vm608, %v1094, 0.0
        %v1111 = vsel %vm609, %v1095, 0.0
        %1112 = vst [vmem:[#allocation3 + $0x80] sm:$0xff] %v1104
        %1113 = vst [vmem:[#allocation3 + $0x88] sm:$0xff] %v1105
        %1114 = vst [vmem:[#allocation3 + $0x90] sm:$0xff] %v1106
        %1115 = vst [vmem:[#allocation3 + $0x98] sm:$0xff] %v1107
        %1116 = vst [vmem:[#allocation3 + $0xa0] sm:$0xff] %v1108
        %1117 = vst [vmem:[#allocation3 + $0xa8] sm:$0xff] %v1109
        %1118 = vst [vmem:[#allocation3 + $0xb0] sm:$0xff] %v1110
        %1119 = vst [vmem:[#allocation3 + $0xb8] sm:$0xff] %v1111
        %v1120 = vld [vmem:[#allocation2] sm:$0xff]
        %v1121 = vld [vmem:[#allocation2 + $0x8] sm:$0xff]
        %v1122 = vld [vmem:[#allocation2 + $0x10] sm:$0xff]
        %v1123 = vld [vmem:[#allocation2 + $0x20] sm:$0xff]
        %v1124 = vld [vmem:[#allocation2 + $0x28] sm:$0xff]
        %v1125 = vld [vmem:[#allocation2 + $0x30] sm:$0xff]
        %v1126 = vld [vmem:[#allocation2 + $0x40] sm:$0xff]
        %v1127 = vld [vmem:[#allocation2 + $0x48] sm:$0xff]
        %v1128 = vld [vmem:[#allocation2 + $0x50] sm:$0xff]
        %v1129 = vld [vmem:[#allocation2 + $0x60] sm:$0xff]
        %v1130 = vld [vmem:[#allocation2 + $0x68] sm:$0xff]
        %v1131 = vld [vmem:[#allocation2 + $0x70] sm:$0xff]
        %1144 = vrot.lane.b32.xlu0 %v1120, 1
        %v1145 = vpop.permute.xlu0 %1144
        %1146 = vrot.lane.b32.xlu0 %v1121, 1
        %v1147 = vpop.permute.xlu0 %1146
        %1148 = vrot.lane.b32.xlu0 %v1122, 1
        %v1149 = vpop.permute.xlu0 %1148
        %1150 = vrot.lane.b32.xlu0 %v1123, 1
        %v1151 = vpop.permute.xlu0 %1150
        %1152 = vrot.lane.b32.xlu0 %v1124, 1
        %v1153 = vpop.permute.xlu0 %1152
        %1154 = vrot.lane.b32.xlu0 %v1125, 1
        %v1155 = vpop.permute.xlu0 %1154
        %1156 = vrot.lane.b32.xlu0 %v1126, 1
        %v1157 = vpop.permute.xlu0 %1156
        %1158 = vrot.lane.b32.xlu0 %v1127, 1
        %v1159 = vpop.permute.xlu0 %1158
        %1160 = vrot.lane.b32.xlu0 %v1128, 1
        %v1161 = vpop.permute.xlu0 %1160
        %1162 = vrot.lane.b32.xlu0 %v1129, 1
        %v1163 = vpop.permute.xlu0 %1162
        %1164 = vrot.lane.b32.xlu0 %v1130, 1
        %v1165 = vpop.permute.xlu0 %1164
        %1166 = vrot.lane.b32.xlu0 %v1131, 1
        %v1167 = vpop.permute.xlu0 %1166
        %v1168 = vsel %vm640, %v1145, %v1147
        %v1169 = vsel %vm640, %v1147, %v1149
        %v1170 = vsel %vm640, %v1151, %v1153
        %v1171 = vsel %vm640, %v1153, %v1155
        %v1172 = vsel %vm640, %v1157, %v1159
        %v1173 = vsel %vm640, %v1159, %v1161
        %v1174 = vsel %vm640, %v1163, %v1165
        %v1175 = vsel %vm640, %v1165, %v1167
        %v1184 = vsel %vm564, %v1168, 0.0
        %v1185 = vsel %vm565, %v1169, 0.0
        %v1186 = vsel %vm564, %v1170, 0.0
        %v1187 = vsel %vm565, %v1171, 0.0
        %v1188 = vsel %vm564, %v1172, 0.0
        %v1189 = vsel %vm565, %v1173, 0.0
        %v1190 = vsel %vm564, %v1174, 0.0
        %v1191 = vsel %vm565, %v1175, 0.0
        %1192 = vst [vmem:[#allocation3 + $0xc0] sm:$0xff] %v1184
        %1193 = vst [vmem:[#allocation3 + $0xc8] sm:$0xff] %v1185
        %1194 = vst [vmem:[#allocation3 + $0xd0] sm:$0xff] %v1186
        %1195 = vst [vmem:[#allocation3 + $0xd8] sm:$0xff] %v1187
        %1196 = vst [vmem:[#allocation3 + $0xe0] sm:$0xff] %v1188
        %1197 = vst [vmem:[#allocation3 + $0xe8] sm:$0xff] %v1189
        %1198 = vst [vmem:[#allocation3 + $0xf0] sm:$0xff] %v1190
        %1199 = vst [vmem:[#allocation3 + $0xf8] sm:$0xff] %v1191
        %v1200 = vld [vmem:[#allocation2 + $0x8] sm:$0xff]
        %v1201 = vld [vmem:[#allocation2 + $0x10] sm:$0xff]
        %v1202 = vld [vmem:[#allocation2 + $0x28] sm:$0xff]
        %v1203 = vld [vmem:[#allocation2 + $0x30] sm:$0xff]
        %v1204 = vld [vmem:[#allocation2 + $0x48] sm:$0xff]
        %v1205 = vld [vmem:[#allocation2 + $0x50] sm:$0xff]
        %v1206 = vld [vmem:[#allocation2 + $0x68] sm:$0xff]
        %v1207 = vld [vmem:[#allocation2 + $0x70] sm:$0xff]
        %1208 = vst [vmem:[#allocation3 + $0x100] sm:$0xff] %v1200
        %1209 = vst [vmem:[#allocation3 + $0x108] sm:$0xff] %v1201
        %1210 = vst [vmem:[#allocation3 + $0x110] sm:$0xff] %v1202
        %1211 = vst [vmem:[#allocation3 + $0x118] sm:$0xff] %v1203
        %1212 = vst [vmem:[#allocation3 + $0x120] sm:$0xff] %v1204
        %1213 = vst [vmem:[#allocation3 + $0x128] sm:$0xff] %v1205
        %1214 = vst [vmem:[#allocation3 + $0x130] sm:$0xff] %v1206
        %1215 = vst [vmem:[#allocation3 + $0x138] sm:$0xff] %v1207
        %v1216 = vld [vmem:[#allocation2 + $0x8] sm:$0xff]
        %v1217 = vld [vmem:[#allocation2 + $0x10] sm:$0xff]
        %v1218 = vld [vmem:[#allocation2 + $0x18] sm:$0xff]
        %v1219 = vld [vmem:[#allocation2 + $0x28] sm:$0xff]
        %v1220 = vld [vmem:[#allocation2 + $0x30] sm:$0xff]
        %v1221 = vld [vmem:[#allocation2 + $0x38] sm:$0xff]
        %v1222 = vld [vmem:[#allocation2 + $0x48] sm:$0xff]
        %v1223 = vld [vmem:[#allocation2 + $0x50] sm:$0xff]
        %v1224 = vld [vmem:[#allocation2 + $0x58] sm:$0xff]
        %v1225 = vld [vmem:[#allocation2 + $0x68] sm:$0xff]
        %v1226 = vld [vmem:[#allocation2 + $0x70] sm:$0xff]
        %v1227 = vld [vmem:[#allocation2 + $0x78] sm:$0xff]
        %1240 = vrot.lane.b32.xlu0 %v1216, 127
        %v1241 = vpop.permute.xlu0 %1240
        %1242 = vrot.lane.b32.xlu0 %v1217, 127
        %v1243 = vpop.permute.xlu0 %1242
        %1244 = vrot.lane.b32.xlu0 %v1218, 127
        %v1245 = vpop.permute.xlu0 %1244
        %1246 = vrot.lane.b32.xlu0 %v1219, 127
        %v1247 = vpop.permute.xlu0 %1246
        %1248 = vrot.lane.b32.xlu0 %v1220, 127
        %v1249 = vpop.permute.xlu0 %1248
        %1250 = vrot.lane.b32.xlu0 %v1221, 127
        %v1251 = vpop.permute.xlu0 %1250
        %1252 = vrot.lane.b32.xlu0 %v1222, 127
        %v1253 = vpop.permute.xlu0 %1252
        %1254 = vrot.lane.b32.xlu0 %v1223, 127
        %v1255 = vpop.permute.xlu0 %1254
        %1256 = vrot.lane.b32.xlu0 %v1224, 127
        %v1257 = vpop.permute.xlu0 %1256
        %1258 = vrot.lane.b32.xlu0 %v1225, 127
        %v1259 = vpop.permute.xlu0 %1258
        %1260 = vrot.lane.b32.xlu0 %v1226, 127
        %v1261 = vpop.permute.xlu0 %1260
        %1262 = vrot.lane.b32.xlu0 %v1227, 127
        %v1263 = vpop.permute.xlu0 %1262
        %v1264 = vsel %vm665, %v1241, %v1243
        %v1265 = vsel %vm665, %v1243, %v1245
        %v1266 = vsel %vm665, %v1247, %v1249
        %v1267 = vsel %vm665, %v1249, %v1251
        %v1268 = vsel %vm665, %v1253, %v1255
        %v1269 = vsel %vm665, %v1255, %v1257
        %v1270 = vsel %vm665, %v1259, %v1261
        %v1271 = vsel %vm665, %v1261, %v1263
        %v1280 = vsel %vm608, %v1264, 0.0
        %v1281 = vsel %vm609, %v1265, 0.0
        %v1282 = vsel %vm608, %v1266, 0.0
        %v1283 = vsel %vm609, %v1267, 0.0
        %v1284 = vsel %vm608, %v1268, 0.0
        %v1285 = vsel %vm609, %v1269, 0.0
        %v1286 = vsel %vm608, %v1270, 0.0
        %v1287 = vsel %vm609, %v1271, 0.0
        %1288 = vst [vmem:[#allocation3 + $0x140] sm:$0xff] %v1280
        %1289 = vst [vmem:[#allocation3 + $0x148] sm:$0xff] %v1281
        %1290 = vst [vmem:[#allocation3 + $0x150] sm:$0xff] %v1282
        %1291 = vst [vmem:[#allocation3 + $0x158] sm:$0xff] %v1283
        %1292 = vst [vmem:[#allocation3 + $0x160] sm:$0xff] %v1284
        %1293 = vst [vmem:[#allocation3 + $0x168] sm:$0xff] %v1285
        %1294 = vst [vmem:[#allocation3 + $0x170] sm:$0xff] %v1286
        %1295 = vst [vmem:[#allocation3 + $0x178] sm:$0xff] %v1287
        %v1296 = vld [vmem:[#allocation2 + $0x8] sm:$0xff]
        %v1297 = vld [vmem:[#allocation2 + $0x10] sm:$0xff]
        %v1298 = vld [vmem:[#allocation2 + $0x18] sm:$0xff]
        %v1299 = vld [vmem:[#allocation2 + $0x28] sm:$0xff]
        %v1300 = vld [vmem:[#allocation2 + $0x30] sm:$0xff]
        %v1301 = vld [vmem:[#allocation2 + $0x38] sm:$0xff]
        %v1302 = vld [vmem:[#allocation2 + $0x48] sm:$0xff]
        %v1303 = vld [vmem:[#allocation2 + $0x50] sm:$0xff]
        %v1304 = vld [vmem:[#allocation2 + $0x58] sm:$0xff]
        %v1305 = vld [vmem:[#allocation2 + $0x68] sm:$0xff]
        %v1306 = vld [vmem:[#allocation2 + $0x70] sm:$0xff]
        %v1307 = vld [vmem:[#allocation2 + $0x78] sm:$0xff]
        %1320 = vrot.lane.b32.xlu0 %v1296, 113
        %v1321 = vpop.permute.xlu0 %1320
        %1322 = vrot.lane.b32.xlu0 %v1297, 113
        %v1323 = vpop.permute.xlu0 %1322
        %1324 = vrot.lane.b32.xlu0 %v1298, 113
        %v1325 = vpop.permute.xlu0 %1324
        %1326 = vrot.lane.b32.xlu0 %v1299, 113
        %v1327 = vpop.permute.xlu0 %1326
        %1328 = vrot.lane.b32.xlu0 %v1300, 113
        %v1329 = vpop.permute.xlu0 %1328
        %1330 = vrot.lane.b32.xlu0 %v1301, 113
        %v1331 = vpop.permute.xlu0 %1330
        %1332 = vrot.lane.b32.xlu0 %v1302, 113
        %v1333 = vpop.permute.xlu0 %1332
        %1334 = vrot.lane.b32.xlu0 %v1303, 113
        %v1335 = vpop.permute.xlu0 %1334
        %1336 = vrot.lane.b32.xlu0 %v1304, 113
        %v1337 = vpop.permute.xlu0 %1336
        %1338 = vrot.lane.b32.xlu0 %v1305, 113
        %v1339 = vpop.permute.xlu0 %1338
        %1340 = vrot.lane.b32.xlu0 %v1306, 113
        %v1341 = vpop.permute.xlu0 %1340
        %1342 = vrot.lane.b32.xlu0 %v1307, 113
        %v1343 = vpop.permute.xlu0 %1342
        %v1344 = vsel %vm686, %v1321, %v1323
        %v1345 = vsel %vm686, %v1323, %v1325
        %v1346 = vsel %vm686, %v1327, %v1329
        %v1347 = vsel %vm686, %v1329, %v1331
        %v1348 = vsel %vm686, %v1333, %v1335
        %v1349 = vsel %vm686, %v1335, %v1337
        %v1350 = vsel %vm686, %v1339, %v1341
        %v1351 = vsel %vm686, %v1341, %v1343
        %v1360 = vsel %vm564, %v1344, 0.0
        %v1361 = vsel %vm565, %v1345, 0.0
        %v1362 = vsel %vm564, %v1346, 0.0
        %v1363 = vsel %vm565, %v1347, 0.0
        %v1364 = vsel %vm564, %v1348, 0.0
        %v1365 = vsel %vm565, %v1349, 0.0
        %v1366 = vsel %vm564, %v1350, 0.0
        %v1367 = vsel %vm565, %v1351, 0.0
        %1368 = vst [vmem:[#allocation3 + $0x180] sm:$0xff] %v1360
        %1369 = vst [vmem:[#allocation3 + $0x188] sm:$0xff] %v1361
        %1370 = vst [vmem:[#allocation3 + $0x190] sm:$0xff] %v1362
        %1371 = vst [vmem:[#allocation3 + $0x198] sm:$0xff] %v1363
        %1372 = vst [vmem:[#allocation3 + $0x1a0] sm:$0xff] %v1364
        %1373 = vst [vmem:[#allocation3 + $0x1a8] sm:$0xff] %v1365
        %1374 = vst [vmem:[#allocation3 + $0x1b0] sm:$0xff] %v1366
        %1375 = vst [vmem:[#allocation3 + $0x1b8] sm:$0xff] %v1367
        %v1376 = vld [vmem:[#allocation2 + $0x8] sm:$0xff]
        %v1377 = vld [vmem:[#allocation2 + $0x10] sm:$0xff]
        %v1378 = vld [vmem:[#allocation2 + $0x18] sm:$0xff]
        %v1379 = vld [vmem:[#allocation2 + $0x28] sm:$0xff]
        %v1380 = vld [vmem:[#allocation2 + $0x30] sm:$0xff]
        %v1381 = vld [vmem:[#allocation2 + $0x38] sm:$0xff]
        %v1382 = vld [vmem:[#allocation2 + $0x48] sm:$0xff]
        %v1383 = vld [vmem:[#allocation2 + $0x50] sm:$0xff]
        %v1384 = vld [vmem:[#allocation2 + $0x58] sm:$0xff]
        %v1385 = vld [vmem:[#allocation2 + $0x68] sm:$0xff]
        %v1386 = vld [vmem:[#allocation2 + $0x70] sm:$0xff]
        %v1387 = vld [vmem:[#allocation2 + $0x78] sm:$0xff]
        %1400 = vrot.lane.b32.xlu0 %v1376, 112
        %v1401 = vpop.permute.xlu0 %1400
        %1402 = vrot.lane.b32.xlu0 %v1377, 112
        %v1403 = vpop.permute.xlu0 %1402
        %1404 = vrot.lane.b32.xlu0 %v1378, 112
        %v1405 = vpop.permute.xlu0 %1404
        %1406 = vrot.lane.b32.xlu0 %v1379, 112
        %v1407 = vpop.permute.xlu0 %1406
        %1408 = vrot.lane.b32.xlu0 %v1380, 112
        %v1409 = vpop.permute.xlu0 %1408
        %1410 = vrot.lane.b32.xlu0 %v1381, 112
        %v1411 = vpop.permute.xlu0 %1410
        %1412 = vrot.lane.b32.xlu0 %v1382, 112
        %v1413 = vpop.permute.xlu0 %1412
        %1414 = vrot.lane.b32.xlu0 %v1383, 112
        %v1415 = vpop.permute.xlu0 %1414
        %1416 = vrot.lane.b32.xlu0 %v1384, 112
        %v1417 = vpop.permute.xlu0 %1416
        %1418 = vrot.lane.b32.xlu0 %v1385, 112
        %v1419 = vpop.permute.xlu0 %1418
        %1420 = vrot.lane.b32.xlu0 %v1386, 112
        %v1421 = vpop.permute.xlu0 %1420
        %1422 = vrot.lane.b32.xlu0 %v1387, 112
        %v1423 = vpop.permute.xlu0 %1422
        %v1424 = vsel %vm707, %v1401, %v1403
        %v1425 = vsel %vm707, %v1403, %v1405
        %v1426 = vsel %vm707, %v1407, %v1409
        %v1427 = vsel %vm707, %v1409, %v1411
        %v1428 = vsel %vm707, %v1413, %v1415
        %v1429 = vsel %vm707, %v1415, %v1417
        %v1430 = vsel %vm707, %v1419, %v1421
        %v1431 = vsel %vm707, %v1421, %v1423
        %1440 = vst [vmem:[#allocation3 + $0x1c0] sm:$0xff] %v1424
        %1441 = vst [vmem:[#allocation3 + $0x1c8] sm:$0xff] %v1425
        %1442 = vst [vmem:[#allocation3 + $0x1d0] sm:$0xff] %v1426
        %1443 = vst [vmem:[#allocation3 + $0x1d8] sm:$0xff] %v1427
        %1444 = vst [vmem:[#allocation3 + $0x1e0] sm:$0xff] %v1428
        %1445 = vst [vmem:[#allocation3 + $0x1e8] sm:$0xff] %v1429
        %1446 = vst [vmem:[#allocation3 + $0x1f0] sm:$0xff] %v1430
        %1447 = vst [vmem:[#allocation3 + $0x1f8] sm:$0xff] %v1431
        %v1448 = vld [vmem:[#allocation2 + $0x8] sm:$0xff]
        %v1449 = vld [vmem:[#allocation2 + $0x10] sm:$0xff]
        %v1450 = vld [vmem:[#allocation2 + $0x18] sm:$0xff]
        %v1451 = vld [vmem:[#allocation2 + $0x28] sm:$0xff]
        %v1452 = vld [vmem:[#allocation2 + $0x30] sm:$0xff]
        %v1453 = vld [vmem:[#allocation2 + $0x38] sm:$0xff]
        %v1454 = vld [vmem:[#allocation2 + $0x48] sm:$0xff]
        %v1455 = vld [vmem:[#allocation2 + $0x50] sm:$0xff]
        %v1456 = vld [vmem:[#allocation2 + $0x58] sm:$0xff]
        %v1457 = vld [vmem:[#allocation2 + $0x68] sm:$0xff]
        %v1458 = vld [vmem:[#allocation2 + $0x70] sm:$0xff]
        %v1459 = vld [vmem:[#allocation2 + $0x78] sm:$0xff]
        %1472 = vrot.lane.b32.xlu0 %v1448, 111
        %v1473 = vpop.permute.xlu0 %1472
        %1474 = vrot.lane.b32.xlu0 %v1449, 111
        %v1475 = vpop.permute.xlu0 %1474
        %1476 = vrot.lane.b32.xlu0 %v1450, 111
        %v1477 = vpop.permute.xlu0 %1476
        %1478 = vrot.lane.b32.xlu0 %v1451, 111
        %v1479 = vpop.permute.xlu0 %1478
        %1480 = vrot.lane.b32.xlu0 %v1452, 111
        %v1481 = vpop.permute.xlu0 %1480
        %1482 = vrot.lane.b32.xlu0 %v1453, 111
        %v1483 = vpop.permute.xlu0 %1482
        %1484 = vrot.lane.b32.xlu0 %v1454, 111
        %v1485 = vpop.permute.xlu0 %1484
        %1486 = vrot.lane.b32.xlu0 %v1455, 111
        %v1487 = vpop.permute.xlu0 %1486
        %1488 = vrot.lane.b32.xlu0 %v1456, 111
        %v1489 = vpop.permute.xlu0 %1488
        %1490 = vrot.lane.b32.xlu0 %v1457, 111
        %v1491 = vpop.permute.xlu0 %1490
        %1492 = vrot.lane.b32.xlu0 %v1458, 111
        %v1493 = vpop.permute.xlu0 %1492
        %1494 = vrot.lane.b32.xlu0 %v1459, 111
        %v1495 = vpop.permute.xlu0 %1494
        %v1496 = vsel %vm726, %v1473, %v1475
        %v1497 = vsel %vm726, %v1475, %v1477
        %v1498 = vsel %vm726, %v1479, %v1481
        %v1499 = vsel %vm726, %v1481, %v1483
        %v1500 = vsel %vm726, %v1485, %v1487
        %v1501 = vsel %vm726, %v1487, %v1489
        %v1502 = vsel %vm726, %v1491, %v1493
        %v1503 = vsel %vm726, %v1493, %v1495
        %v1512 = vsel %vm608, %v1496, 0.0
        %v1513 = vsel %vm609, %v1497, 0.0
        %v1514 = vsel %vm608, %v1498, 0.0
        %v1515 = vsel %vm609, %v1499, 0.0
        %v1516 = vsel %vm608, %v1500, 0.0
        %v1517 = vsel %vm609, %v1501, 0.0
        %v1518 = vsel %vm608, %v1502, 0.0
        %v1519 = vsel %vm609, %v1503, 0.0
        %1520 = vst [vmem:[#allocation3 + $0x200] sm:$0xff] %v1512
        %1521 = vst [vmem:[#allocation3 + $0x208] sm:$0xff] %v1513
        %1522 = vst [vmem:[#allocation3 + $0x210] sm:$0xff] %v1514
        %1523 = vst [vmem:[#allocation3 + $0x218] sm:$0xff] %v1515
        %1524 = vst [vmem:[#allocation3 + $0x220] sm:$0xff] %v1516
        %1525 = vst [vmem:[#allocation3 + $0x228] sm:$0xff] %v1517
        %1526 = vst [vmem:[#allocation3 + $0x230] sm:$0xff] %v1518
        %1527 = vst [vmem:[#allocation3 + $0x238] sm:$0xff] %v1519
        %v1528 = vld [vmem:[#allocation3] sm:$0xff]
        %v1529 = vld [vmem:[#allocation3 + $0x8] sm:$0xff]
        %v1530 = vld [vmem:[#allocation3 + $0x10] sm:$0xff]
        %v1531 = vld [vmem:[#allocation3 + $0x18] sm:$0xff]
        %v1532 = vld [vmem:[#allocation3 + $0x20] sm:$0xff]
        %v1533 = vld [vmem:[#allocation3 + $0x28] sm:$0xff]
        %v1534 = vld [vmem:[#allocation3 + $0x30] sm:$0xff]
        %v1535 = vld [vmem:[#allocation3 + $0x38] sm:$0xff]
        %v1536 = vld [vmem:[#allocation3 + $0x40] sm:$0xff]
        %v1537 = vld [vmem:[#allocation3 + $0x48] sm:$0xff]
        %v1538 = vld [vmem:[#allocation3 + $0x50] sm:$0xff]
        %v1539 = vld [vmem:[#allocation3 + $0x58] sm:$0xff]
        %v1540 = vld [vmem:[#allocation3 + $0x60] sm:$0xff]
        %v1541 = vld [vmem:[#allocation3 + $0x68] sm:$0xff]
        %v1542 = vld [vmem:[#allocation3 + $0x70] sm:$0xff]
        %v1543 = vld [vmem:[#allocation3 + $0x78] sm:$0xff]
        %v1544 = vld [vmem:[#allocation3 + $0x80] sm:$0xff]
        %v1545 = vld [vmem:[#allocation3 + $0x88] sm:$0xff]
        %v1546 = vld [vmem:[#allocation3 + $0x90] sm:$0xff]
        %v1547 = vld [vmem:[#allocation3 + $0x98] sm:$0xff]
        %v1548 = vld [vmem:[#allocation3 + $0xa0] sm:$0xff]
        %v1549 = vld [vmem:[#allocation3 + $0xa8] sm:$0xff]
        %v1550 = vld [vmem:[#allocation3 + $0xb0] sm:$0xff]
        %v1551 = vld [vmem:[#allocation3 + $0xb8] sm:$0xff]
        %v1552 = vld [vmem:[#allocation3 + $0xc0] sm:$0xff]
        %v1553 = vld [vmem:[#allocation3 + $0xc8] sm:$0xff]
        %v1554 = vld [vmem:[#allocation3 + $0xd0] sm:$0xff]
        %v1555 = vld [vmem:[#allocation3 + $0xd8] sm:$0xff]
        %v1556 = vld [vmem:[#allocation3 + $0xe0] sm:$0xff]
        %v1557 = vld [vmem:[#allocation3 + $0xe8] sm:$0xff]
        %v1558 = vld [vmem:[#allocation3 + $0xf0] sm:$0xff]
        %v1559 = vld [vmem:[#allocation3 + $0xf8] sm:$0xff]
        %v1560 = vld [vmem:[#allocation3 + $0x100] sm:$0xff]
        %v1561 = vld [vmem:[#allocation3 + $0x108] sm:$0xff]
        %v1562 = vld [vmem:[#allocation3 + $0x110] sm:$0xff]
        %v1563 = vld [vmem:[#allocation3 + $0x118] sm:$0xff]
        %v1564 = vld [vmem:[#allocation3 + $0x120] sm:$0xff]
        %v1565 = vld [vmem:[#allocation3 + $0x128] sm:$0xff]
        %v1566 = vld [vmem:[#allocation3 + $0x130] sm:$0xff]
        %v1567 = vld [vmem:[#allocation3 + $0x138] sm:$0xff]
        %v1568 = vld [vmem:[#allocation3 + $0x140] sm:$0xff]
        %v1569 = vld [vmem:[#allocation3 + $0x148] sm:$0xff]
        %v1570 = vld [vmem:[#allocation3 + $0x150] sm:$0xff]
        %v1571 = vld [vmem:[#allocation3 + $0x158] sm:$0xff]
        %v1572 = vld [vmem:[#allocation3 + $0x160] sm:$0xff]
        %v1573 = vld [vmem:[#allocation3 + $0x168] sm:$0xff]
        %v1574 = vld [vmem:[#allocation3 + $0x170] sm:$0xff]
        %v1575 = vld [vmem:[#allocation3 + $0x178] sm:$0xff]
        %v1576 = vld [vmem:[#allocation3 + $0x180] sm:$0xff]
        %v1577 = vld [vmem:[#allocation3 + $0x188] sm:$0xff]
        %v1578 = vld [vmem:[#allocation3 + $0x190] sm:$0xff]
        %v1579 = vld [vmem:[#allocation3 + $0x198] sm:$0xff]
        %v1580 = vld [vmem:[#allocation3 + $0x1a0] sm:$0xff]
        %v1581 = vld [vmem:[#allocation3 + $0x1a8] sm:$0xff]
        %v1582 = vld [vmem:[#allocation3 + $0x1b0] sm:$0xff]
        %v1583 = vld [vmem:[#allocation3 + $0x1b8] sm:$0xff]
        %v1584 = vld [vmem:[#allocation3 + $0x1c0] sm:$0xff]
        %v1585 = vld [vmem:[#allocation3 + $0x1c8] sm:$0xff]
        %v1586 = vld [vmem:[#allocation3 + $0x1d0] sm:$0xff]
        %v1587 = vld [vmem:[#allocation3 + $0x1d8] sm:$0xff]
        %v1588 = vld [vmem:[#allocation3 + $0x1e0] sm:$0xff]
        %v1589 = vld [vmem:[#allocation3 + $0x1e8] sm:$0xff]
        %v1590 = vld [vmem:[#allocation3 + $0x1f0] sm:$0xff]
        %v1591 = vld [vmem:[#allocation3 + $0x1f8] sm:$0xff]
        %v1592 = vld [vmem:[#allocation3 + $0x200] sm:$0xff]
        %v1593 = vld [vmem:[#allocation3 + $0x208] sm:$0xff]
        %v1594 = vld [vmem:[#allocation3 + $0x210] sm:$0xff]
        %v1595 = vld [vmem:[#allocation3 + $0x218] sm:$0xff]
        %v1596 = vld [vmem:[#allocation3 + $0x220] sm:$0xff]
        %v1597 = vld [vmem:[#allocation3 + $0x228] sm:$0xff]
        %v1598 = vld [vmem:[#allocation3 + $0x230] sm:$0xff]
        %v1599 = vld [vmem:[#allocation3 + $0x238] sm:$0xff]
        %v1600 = vpack.c.bf16 %v1530, %v1528
        %v1601 = vpack.c.bf16 %v1531, %v1529
        %v1602 = vpack.c.bf16 %v1534, %v1532
        %v1603 = vpack.c.bf16 %v1535, %v1533
        %v1604 = vpack.c.bf16 %v1538, %v1536
        %v1605 = vpack.c.bf16 %v1539, %v1537
        %v1606 = vpack.c.bf16 %v1542, %v1540
        %v1607 = vpack.c.bf16 %v1543, %v1541
        %v1608 = vpack.c.bf16 %v1546, %v1544
        %v1609 = vpack.c.bf16 %v1547, %v1545
        %v1610 = vpack.c.bf16 %v1550, %v1548
        %v1611 = vpack.c.bf16 %v1551, %v1549
        %v1612 = vpack.c.bf16 %v1554, %v1552
        %v1613 = vpack.c.bf16 %v1555, %v1553
        %v1614 = vpack.c.bf16 %v1558, %v1556
        %v1615 = vpack.c.bf16 %v1559, %v1557
        %v1616 = vpack.c.bf16 %v1562, %v1560
        %v1617 = vpack.c.bf16 %v1563, %v1561
        %v1618 = vpack.c.bf16 %v1566, %v1564
        %v1619 = vpack.c.bf16 %v1567, %v1565
        %v1620 = vpack.c.bf16 %v1570, %v1568
        %v1621 = vpack.c.bf16 %v1571, %v1569
        %v1622 = vpack.c.bf16 %v1574, %v1572
        %v1623 = vpack.c.bf16 %v1575, %v1573
        %v1624 = vpack.c.bf16 %v1578, %v1576
        %v1625 = vpack.c.bf16 %v1579, %v1577
        %v1626 = vpack.c.bf16 %v1582, %v1580
        %v1627 = vpack.c.bf16 %v1583, %v1581
        %v1628 = vpack.c.bf16 %v1586, %v1584
        %v1629 = vpack.c.bf16 %v1587, %v1585
        %v1630 = vpack.c.bf16 %v1590, %v1588
        %v1631 = vpack.c.bf16 %v1591, %v1589
        %v1632 = vpack.c.bf16 %v1594, %v1592
        %v1633 = vpack.c.bf16 %v1595, %v1593
        %v1634 = vpack.c.bf16 %v1598, %v1596
        %v1635 = vpack.c.bf16 %v1599, %v1597
        %1637 = vset.pattern.permute.xlu0 0
        %1638 = vperm.xlu0 %1637, %v884
        %v1639 = vpop.permute.xlu0 %1638
        %1642 = vset.pattern.permute.xlu0 0
        %1643 = vperm.xlu0 %1642, %v885
        %v1644 = vpop.permute.xlu0 %1643
        %1647 = vset.pattern.permute.xlu0 0
        %1648 = vperm.xlu0 %1647, %v886
        %v1649 = vpop.permute.xlu0 %1648
        %1652 = vset.pattern.permute.xlu0 0
        %1653 = vperm.xlu0 %1652, %v887
        %v1654 = vpop.permute.xlu0 %1653
        %v1664 = vunpack.c.l.b16 %v876
        %v1665 = vunpack.c.h.b16 %v876
        %v1666 = vunpack.c.l.b16 %v877
        %v1667 = vunpack.c.l.b16 %v878
        %v1668 = vunpack.c.h.b16 %v878
        %v1669 = vunpack.c.l.b16 %v879
        %v1670 = vunpack.c.l.b16 %v880
        %v1671 = vunpack.c.h.b16 %v880
        %v1672 = vunpack.c.l.b16 %v881
        %v1673 = vunpack.c.l.b16 %v882
        %v1674 = vunpack.c.h.b16 %v882
        %v1675 = vunpack.c.l.b16 %v883
        %v1676 = vpack.c.b16 %v1667, %v1664
        %v1677 = vpack.c.b16 %v1668, %v1665
        %v1678 = vpack.c.b16 %v1669, %v1666
        %v1679 = vpack.c.b16 %v1673, %v1670
        %v1680 = vpack.c.b16 %v1674, %v1671
        %v1681 = vpack.c.b16 %v1675, %v1672
        %vm1686 = vcmask 261120
        %v1688 = vsel %vm1686, %v1678, 0
        %v1691 = vsel %vm1686, %v1681, 0
        %1693 = vmatprep.subr.bf16.mxu0 %v1601
        %1694 = vmatpush1.bf16.msra.mxu0 %v1600
        %1695 = vmatprep.subr.bf16.mxu0 %v1603
        %1696 = vmatpush1.bf16.msra.mxu0 %v1602
        %1697 = vmatprep.subr.bf16.mxu0 %v1605
        %1698 = vmatpush1.bf16.msra.mxu0 %v1604
        %1699 = vmatprep.subr.bf16.mxu0 %v1607
        %1700 = vmatpush1.bf16.msra.mxu0 %v1606
        %1701 = vmatprep.subr.bf16.mxu0 %v1609
        %1702 = vmatpush1.bf16.msra.mxu0 %v1608
        %1703 = vmatprep.subr.bf16.mxu0 %v1611
        %1704 = vmatpush1.bf16.msra.mxu0 %v1610
        %1705 = vmatprep.subr.bf16.mxu0 %v1613
        %1706 = vmatpush1.bf16.msra.mxu0 %v1612
        %1707 = vmatprep.subr.bf16.mxu0 %v1615
        %1708 = vmatpush1.bf16.msra.mxu0 %v1614
        %1709 = vmatprep.subr.bf16.mxu0 %v1617
        %1710 = vmatpush1.bf16.msra.mxu0 %v1616
        %1711 = vmatprep.subr.bf16.mxu0 %v1619
        %1712 = vmatpush1.bf16.msra.mxu0 %v1618
        %1713 = vmatprep.subr.bf16.mxu0 %v1621
        %1714 = vmatpush1.bf16.msra.mxu0 %v1620
        %1715 = vmatprep.subr.bf16.mxu0 %v1623
        %1716 = vmatpush1.bf16.msra.mxu0 %v1622
        %1717 = vmatprep.subr.bf16.mxu0 %v1625
        %1718 = vmatpush1.bf16.msra.mxu0 %v1624
        %1719 = vmatprep.subr.bf16.mxu0 %v1627
        %1720 = vmatpush1.bf16.msra.mxu0 %v1626
        %1721 = vmatprep.subr.bf16.mxu0 %v1629
        %1722 = vmatpush1.bf16.msra.mxu0 %v1628
        %1723 = vmatprep.subr.bf16.mxu0 %v1631
        %1724 = vmatpush1.bf16.msra.mxu0 %v1630
        %1725 = vmatprep.mubr.bf16.mxu0 %v1677
        %1726 = vmatmul.mubr.bf16.gmra.mrb[0].mxu0 %v1676
        %v1727 = vpop.f32.mrb[0].mxu0
        %v1728 = vadd.f32 %v1639, %v1727
        %v1729 = vpop.f32.mrb[0].mxu0
        %v1730 = vadd.f32 %v1639, %v1729
        %v1731 = vpop.f32.mrb[0].mxu0
        %v1732 = vadd.f32 %v1644, %v1731
        %v1733 = vpop.f32.mrb[0].mxu0
        %v1734 = vadd.f32 %v1644, %v1733
        %1735 = vmatprep.mubr.bf16.mxu0 %v1680
        %1736 = vmatmul.mubr.bf16.gmra.mrb[0].mxu0 %v1679
        %v1737 = vpop.f32.mrb[0].mxu0
        %v1738 = vadd.f32 %v1649, %v1737
        %v1739 = vpop.f32.mrb[0].mxu0
        %v1740 = vadd.f32 %v1649, %v1739
        %v1741 = vpop.f32.mrb[0].mxu0
        %v1742 = vadd.f32 %v1654, %v1741
        %v1743 = vpop.f32.mrb[0].mxu0
        %v1744 = vadd.f32 %v1654, %v1743
        %1745 = vdwg.mxu0
        %1746 = vmatprep.subr.bf16.mxu0 %v1633
        %1747 = vmatpush1.bf16.msra.mxu0 %v1632
        %1748 = vmatprep.subr.bf16.mxu0 %v1635
        %1749 = vmatpush1.bf16.msra.mxu0 %v1634
        %1750 = vmatprep.subr.bf16.mxu0 0
        %1751 = vmatpush1.bf16.msra.mxu0 0
        %1752 = vmatprep.subr.bf16.mxu0 0
        %1753 = vmatpush1.bf16.msra.mxu0 0
        %1754 = vmatprep.subr.bf16.mxu0 0
        %1755 = vmatpush1.bf16.msra.mxu0 0
        %1756 = vmatprep.subr.bf16.mxu0 0
        %1757 = vmatpush1.bf16.msra.mxu0 0
        %1758 = vmatprep.subr.bf16.mxu0 0
        %1759 = vmatpush1.bf16.msra.mxu0 0
        %1760 = vmatprep.subr.bf16.mxu0 0
        %1761 = vmatpush1.bf16.msra.mxu0 0
        %1762 = vmatprep.subr.bf16.mxu0 0
        %1763 = vmatpush1.bf16.msra.mxu0 0
        %1764 = vmatprep.subr.bf16.mxu0 0
        %1765 = vmatpush1.bf16.msra.mxu0 0
        %1766 = vmatprep.subr.bf16.mxu0 0
        %1767 = vmatpush1.bf16.msra.mxu0 0
        %1768 = vmatprep.subr.bf16.mxu0 0
        %1769 = vmatpush1.bf16.msra.mxu0 0
        %1770 = vmatprep.subr.bf16.mxu0 0
        %1771 = vmatpush1.bf16.msra.mxu0 0
        %1772 = vmatprep.subr.bf16.mxu0 0
        %1773 = vmatpush1.bf16.msra.mxu0 0
        %1774 = vmatprep.subr.bf16.mxu0 0
        %1775 = vmatpush1.bf16.msra.mxu0 0
        %1776 = vmatprep.subr.bf16.mxu0 0
        %1777 = vmatpush1.bf16.msra.mxu0 0
        %1778 = vmatprep.mubr.bf16.mxu0 0
        %1779 = vmatmul.mubr.bf16.gmra.mrb[0].mxu0 %v1688
        %v1780 = vpop.f32.mrb[0].mxu0
        %v1781 = vadd.f32 %v1728, %v1780
        %v1782 = vpop.f32.mrb[0].mxu0
        %v1783 = vadd.f32 %v1730, %v1782
        %v1784 = vpop.f32.mrb[0].mxu0
        %v1785 = vadd.f32 %v1732, %v1784
        %v1786 = vpop.f32.mrb[0].mxu0
        %v1787 = vadd.f32 %v1734, %v1786
        %1788 = vmatprep.mubr.bf16.mxu0 0
        %1789 = vmatmul.mubr.bf16.gmra.mrb[0].mxu0 %v1691
        %v1790 = vpop.f32.mrb[0].mxu0
        %v1791 = vadd.f32 %v1738, %v1790
        %v1792 = vpop.f32.mrb[0].mxu0
        %v1793 = vadd.f32 %v1740, %v1792
        %v1794 = vpop.f32.mrb[0].mxu0
        %v1795 = vadd.f32 %v1742, %v1794
        %v1796 = vpop.f32.mrb[0].mxu0
        %v1797 = vadd.f32 %v1744, %v1796
        %1798 = vdwg.mxu0
        %v1799 = vmax.f32 %v1781, 0.0
        %v1800 = vmax.f32 %v1783, 0.0
        %v1801 = vmax.f32 %v1785, 0.0
        %v1802 = vmax.f32 %v1787, 0.0
        %v1803 = vmax.f32 %v1791, 0.0
        %v1804 = vmax.f32 %v1793, 0.0
        %v1805 = vmax.f32 %v1795, 0.0
        %v1806 = vmax.f32 %v1797, 0.0
        %v1807 = vld [vmem:[%s440] sm:$0xff]
        %v1808 = vld [vmem:[%s440 + $0x8] sm:$0xff]
        %v1809 = vld [vmem:[%s440 + $0x10] sm:$0xff]
        %v1810 = vld [vmem:[%s440 + $0x18] sm:$0xff]
        %1812 = vset.pattern.permute.xlu0 0
        %1813 = vperm.xlu0 %1812, %v1807
        %v1814 = vpop.permute.xlu0 %1813
        %1817 = vset.pattern.permute.xlu0 0
        %1818 = vperm.xlu0 %1817, %v1808
        %v1819 = vpop.permute.xlu0 %1818
        %1822 = vset.pattern.permute.xlu0 0
        %1823 = vperm.xlu0 %1822, %v1809
        %v1824 = vpop.permute.xlu0 %1823
        %1827 = vset.pattern.permute.xlu0 0
        %1828 = vperm.xlu0 %1827, %v1810
        %v1829 = vpop.permute.xlu0 %1828
        %v1831 = vmul.f32 %v1814, %v1799
        %v1832 = vmul.f32 %v1814, %v1800
        %v1833 = vmul.f32 %v1819, %v1801
        %v1834 = vmul.f32 %v1819, %v1802
        %v1835 = vmul.f32 %v1824, %v1803
        %v1836 = vmul.f32 %v1824, %v1804
        %v1837 = vmul.f32 %v1829, %v1805
        %v1838 = vmul.f32 %v1829, %v1806
        %v1839 = vld [vmem:[%s447] sm:$0xff]
        %v1840 = vld [vmem:[%s447 + $0x8] sm:$0xff]
        %v1841 = vld [vmem:[%s447 + $0x10] sm:$0xff]
        %v1842 = vld [vmem:[%s447 + $0x18] sm:$0xff]
        %1844 = vset.pattern.permute.xlu0 0
        %1845 = vperm.xlu0 %1844, %v1839
        %v1846 = vpop.permute.xlu0 %1845
        %1849 = vset.pattern.permute.xlu0 0
        %1850 = vperm.xlu0 %1849, %v1840
        %v1851 = vpop.permute.xlu0 %1850
        %1854 = vset.pattern.permute.xlu0 0
        %1855 = vperm.xlu0 %1854, %v1841
        %v1856 = vpop.permute.xlu0 %1855
        %1859 = vset.pattern.permute.xlu0 0
        %1860 = vperm.xlu0 %1859, %v1842
        %v1861 = vpop.permute.xlu0 %1860
        %v1863 = vadd.f32 %v1831, %v1846
        %v1864 = vadd.f32 %v1832, %v1846
        %v1865 = vadd.f32 %v1833, %v1851
        %v1866 = vadd.f32 %v1834, %v1851
        %v1867 = vadd.f32 %v1835, %v1856
        %v1868 = vadd.f32 %v1836, %v1856
        %v1869 = vadd.f32 %v1837, %v1861
        %v1870 = vadd.f32 %v1838, %v1861
        %1871 = vst [vmem:[#allocation2 + $0x8] sm:$0xff] %v1863
        %1872 = vst [vmem:[#allocation2 + $0x10] sm:$0xff] %v1864
        %1873 = vst [vmem:[#allocation2 + $0x28] sm:$0xff] %v1865
        %1874 = vst [vmem:[#allocation2 + $0x30] sm:$0xff] %v1866
        %1875 = vst [vmem:[#allocation2 + $0x48] sm:$0xff] %v1867
        %1876 = vst [vmem:[#allocation2 + $0x50] sm:$0xff] %v1868
        %1877 = vst [vmem:[#allocation2 + $0x68] sm:$0xff] %v1869
        %1878 = vst [vmem:[#allocation2 + $0x70] sm:$0xff] %v1870
        %s1879 = scalar_lea.vmem %s3, 48
        %v1880 = vld [vmem:[%s1879] sm:$0xff]
        %v1881 = vld [vmem:[%s1879 + $0x8] sm:$0xf]
        %v1882 = vld [vmem:[%s1879 + $0xc] sm:$0xff]
        %v1883 = vld [vmem:[%s1879 + $0x14] sm:$0xf]
        %v1884 = vld [vmem:[%s1879 + $0x18] sm:$0xff]
        %v1885 = vld [vmem:[%s1879 + $0x20] sm:$0xf]
        %v1886 = vld [vmem:[%s1879 + $0x24] sm:$0xff]
        %v1887 = vld [vmem:[%s1879 + $0x2c] sm:$0xf]
        %s1888 = scalar_lea.vmem %s4, 32
        %v1889 = vld [vmem:[%s1888] sm:$0xff]
        %v1890 = vld [vmem:[%s1888 + $0x8] sm:$0xff]
        %v1891 = vld [vmem:[%s1888 + $0x10] sm:$0xff]
        %v1892 = vld [vmem:[%s1888 + $0x18] sm:$0xff]
        %v1893 = vld [vmem:[#allocation2] sm:$0xff]
        %v1894 = vld [vmem:[#allocation2 + $0x8] sm:$0xff]
        %v1895 = vld [vmem:[#allocation2 + $0x10] sm:$0xff]
        %v1896 = vld [vmem:[#allocation2 + $0x20] sm:$0xff]
        %v1897 = vld [vmem:[#allocation2 + $0x28] sm:$0xff]
        %v1898 = vld [vmem:[#allocation2 + $0x30] sm:$0xff]
        %v1899 = vld [vmem:[#allocation2 + $0x40] sm:$0xff]
        %v1900 = vld [vmem:[#allocation2 + $0x48] sm:$0xff]
        %v1901 = vld [vmem:[#allocation2 + $0x50] sm:$0xff]
        %v1902 = vld [vmem:[#allocation2 + $0x60] sm:$0xff]
        %v1903 = vld [vmem:[#allocation2 + $0x68] sm:$0xff]
        %v1904 = vld [vmem:[#allocation2 + $0x70] sm:$0xff]
        %1917 = vrot.lane.b32.xlu0 %v1893, 17
        %v1918 = vpop.permute.xlu0 %1917
        %1919 = vrot.lane.b32.xlu0 %v1894, 17
        %v1920 = vpop.permute.xlu0 %1919
        %1921 = vrot.lane.b32.xlu0 %v1895, 17
        %v1922 = vpop.permute.xlu0 %1921
        %1923 = vrot.lane.b32.xlu0 %v1896, 17
        %v1924 = vpop.permute.xlu0 %1923
        %1925 = vrot.lane.b32.xlu0 %v1897, 17
        %v1926 = vpop.permute.xlu0 %1925
        %1927 = vrot.lane.b32.xlu0 %v1898, 17
        %v1928 = vpop.permute.xlu0 %1927
        %1929 = vrot.lane.b32.xlu0 %v1899, 17
        %v1930 = vpop.permute.xlu0 %1929
        %1931 = vrot.lane.b32.xlu0 %v1900, 17
        %v1932 = vpop.permute.xlu0 %1931
        %1933 = vrot.lane.b32.xlu0 %v1901, 17
        %v1934 = vpop.permute.xlu0 %1933
        %1935 = vrot.lane.b32.xlu0 %v1902, 17
        %v1936 = vpop.permute.xlu0 %1935
        %1937 = vrot.lane.b32.xlu0 %v1903, 17
        %v1938 = vpop.permute.xlu0 %1937
        %1939 = vrot.lane.b32.xlu0 %v1904, 17
        %v1940 = vpop.permute.xlu0 %1939
        %v1941 = vsel %vm575, %v1918, %v1920
        %v1942 = vsel %vm575, %v1920, %v1922
        %v1943 = vsel %vm575, %v1924, %v1926
        %v1944 = vsel %vm575, %v1926, %v1928
        %v1945 = vsel %vm575, %v1930, %v1932
        %v1946 = vsel %vm575, %v1932, %v1934
        %v1947 = vsel %vm575, %v1936, %v1938
        %v1948 = vsel %vm575, %v1938, %v1940
        %v1957 = vsel %vm564, %v1941, 0.0
        %v1958 = vsel %vm565, %v1942, 0.0
        %v1959 = vsel %vm564, %v1943, 0.0
        %v1960 = vsel %vm565, %v1944, 0.0
        %v1961 = vsel %vm564, %v1945, 0.0
        %v1962 = vsel %vm565, %v1946, 0.0
        %v1963 = vsel %vm564, %v1947, 0.0
        %v1964 = vsel %vm565, %v1948, 0.0
        %1965 = vst [vmem:[#allocation3] sm:$0xff] %v1957
        %1966 = vst [vmem:[#allocation3 + $0x8] sm:$0xff] %v1958
        %1967 = vst [vmem:[#allocation3 + $0x10] sm:$0xff] %v1959
        %1968 = vst [vmem:[#allocation3 + $0x18] sm:$0xff] %v1960
        %1969 = vst [vmem:[#allocation3 + $0x20] sm:$0xff] %v1961
        %1970 = vst [vmem:[#allocation3 + $0x28] sm:$0xff] %v1962
        %1971 = vst [vmem:[#allocation3 + $0x30] sm:$0xff] %v1963
        %1972 = vst [vmem:[#allocation3 + $0x38] sm:$0xff] %v1964
        %v1973 = vld [vmem:[#allocation2] sm:$0xff]
        %v1974 = vld [vmem:[#allocation2 + $0x8] sm:$0xff]
        %v1975 = vld [vmem:[#allocation2 + $0x10] sm:$0xff]
        %v1976 = vld [vmem:[#allocation2 + $0x20] sm:$0xff]
        %v1977 = vld [vmem:[#allocation2 + $0x28] sm:$0xff]
        %v1978 = vld [vmem:[#allocation2 + $0x30] sm:$0xff]
        %v1979 = vld [vmem:[#allocation2 + $0x40] sm:$0xff]
        %v1980 = vld [vmem:[#allocation2 + $0x48] sm:$0xff]
        %v1981 = vld [vmem:[#allocation2 + $0x50] sm:$0xff]
        %v1982 = vld [vmem:[#allocation2 + $0x60] sm:$0xff]
        %v1983 = vld [vmem:[#allocation2 + $0x68] sm:$0xff]
        %v1984 = vld [vmem:[#allocation2 + $0x70] sm:$0xff]
        %1997 = vrot.lane.b32.xlu0 %v1973, 16
        %v1998 = vpop.permute.xlu0 %1997
        %1999 = vrot.lane.b32.xlu0 %v1974, 16
        %v2000 = vpop.permute.xlu0 %1999
        %2001 = vrot.lane.b32.xlu0 %v1975, 16
        %v2002 = vpop.permute.xlu0 %2001
        %2003 = vrot.lane.b32.xlu0 %v1976, 16
        %v2004 = vpop.permute.xlu0 %2003
        %2005 = vrot.lane.b32.xlu0 %v1977, 16
        %v2006 = vpop.permute.xlu0 %2005
        %2007 = vrot.lane.b32.xlu0 %v1978, 16
        %v2008 = vpop.permute.xlu0 %2007
        %2009 = vrot.lane.b32.xlu0 %v1979, 16
        %v2010 = vpop.permute.xlu0 %2009
        %2011 = vrot.lane.b32.xlu0 %v1980, 16
        %v2012 = vpop.permute.xlu0 %2011
        %2013 = vrot.lane.b32.xlu0 %v1981, 16
        %v2014 = vpop.permute.xlu0 %2013
        %2015 = vrot.lane.b32.xlu0 %v1982, 16
        %v2016 = vpop.permute.xlu0 %2015
        %2017 = vrot.lane.b32.xlu0 %v1983, 16
        %v2018 = vpop.permute.xlu0 %2017
        %2019 = vrot.lane.b32.xlu0 %v1984, 16
        %v2020 = vpop.permute.xlu0 %2019
        %v2021 = vsel %vm596, %v1998, %v2000
        %v2022 = vsel %vm596, %v2000, %v2002
        %v2023 = vsel %vm596, %v2004, %v2006
        %v2024 = vsel %vm596, %v2006, %v2008
        %v2025 = vsel %vm596, %v2010, %v2012
        %v2026 = vsel %vm596, %v2012, %v2014
        %v2027 = vsel %vm596, %v2016, %v2018
        %v2028 = vsel %vm596, %v2018, %v2020
        %2037 = vst [vmem:[#allocation3 + $0x40] sm:$0xff] %v2021
        %2038 = vst [vmem:[#allocation3 + $0x48] sm:$0xff] %v2022
        %2039 = vst [vmem:[#allocation3 + $0x50] sm:$0xff] %v2023
        %2040 = vst [vmem:[#allocation3 + $0x58] sm:$0xff] %v2024
        %2041 = vst [vmem:[#allocation3 + $0x60] sm:$0xff] %v2025
        %2042 = vst [vmem:[#allocation3 + $0x68] sm:$0xff] %v2026
        %2043 = vst [vmem:[#allocation3 + $0x70] sm:$0xff] %v2027
        %2044 = vst [vmem:[#allocation3 + $0x78] sm:$0xff] %v2028
        %v2045 = vld [vmem:[#allocation2] sm:$0xff]
        %v2046 = vld [vmem:[#allocation2 + $0x8] sm:$0xff]
        %v2047 = vld [vmem:[#allocation2 + $0x10] sm:$0xff]
        %v2048 = vld [vmem:[#allocation2 + $0x20] sm:$0xff]
        %v2049 = vld [vmem:[#allocation2 + $0x28] sm:$0xff]
        %v2050 = vld [vmem:[#allocation2 + $0x30] sm:$0xff]
        %v2051 = vld [vmem:[#allocation2 + $0x40] sm:$0xff]
        %v2052 = vld [vmem:[#allocation2 + $0x48] sm:$0xff]
        %v2053 = vld [vmem:[#allocation2 + $0x50] sm:$0xff]
        %v2054 = vld [vmem:[#allocation2 + $0x60] sm:$0xff]
        %v2055 = vld [vmem:[#allocation2 + $0x68] sm:$0xff]
        %v2056 = vld [vmem:[#allocation2 + $0x70] sm:$0xff]
        %2069 = vrot.lane.b32.xlu0 %v2045, 15
        %v2070 = vpop.permute.xlu0 %2069
        %2071 = vrot.lane.b32.xlu0 %v2046, 15
        %v2072 = vpop.permute.xlu0 %2071
        %2073 = vrot.lane.b32.xlu0 %v2047, 15
        %v2074 = vpop.permute.xlu0 %2073
        %2075 = vrot.lane.b32.xlu0 %v2048, 15
        %v2076 = vpop.permute.xlu0 %2075
        %2077 = vrot.lane.b32.xlu0 %v2049, 15
        %v2078 = vpop.permute.xlu0 %2077
        %2079 = vrot.lane.b32.xlu0 %v2050, 15
        %v2080 = vpop.permute.xlu0 %2079
        %2081 = vrot.lane.b32.xlu0 %v2051, 15
        %v2082 = vpop.permute.xlu0 %2081
        %2083 = vrot.lane.b32.xlu0 %v2052, 15
        %v2084 = vpop.permute.xlu0 %2083
        %2085 = vrot.lane.b32.xlu0 %v2053, 15
        %v2086 = vpop.permute.xlu0 %2085
        %2087 = vrot.lane.b32.xlu0 %v2054, 15
        %v2088 = vpop.permute.xlu0 %2087
        %2089 = vrot.lane.b32.xlu0 %v2055, 15
        %v2090 = vpop.permute.xlu0 %2089
        %2091 = vrot.lane.b32.xlu0 %v2056, 15
        %v2092 = vpop.permute.xlu0 %2091
        %v2093 = vsel %vm619, %v2070, %v2072
        %v2094 = vsel %vm619, %v2072, %v2074
        %v2095 = vsel %vm619, %v2076, %v2078
        %v2096 = vsel %vm619, %v2078, %v2080
        %v2097 = vsel %vm619, %v2082, %v2084
        %v2098 = vsel %vm619, %v2084, %v2086
        %v2099 = vsel %vm619, %v2088, %v2090
        %v2100 = vsel %vm619, %v2090, %v2092
        %v2109 = vsel %vm608, %v2093, 0.0
        %v2110 = vsel %vm609, %v2094, 0.0
        %v2111 = vsel %vm608, %v2095, 0.0
        %v2112 = vsel %vm609, %v2096, 0.0
        %v2113 = vsel %vm608, %v2097, 0.0
        %v2114 = vsel %vm609, %v2098, 0.0
        %v2115 = vsel %vm608, %v2099, 0.0
        %v2116 = vsel %vm609, %v2100, 0.0
        %2117 = vst [vmem:[#allocation3 + $0x80] sm:$0xff] %v2109
        %2118 = vst [vmem:[#allocation3 + $0x88] sm:$0xff] %v2110
        %2119 = vst [vmem:[#allocation3 + $0x90] sm:$0xff] %v2111
        %2120 = vst [vmem:[#allocation3 + $0x98] sm:$0xff] %v2112
        %2121 = vst [vmem:[#allocation3 + $0xa0] sm:$0xff] %v2113
        %2122 = vst [vmem:[#allocation3 + $0xa8] sm:$0xff] %v2114
        %2123 = vst [vmem:[#allocation3 + $0xb0] sm:$0xff] %v2115
        %2124 = vst [vmem:[#allocation3 + $0xb8] sm:$0xff] %v2116
        %v2125 = vld [vmem:[#allocation2] sm:$0xff]
        %v2126 = vld [vmem:[#allocation2 + $0x8] sm:$0xff]
        %v2127 = vld [vmem:[#allocation2 + $0x10] sm:$0xff]
        %v2128 = vld [vmem:[#allocation2 + $0x20] sm:$0xff]
        %v2129 = vld [vmem:[#allocation2 + $0x28] sm:$0xff]
        %v2130 = vld [vmem:[#allocation2 + $0x30] sm:$0xff]
        %v2131 = vld [vmem:[#allocation2 + $0x40] sm:$0xff]
        %v2132 = vld [vmem:[#allocation2 + $0x48] sm:$0xff]
        %v2133 = vld [vmem:[#allocation2 + $0x50] sm:$0xff]
        %v2134 = vld [vmem:[#allocation2 + $0x60] sm:$0xff]
        %v2135 = vld [vmem:[#allocation2 + $0x68] sm:$0xff]
        %v2136 = vld [vmem:[#allocation2 + $0x70] sm:$0xff]
        %2149 = vrot.lane.b32.xlu0 %v2125, 1
        %v2150 = vpop.permute.xlu0 %2149
        %2151 = vrot.lane.b32.xlu0 %v2126, 1
        %v2152 = vpop.permute.xlu0 %2151
        %2153 = vrot.lane.b32.xlu0 %v2127, 1
        %v2154 = vpop.permute.xlu0 %2153
        %2155 = vrot.lane.b32.xlu0 %v2128, 1
        %v2156 = vpop.permute.xlu0 %2155
        %2157 = vrot.lane.b32.xlu0 %v2129, 1
        %v2158 = vpop.permute.xlu0 %2157
        %2159 = vrot.lane.b32.xlu0 %v2130, 1
        %v2160 = vpop.permute.xlu0 %2159
        %2161 = vrot.lane.b32.xlu0 %v2131, 1
        %v2162 = vpop.permute.xlu0 %2161
        %2163 = vrot.lane.b32.xlu0 %v2132, 1
        %v2164 = vpop.permute.xlu0 %2163
        %2165 = vrot.lane.b32.xlu0 %v2133, 1
        %v2166 = vpop.permute.xlu0 %2165
        %2167 = vrot.lane.b32.xlu0 %v2134, 1
        %v2168 = vpop.permute.xlu0 %2167
        %2169 = vrot.lane.b32.xlu0 %v2135, 1
        %v2170 = vpop.permute.xlu0 %2169
        %2171 = vrot.lane.b32.xlu0 %v2136, 1
        %v2172 = vpop.permute.xlu0 %2171
        %v2173 = vsel %vm640, %v2150, %v2152
        %v2174 = vsel %vm640, %v2152, %v2154
        %v2175 = vsel %vm640, %v2156, %v2158
        %v2176 = vsel %vm640, %v2158, %v2160
        %v2177 = vsel %vm640, %v2162, %v2164
        %v2178 = vsel %vm640, %v2164, %v2166
        %v2179 = vsel %vm640, %v2168, %v2170
        %v2180 = vsel %vm640, %v2170, %v2172
        %v2189 = vsel %vm564, %v2173, 0.0
        %v2190 = vsel %vm565, %v2174, 0.0
        %v2191 = vsel %vm564, %v2175, 0.0
        %v2192 = vsel %vm565, %v2176, 0.0
        %v2193 = vsel %vm564, %v2177, 0.0
        %v2194 = vsel %vm565, %v2178, 0.0
        %v2195 = vsel %vm564, %v2179, 0.0
        %v2196 = vsel %vm565, %v2180, 0.0
        %2197 = vst [vmem:[#allocation3 + $0xc0] sm:$0xff] %v2189
        %2198 = vst [vmem:[#allocation3 + $0xc8] sm:$0xff] %v2190
        %2199 = vst [vmem:[#allocation3 + $0xd0] sm:$0xff] %v2191
        %2200 = vst [vmem:[#allocation3 + $0xd8] sm:$0xff] %v2192
        %2201 = vst [vmem:[#allocation3 + $0xe0] sm:$0xff] %v2193
        %2202 = vst [vmem:[#allocation3 + $0xe8] sm:$0xff] %v2194
        %2203 = vst [vmem:[#allocation3 + $0xf0] sm:$0xff] %v2195
        %2204 = vst [vmem:[#allocation3 + $0xf8] sm:$0xff] %v2196
        %v2205 = vld [vmem:[#allocation2 + $0x8] sm:$0xff]
        %v2206 = vld [vmem:[#allocation2 + $0x10] sm:$0xff]
        %v2207 = vld [vmem:[#allocation2 + $0x28] sm:$0xff]
        %v2208 = vld [vmem:[#allocation2 + $0x30] sm:$0xff]
        %v2209 = vld [vmem:[#allocation2 + $0x48] sm:$0xff]
        %v2210 = vld [vmem:[#allocation2 + $0x50] sm:$0xff]
        %v2211 = vld [vmem:[#allocation2 + $0x68] sm:$0xff]
        %v2212 = vld [vmem:[#allocation2 + $0x70] sm:$0xff]
        %2213 = vst [vmem:[#allocation3 + $0x100] sm:$0xff] %v2205
        %2214 = vst [vmem:[#allocation3 + $0x108] sm:$0xff] %v2206
        %2215 = vst [vmem:[#allocation3 + $0x110] sm:$0xff] %v2207
        %2216 = vst [vmem:[#allocation3 + $0x118] sm:$0xff] %v2208
        %2217 = vst [vmem:[#allocation3 + $0x120] sm:$0xff] %v2209
        %2218 = vst [vmem:[#allocation3 + $0x128] sm:$0xff] %v2210
        %2219 = vst [vmem:[#allocation3 + $0x130] sm:$0xff] %v2211
        %2220 = vst [vmem:[#allocation3 + $0x138] sm:$0xff] %v2212
        %v2221 = vld [vmem:[#allocation2 + $0x8] sm:$0xff]
        %v2222 = vld [vmem:[#allocation2 + $0x10] sm:$0xff]
        %v2223 = vld [vmem:[#allocation2 + $0x18] sm:$0xff]
        %v2224 = vld [vmem:[#allocation2 + $0x28] sm:$0xff]
        %v2225 = vld [vmem:[#allocation2 + $0x30] sm:$0xff]
        %v2226 = vld [vmem:[#allocation2 + $0x38] sm:$0xff]
        %v2227 = vld [vmem:[#allocation2 + $0x48] sm:$0xff]
        %v2228 = vld [vmem:[#allocation2 + $0x50] sm:$0xff]
        %v2229 = vld [vmem:[#allocation2 + $0x58] sm:$0xff]
        %v2230 = vld [vmem:[#allocation2 + $0x68] sm:$0xff]
        %v2231 = vld [vmem:[#allocation2 + $0x70] sm:$0xff]
        %v2232 = vld [vmem:[#allocation2 + $0x78] sm:$0xff]
        %2245 = vrot.lane.b32.xlu0 %v2221, 127
        %v2246 = vpop.permute.xlu0 %2245
        %2247 = vrot.lane.b32.xlu0 %v2222, 127
        %v2248 = vpop.permute.xlu0 %2247
        %2249 = vrot.lane.b32.xlu0 %v2223, 127
        %v2250 = vpop.permute.xlu0 %2249
        %2251 = vrot.lane.b32.xlu0 %v2224, 127
        %v2252 = vpop.permute.xlu0 %2251
        %2253 = vrot.lane.b32.xlu0 %v2225, 127
        %v2254 = vpop.permute.xlu0 %2253
        %2255 = vrot.lane.b32.xlu0 %v2226, 127
        %v2256 = vpop.permute.xlu0 %2255
        %2257 = vrot.lane.b32.xlu0 %v2227, 127
        %v2258 = vpop.permute.xlu0 %2257
        %2259 = vrot.lane.b32.xlu0 %v2228, 127
        %v2260 = vpop.permute.xlu0 %2259
        %2261 = vrot.lane.b32.xlu0 %v2229, 127
        %v2262 = vpop.permute.xlu0 %2261
        %2263 = vrot.lane.b32.xlu0 %v2230, 127
        %v2264 = vpop.permute.xlu0 %2263
        %2265 = vrot.lane.b32.xlu0 %v2231, 127
        %v2266 = vpop.permute.xlu0 %2265
        %2267 = vrot.lane.b32.xlu0 %v2232, 127
        %v2268 = vpop.permute.xlu0 %2267
        %v2269 = vsel %vm665, %v2246, %v2248
        %v2270 = vsel %vm665, %v2248, %v2250
        %v2271 = vsel %vm665, %v2252, %v2254
        %v2272 = vsel %vm665, %v2254, %v2256
        %v2273 = vsel %vm665, %v2258, %v2260
        %v2274 = vsel %vm665, %v2260, %v2262
        %v2275 = vsel %vm665, %v2264, %v2266
        %v2276 = vsel %vm665, %v2266, %v2268
        %v2285 = vsel %vm608, %v2269, 0.0
        %v2286 = vsel %vm609, %v2270, 0.0
        %v2287 = vsel %vm608, %v2271, 0.0
        %v2288 = vsel %vm609, %v2272, 0.0
        %v2289 = vsel %vm608, %v2273, 0.0
        %v2290 = vsel %vm609, %v2274, 0.0
        %v2291 = vsel %vm608, %v2275, 0.0
        %v2292 = vsel %vm609, %v2276, 0.0
        %2293 = vst [vmem:[#allocation3 + $0x140] sm:$0xff] %v2285
        %2294 = vst [vmem:[#allocation3 + $0x148] sm:$0xff] %v2286
        %2295 = vst [vmem:[#allocation3 + $0x150] sm:$0xff] %v2287
        %2296 = vst [vmem:[#allocation3 + $0x158] sm:$0xff] %v2288
        %2297 = vst [vmem:[#allocation3 + $0x160] sm:$0xff] %v2289
        %2298 = vst [vmem:[#allocation3 + $0x168] sm:$0xff] %v2290
        %2299 = vst [vmem:[#allocation3 + $0x170] sm:$0xff] %v2291
        %2300 = vst [vmem:[#allocation3 + $0x178] sm:$0xff] %v2292
        %v2301 = vld [vmem:[#allocation2 + $0x8] sm:$0xff]
        %v2302 = vld [vmem:[#allocation2 + $0x10] sm:$0xff]
        %v2303 = vld [vmem:[#allocation2 + $0x18] sm:$0xff]
        %v2304 = vld [vmem:[#allocation2 + $0x28] sm:$0xff]
        %v2305 = vld [vmem:[#allocation2 + $0x30] sm:$0xff]
        %v2306 = vld [vmem:[#allocation2 + $0x38] sm:$0xff]
        %v2307 = vld [vmem:[#allocation2 + $0x48] sm:$0xff]
        %v2308 = vld [vmem:[#allocation2 + $0x50] sm:$0xff]
        %v2309 = vld [vmem:[#allocation2 + $0x58] sm:$0xff]
        %v2310 = vld [vmem:[#allocation2 + $0x68] sm:$0xff]
        %v2311 = vld [vmem:[#allocation2 + $0x70] sm:$0xff]
        %v2312 = vld [vmem:[#allocation2 + $0x78] sm:$0xff]
        %2325 = vrot.lane.b32.xlu0 %v2301, 113
        %v2326 = vpop.permute.xlu0 %2325
        %2327 = vrot.lane.b32.xlu0 %v2302, 113
        %v2328 = vpop.permute.xlu0 %2327
        %2329 = vrot.lane.b32.xlu0 %v2303, 113
        %v2330 = vpop.permute.xlu0 %2329
        %2331 = vrot.lane.b32.xlu0 %v2304, 113
        %v2332 = vpop.permute.xlu0 %2331
        %2333 = vrot.lane.b32.xlu0 %v2305, 113
        %v2334 = vpop.permute.xlu0 %2333
        %2335 = vrot.lane.b32.xlu0 %v2306, 113
        %v2336 = vpop.permute.xlu0 %2335
        %2337 = vrot.lane.b32.xlu0 %v2307, 113
        %v2338 = vpop.permute.xlu0 %2337
        %2339 = vrot.lane.b32.xlu0 %v2308, 113
        %v2340 = vpop.permute.xlu0 %2339
        %2341 = vrot.lane.b32.xlu0 %v2309, 113
        %v2342 = vpop.permute.xlu0 %2341
        %2343 = vrot.lane.b32.xlu0 %v2310, 113
        %v2344 = vpop.permute.xlu0 %2343
        %2345 = vrot.lane.b32.xlu0 %v2311, 113
        %v2346 = vpop.permute.xlu0 %2345
        %2347 = vrot.lane.b32.xlu0 %v2312, 113
        %v2348 = vpop.permute.xlu0 %2347
        %v2349 = vsel %vm686, %v2326, %v2328
        %v2350 = vsel %vm686, %v2328, %v2330
        %v2351 = vsel %vm686, %v2332, %v2334
        %v2352 = vsel %vm686, %v2334, %v2336
        %v2353 = vsel %vm686, %v2338, %v2340
        %v2354 = vsel %vm686, %v2340, %v2342
        %v2355 = vsel %vm686, %v2344, %v2346
        %v2356 = vsel %vm686, %v2346, %v2348
        %v2365 = vsel %vm564, %v2349, 0.0
        %v2366 = vsel %vm565, %v2350, 0.0
        %v2367 = vsel %vm564, %v2351, 0.0
        %v2368 = vsel %vm565, %v2352, 0.0
        %v2369 = vsel %vm564, %v2353, 0.0
        %v2370 = vsel %vm565, %v2354, 0.0
        %v2371 = vsel %vm564, %v2355, 0.0
        %v2372 = vsel %vm565, %v2356, 0.0
        %2373 = vst [vmem:[#allocation3 + $0x180] sm:$0xff] %v2365
        %2374 = vst [vmem:[#allocation3 + $0x188] sm:$0xff] %v2366
        %2375 = vst [vmem:[#allocation3 + $0x190] sm:$0xff] %v2367
        %2376 = vst [vmem:[#allocation3 + $0x198] sm:$0xff] %v2368
        %2377 = vst [vmem:[#allocation3 + $0x1a0] sm:$0xff] %v2369
        %2378 = vst [vmem:[#allocation3 + $0x1a8] sm:$0xff] %v2370
        %2379 = vst [vmem:[#allocation3 + $0x1b0] sm:$0xff] %v2371
        %2380 = vst [vmem:[#allocation3 + $0x1b8] sm:$0xff] %v2372
        %v2381 = vld [vmem:[#allocation2 + $0x8] sm:$0xff]
        %v2382 = vld [vmem:[#allocation2 + $0x10] sm:$0xff]
        %v2383 = vld [vmem:[#allocation2 + $0x18] sm:$0xff]
        %v2384 = vld [vmem:[#allocation2 + $0x28] sm:$0xff]
        %v2385 = vld [vmem:[#allocation2 + $0x30] sm:$0xff]
        %v2386 = vld [vmem:[#allocation2 + $0x38] sm:$0xff]
        %v2387 = vld [vmem:[#allocation2 + $0x48] sm:$0xff]
        %v2388 = vld [vmem:[#allocation2 + $0x50] sm:$0xff]
        %v2389 = vld [vmem:[#allocation2 + $0x58] sm:$0xff]
        %v2390 = vld [vmem:[#allocation2 + $0x68] sm:$0xff]
        %v2391 = vld [vmem:[#allocation2 + $0x70] sm:$0xff]
        %v2392 = vld [vmem:[#allocation2 + $0x78] sm:$0xff]
        %2405 = vrot.lane.b32.xlu0 %v2381, 112
        %v2406 = vpop.permute.xlu0 %2405
        %2407 = vrot.lane.b32.xlu0 %v2382, 112
        %v2408 = vpop.permute.xlu0 %2407
        %2409 = vrot.lane.b32.xlu0 %v2383, 112
        %v2410 = vpop.permute.xlu0 %2409
        %2411 = vrot.lane.b32.xlu0 %v2384, 112
        %v2412 = vpop.permute.xlu0 %2411
        %2413 = vrot.lane.b32.xlu0 %v2385, 112
        %v2414 = vpop.permute.xlu0 %2413
        %2415 = vrot.lane.b32.xlu0 %v2386, 112
        %v2416 = vpop.permute.xlu0 %2415
        %2417 = vrot.lane.b32.xlu0 %v2387, 112
        %v2418 = vpop.permute.xlu0 %2417
        %2419 = vrot.lane.b32.xlu0 %v2388, 112
        %v2420 = vpop.permute.xlu0 %2419
        %2421 = vrot.lane.b32.xlu0 %v2389, 112
        %v2422 = vpop.permute.xlu0 %2421
        %2423 = vrot.lane.b32.xlu0 %v2390, 112
        %v2424 = vpop.permute.xlu0 %2423
        %2425 = vrot.lane.b32.xlu0 %v2391, 112
        %v2426 = vpop.permute.xlu0 %2425
        %2427 = vrot.lane.b32.xlu0 %v2392, 112
        %v2428 = vpop.permute.xlu0 %2427
        %v2429 = vsel %vm707, %v2406, %v2408
        %v2430 = vsel %vm707, %v2408, %v2410
        %v2431 = vsel %vm707, %v2412, %v2414
        %v2432 = vsel %vm707, %v2414, %v2416
        %v2433 = vsel %vm707, %v2418, %v2420
        %v2434 = vsel %vm707, %v2420, %v2422
        %v2435 = vsel %vm707, %v2424, %v2426
        %v2436 = vsel %vm707, %v2426, %v2428
        %2445 = vst [vmem:[#allocation3 + $0x1c0] sm:$0xff] %v2429
        %2446 = vst [vmem:[#allocation3 + $0x1c8] sm:$0xff] %v2430
        %2447 = vst [vmem:[#allocation3 + $0x1d0] sm:$0xff] %v2431
        %2448 = vst [vmem:[#allocation3 + $0x1d8] sm:$0xff] %v2432
        %2449 = vst [vmem:[#allocation3 + $0x1e0] sm:$0xff] %v2433
        %2450 = vst [vmem:[#allocation3 + $0x1e8] sm:$0xff] %v2434
        %2451 = vst [vmem:[#allocation3 + $0x1f0] sm:$0xff] %v2435
        %2452 = vst [vmem:[#allocation3 + $0x1f8] sm:$0xff] %v2436
        %v2453 = vld [vmem:[#allocation2 + $0x8] sm:$0xff]
        %v2454 = vld [vmem:[#allocation2 + $0x10] sm:$0xff]
        %v2455 = vld [vmem:[#allocation2 + $0x18] sm:$0xff]
        %v2456 = vld [vmem:[#allocation2 + $0x28] sm:$0xff]
        %v2457 = vld [vmem:[#allocation2 + $0x30] sm:$0xff]
        %v2458 = vld [vmem:[#allocation2 + $0x38] sm:$0xff]
        %v2459 = vld [vmem:[#allocation2 + $0x48] sm:$0xff]
        %v2460 = vld [vmem:[#allocation2 + $0x50] sm:$0xff]
        %v2461 = vld [vmem:[#allocation2 + $0x58] sm:$0xff]
        %v2462 = vld [vmem:[#allocation2 + $0x68] sm:$0xff]
        %v2463 = vld [vmem:[#allocation2 + $0x70] sm:$0xff]
        %v2464 = vld [vmem:[#allocation2 + $0x78] sm:$0xff]
        %2477 = vrot.lane.b32.xlu0 %v2453, 111
        %v2478 = vpop.permute.xlu0 %2477
        %2479 = vrot.lane.b32.xlu0 %v2454, 111
        %v2480 = vpop.permute.xlu0 %2479
        %2481 = vrot.lane.b32.xlu0 %v2455, 111
        %v2482 = vpop.permute.xlu0 %2481
        %2483 = vrot.lane.b32.xlu0 %v2456, 111
        %v2484 = vpop.permute.xlu0 %2483
        %2485 = vrot.lane.b32.xlu0 %v2457, 111
        %v2486 = vpop.permute.xlu0 %2485
        %2487 = vrot.lane.b32.xlu0 %v2458, 111
        %v2488 = vpop.permute.xlu0 %2487
        %2489 = vrot.lane.b32.xlu0 %v2459, 111
        %v2490 = vpop.permute.xlu0 %2489
        %2491 = vrot.lane.b32.xlu0 %v2460, 111
        %v2492 = vpop.permute.xlu0 %2491
        %2493 = vrot.lane.b32.xlu0 %v2461, 111
        %v2494 = vpop.permute.xlu0 %2493
        %2495 = vrot.lane.b32.xlu0 %v2462, 111
        %v2496 = vpop.permute.xlu0 %2495
        %2497 = vrot.lane.b32.xlu0 %v2463, 111
        %v2498 = vpop.permute.xlu0 %2497
        %2499 = vrot.lane.b32.xlu0 %v2464, 111
        %v2500 = vpop.permute.xlu0 %2499
        %v2501 = vsel %vm726, %v2478, %v2480
        %v2502 = vsel %vm726, %v2480, %v2482
        %v2503 = vsel %vm726, %v2484, %v2486
        %v2504 = vsel %vm726, %v2486, %v2488
        %v2505 = vsel %vm726, %v2490, %v2492
        %v2506 = vsel %vm726, %v2492, %v2494
        %v2507 = vsel %vm726, %v2496, %v2498
        %v2508 = vsel %vm726, %v2498, %v2500
        %v2517 = vsel %vm608, %v2501, 0.0
        %v2518 = vsel %vm609, %v2502, 0.0
        %v2519 = vsel %vm608, %v2503, 0.0
        %v2520 = vsel %vm609, %v2504, 0.0
        %v2521 = vsel %vm608, %v2505, 0.0
        %v2522 = vsel %vm609, %v2506, 0.0
        %v2523 = vsel %vm608, %v2507, 0.0
        %v2524 = vsel %vm609, %v2508, 0.0
        %2525 = vst [vmem:[#allocation3 + $0x200] sm:$0xff] %v2517
        %2526 = vst [vmem:[#allocation3 + $0x208] sm:$0xff] %v2518
        %2527 = vst [vmem:[#allocation3 + $0x210] sm:$0xff] %v2519
        %2528 = vst [vmem:[#allocation3 + $0x218] sm:$0xff] %v2520
        %2529 = vst [vmem:[#allocation3 + $0x220] sm:$0xff] %v2521
        %2530 = vst [vmem:[#allocation3 + $0x228] sm:$0xff] %v2522
        %2531 = vst [vmem:[#allocation3 + $0x230] sm:$0xff] %v2523
        %2532 = vst [vmem:[#allocation3 + $0x238] sm:$0xff] %v2524
        %v2533 = vld [vmem:[#allocation3] sm:$0xff]
        %v2534 = vld [vmem:[#allocation3 + $0x8] sm:$0xff]
        %v2535 = vld [vmem:[#allocation3 + $0x10] sm:$0xff]
        %v2536 = vld [vmem:[#allocation3 + $0x18] sm:$0xff]
        %v2537 = vld [vmem:[#allocation3 + $0x20] sm:$0xff]
        %v2538 = vld [vmem:[#allocation3 + $0x28] sm:$0xff]
        %v2539 = vld [vmem:[#allocation3 + $0x30] sm:$0xff]
        %v2540 = vld [vmem:[#allocation3 + $0x38] sm:$0xff]
        %v2541 = vld [vmem:[#allocation3 + $0x40] sm:$0xff]
        %v2542 = vld [vmem:[#allocation3 + $0x48] sm:$0xff]
        %v2543 = vld [vmem:[#allocation3 + $0x50] sm:$0xff]
        %v2544 = vld [vmem:[#allocation3 + $0x58] sm:$0xff]
        %v2545 = vld [vmem:[#allocation3 + $0x60] sm:$0xff]
        %v2546 = vld [vmem:[#allocation3 + $0x68] sm:$0xff]
        %v2547 = vld [vmem:[#allocation3 + $0x70] sm:$0xff]
        %v2548 = vld [vmem:[#allocation3 + $0x78] sm:$0xff]
        %v2549 = vld [vmem:[#allocation3 + $0x80] sm:$0xff]
        %v2550 = vld [vmem:[#allocation3 + $0x88] sm:$0xff]
        %v2551 = vld [vmem:[#allocation3 + $0x90] sm:$0xff]
        %v2552 = vld [vmem:[#allocation3 + $0x98] sm:$0xff]
        %v2553 = vld [vmem:[#allocation3 + $0xa0] sm:$0xff]
        %v2554 = vld [vmem:[#allocation3 + $0xa8] sm:$0xff]
        %v2555 = vld [vmem:[#allocation3 + $0xb0] sm:$0xff]
        %v2556 = vld [vmem:[#allocation3 + $0xb8] sm:$0xff]
        %v2557 = vld [vmem:[#allocation3 + $0xc0] sm:$0xff]
        %v2558 = vld [vmem:[#allocation3 + $0xc8] sm:$0xff]
        %v2559 = vld [vmem:[#allocation3 + $0xd0] sm:$0xff]
        %v2560 = vld [vmem:[#allocation3 + $0xd8] sm:$0xff]
        %v2561 = vld [vmem:[#allocation3 + $0xe0] sm:$0xff]
        %v2562 = vld [vmem:[#allocation3 + $0xe8] sm:$0xff]
        %v2563 = vld [vmem:[#allocation3 + $0xf0] sm:$0xff]
        %v2564 = vld [vmem:[#allocation3 + $0xf8] sm:$0xff]
        %v2565 = vld [vmem:[#allocation3 + $0x100] sm:$0xff]
        %v2566 = vld [vmem:[#allocation3 + $0x108] sm:$0xff]
        %v2567 = vld [vmem:[#allocation3 + $0x110] sm:$0xff]
        %v2568 = vld [vmem:[#allocation3 + $0x118] sm:$0xff]
        %v2569 = vld [vmem:[#allocation3 + $0x120] sm:$0xff]
        %v2570 = vld [vmem:[#allocation3 + $0x128] sm:$0xff]
        %v2571 = vld [vmem:[#allocation3 + $0x130] sm:$0xff]
        %v2572 = vld [vmem:[#allocation3 + $0x138] sm:$0xff]
        %v2573 = vld [vmem:[#allocation3 + $0x140] sm:$0xff]
        %v2574 = vld [vmem:[#allocation3 + $0x148] sm:$0xff]
        %v2575 = vld [vmem:[#allocation3 + $0x150] sm:$0xff]
        %v2576 = vld [vmem:[#allocation3 + $0x158] sm:$0xff]
        %v2577 = vld [vmem:[#allocation3 + $0x160] sm:$0xff]
        %v2578 = vld [vmem:[#allocation3 + $0x168] sm:$0xff]
        %v2579 = vld [vmem:[#allocation3 + $0x170] sm:$0xff]
        %v2580 = vld [vmem:[#allocation3 + $0x178] sm:$0xff]
        %v2581 = vld [vmem:[#allocation3 + $0x180] sm:$0xff]
        %v2582 = vld [vmem:[#allocation3 + $0x188] sm:$0xff]
        %v2583 = vld [vmem:[#allocation3 + $0x190] sm:$0xff]
        %v2584 = vld [vmem:[#allocation3 + $0x198] sm:$0xff]
        %v2585 = vld [vmem:[#allocation3 + $0x1a0] sm:$0xff]
        %v2586 = vld [vmem:[#allocation3 + $0x1a8] sm:$0xff]
        %v2587 = vld [vmem:[#allocation3 + $0x1b0] sm:$0xff]
        %v2588 = vld [vmem:[#allocation3 + $0x1b8] sm:$0xff]
        %v2589 = vld [vmem:[#allocation3 + $0x1c0] sm:$0xff]
        %v2590 = vld [vmem:[#allocation3 + $0x1c8] sm:$0xff]
        %v2591 = vld [vmem:[#allocation3 + $0x1d0] sm:$0xff]
        %v2592 = vld [vmem:[#allocation3 + $0x1d8] sm:$0xff]
        %v2593 = vld [vmem:[#allocation3 + $0x1e0] sm:$0xff]
        %v2594 = vld [vmem:[#allocation3 + $0x1e8] sm:$0xff]
        %v2595 = vld [vmem:[#allocation3 + $0x1f0] sm:$0xff]
        %v2596 = vld [vmem:[#allocation3 + $0x1f8] sm:$0xff]
        %v2597 = vld [vmem:[#allocation3 + $0x200] sm:$0xff]
        %v2598 = vld [vmem:[#allocation3 + $0x208] sm:$0xff]
        %v2599 = vld [vmem:[#allocation3 + $0x210] sm:$0xff]
        %v2600 = vld [vmem:[#allocation3 + $0x218] sm:$0xff]
        %v2601 = vld [vmem:[#allocation3 + $0x220] sm:$0xff]
        %v2602 = vld [vmem:[#allocation3 + $0x228] sm:$0xff]
        %v2603 = vld [vmem:[#allocation3 + $0x230] sm:$0xff]
        %v2604 = vld [vmem:[#allocation3 + $0x238] sm:$0xff]
        %v2605 = vpack.c.bf16 %v2535, %v2533
        %v2606 = vpack.c.bf16 %v2536, %v2534
        %v2607 = vpack.c.bf16 %v2539, %v2537
        %v2608 = vpack.c.bf16 %v2540, %v2538
        %v2609 = vpack.c.bf16 %v2543, %v2541
        %v2610 = vpack.c.bf16 %v2544, %v2542
        %v2611 = vpack.c.bf16 %v2547, %v2545
        %v2612 = vpack.c.bf16 %v2548, %v2546
        %v2613 = vpack.c.bf16 %v2551, %v2549
        %v2614 = vpack.c.bf16 %v2552, %v2550
        %v2615 = vpack.c.bf16 %v2555, %v2553
        %v2616 = vpack.c.bf16 %v2556, %v2554
        %v2617 = vpack.c.bf16 %v2559, %v2557
        %v2618 = vpack.c.bf16 %v2560, %v2558
        %v2619 = vpack.c.bf16 %v2563, %v2561
        %v2620 = vpack.c.bf16 %v2564, %v2562
        %v2621 = vpack.c.bf16 %v2567, %v2565
        %v2622 = vpack.c.bf16 %v2568, %v2566
        %v2623 = vpack.c.bf16 %v2571, %v2569
        %v2624 = vpack.c.bf16 %v2572, %v2570
        %v2625 = vpack.c.bf16 %v2575, %v2573
        %v2626 = vpack.c.bf16 %v2576, %v2574
        %v2627 = vpack.c.bf16 %v2579, %v2577
        %v2628 = vpack.c.bf16 %v2580, %v2578
        %v2629 = vpack.c.bf16 %v2583, %v2581
        %v2630 = vpack.c.bf16 %v2584, %v2582
        %v2631 = vpack.c.bf16 %v2587, %v2585
        %v2632 = vpack.c.bf16 %v2588, %v2586
        %v2633 = vpack.c.bf16 %v2591, %v2589
        %v2634 = vpack.c.bf16 %v2592, %v2590
        %v2635 = vpack.c.bf16 %v2595, %v2593
        %v2636 = vpack.c.bf16 %v2596, %v2594
        %v2637 = vpack.c.bf16 %v2599, %v2597
        %v2638 = vpack.c.bf16 %v2600, %v2598
        %v2639 = vpack.c.bf16 %v2603, %v2601
        %v2640 = vpack.c.bf16 %v2604, %v2602
        %2642 = vset.pattern.permute.xlu0 0
        %2643 = vperm.xlu0 %2642, %v1889
        %v2644 = vpop.permute.xlu0 %2643
        %2647 = vset.pattern.permute.xlu0 0
        %2648 = vperm.xlu0 %2647, %v1890
        %v2649 = vpop.permute.xlu0 %2648
        %2652 = vset.pattern.permute.xlu0 0
        %2653 = vperm.xlu0 %2652, %v1891
        %v2654 = vpop.permute.xlu0 %2653
        %2657 = vset.pattern.permute.xlu0 0
        %2658 = vperm.xlu0 %2657, %v1892
        %v2659 = vpop.permute.xlu0 %2658
        %v2669 = vunpack.c.l.b16 %v1880
        %v2670 = vunpack.c.h.b16 %v1880
        %v2671 = vunpack.c.l.b16 %v1881
        %v2672 = vunpack.c.l.b16 %v1882
        %v2673 = vunpack.c.h.b16 %v1882
        %v2674 = vunpack.c.l.b16 %v1883
        %v2675 = vunpack.c.l.b16 %v1884
        %v2676 = vunpack.c.h.b16 %v1884
        %v2677 = vunpack.c.l.b16 %v1885
        %v2678 = vunpack.c.l.b16 %v1886
        %v2679 = vunpack.c.h.b16 %v1886
        %v2680 = vunpack.c.l.b16 %v1887
        %v2681 = vpack.c.b16 %v2672, %v2669
        %v2682 = vpack.c.b16 %v2673, %v2670
        %v2683 = vpack.c.b16 %v2674, %v2671
        %v2684 = vpack.c.b16 %v2678, %v2675
        %v2685 = vpack.c.b16 %v2679, %v2676
        %v2686 = vpack.c.b16 %v2680, %v2677
        %v2692 = vsel %vm1686, %v2683, 0
        %v2695 = vsel %vm1686, %v2686, 0
        %2697 = vmatprep.subr.bf16.mxu0 %v2606
        %2698 = vmatpush1.bf16.msra.mxu0 %v2605
        %2699 = vmatprep.subr.bf16.mxu0 %v2608
        %2700 = vmatpush1.bf16.msra.mxu0 %v2607
        %2701 = vmatprep.subr.bf16.mxu0 %v2610
        %2702 = vmatpush1.bf16.msra.mxu0 %v2609
        %2703 = vmatprep.subr.bf16.mxu0 %v2612
        %2704 = vmatpush1.bf16.msra.mxu0 %v2611
        %2705 = vmatprep.subr.bf16.mxu0 %v2614
        %2706 = vmatpush1.bf16.msra.mxu0 %v2613
        %2707 = vmatprep.subr.bf16.mxu0 %v2616
        %2708 = vmatpush1.bf16.msra.mxu0 %v2615
        %2709 = vmatprep.subr.bf16.mxu0 %v2618
        %2710 = vmatpush1.bf16.msra.mxu0 %v2617
        %2711 = vmatprep.subr.bf16.mxu0 %v2620
        %2712 = vmatpush1.bf16.msra.mxu0 %v2619
        %2713 = vmatprep.subr.bf16.mxu0 %v2622
        %2714 = vmatpush1.bf16.msra.mxu0 %v2621
        %2715 = vmatprep.subr.bf16.mxu0 %v2624
        %2716 = vmatpush1.bf16.msra.mxu0 %v2623
        %2717 = vmatprep.subr.bf16.mxu0 %v2626
        %2718 = vmatpush1.bf16.msra.mxu0 %v2625
        %2719 = vmatprep.subr.bf16.mxu0 %v2628
        %2720 = vmatpush1.bf16.msra.mxu0 %v2627
        %2721 = vmatprep.subr.bf16.mxu0 %v2630
        %2722 = vmatpush1.bf16.msra.mxu0 %v2629
        %2723 = vmatprep.subr.bf16.mxu0 %v2632
        %2724 = vmatpush1.bf16.msra.mxu0 %v2631
        %2725 = vmatprep.subr.bf16.mxu0 %v2634
        %2726 = vmatpush1.bf16.msra.mxu0 %v2633
        %2727 = vmatprep.subr.bf16.mxu0 %v2636
        %2728 = vmatpush1.bf16.msra.mxu0 %v2635
        %2729 = vmatprep.mubr.bf16.mxu0 %v2682
        %2730 = vmatmul.mubr.bf16.gmra.mrb[0].mxu0 %v2681
        %v2731 = vpop.f32.mrb[0].mxu0
        %v2732 = vadd.f32 %v2644, %v2731
        %v2733 = vpop.f32.mrb[0].mxu0
        %v2734 = vadd.f32 %v2644, %v2733
        %v2735 = vpop.f32.mrb[0].mxu0
        %v2736 = vadd.f32 %v2649, %v2735
        %v2737 = vpop.f32.mrb[0].mxu0
        %v2738 = vadd.f32 %v2649, %v2737
        %2739 = vmatprep.mubr.bf16.mxu0 %v2685
        %2740 = vmatmul.mubr.bf16.gmra.mrb[0].mxu0 %v2684
        %v2741 = vpop.f32.mrb[0].mxu0
        %v2742 = vadd.f32 %v2654, %v2741
        %v2743 = vpop.f32.mrb[0].mxu0
        %v2744 = vadd.f32 %v2654, %v2743
        %v2745 = vpop.f32.mrb[0].mxu0
        %v2746 = vadd.f32 %v2659, %v2745
        %v2747 = vpop.f32.mrb[0].mxu0
        %v2748 = vadd.f32 %v2659, %v2747
        %2749 = vdwg.mxu0
        %2750 = vmatprep.subr.bf16.mxu0 %v2638
        %2751 = vmatpush1.bf16.msra.mxu0 %v2637
        %2752 = vmatprep.subr.bf16.mxu0 %v2640
        %2753 = vmatpush1.bf16.msra.mxu0 %v2639
        %2754 = vmatprep.subr.bf16.mxu0 0
        %2755 = vmatpush1.bf16.msra.mxu0 0
        %2756 = vmatprep.subr.bf16.mxu0 0
        %2757 = vmatpush1.bf16.msra.mxu0 0
        %2758 = vmatprep.subr.bf16.mxu0 0
        %2759 = vmatpush1.bf16.msra.mxu0 0
        %2760 = vmatprep.subr.bf16.mxu0 0
        %2761 = vmatpush1.bf16.msra.mxu0 0
        %2762 = vmatprep.subr.bf16.mxu0 0
        %2763 = vmatpush1.bf16.msra.mxu0 0
        %2764 = vmatprep.subr.bf16.mxu0 0
        %2765 = vmatpush1.bf16.msra.mxu0 0
        %2766 = vmatprep.subr.bf16.mxu0 0
        %2767 = vmatpush1.bf16.msra.mxu0 0
        %2768 = vmatprep.subr.bf16.mxu0 0
        %2769 = vmatpush1.bf16.msra.mxu0 0
        %2770 = vmatprep.subr.bf16.mxu0 0
        %2771 = vmatpush1.bf16.msra.mxu0 0
        %2772 = vmatprep.subr.bf16.mxu0 0
        %2773 = vmatpush1.bf16.msra.mxu0 0
        %2774 = vmatprep.subr.bf16.mxu0 0
        %2775 = vmatpush1.bf16.msra.mxu0 0
        %2776 = vmatprep.subr.bf16.mxu0 0
        %2777 = vmatpush1.bf16.msra.mxu0 0
        %2778 = vmatprep.subr.bf16.mxu0 0
        %2779 = vmatpush1.bf16.msra.mxu0 0
        %2780 = vmatprep.subr.bf16.mxu0 0
        %2781 = vmatpush1.bf16.msra.mxu0 0
        %2782 = vmatprep.mubr.bf16.mxu0 0
        %2783 = vmatmul.mubr.bf16.gmra.mrb[0].mxu0 %v2692
        %v2784 = vpop.f32.mrb[0].mxu0
        %v2785 = vadd.f32 %v2732, %v2784
        %v2786 = vpop.f32.mrb[0].mxu0
        %v2787 = vadd.f32 %v2734, %v2786
        %v2788 = vpop.f32.mrb[0].mxu0
        %v2789 = vadd.f32 %v2736, %v2788
        %v2790 = vpop.f32.mrb[0].mxu0
        %v2791 = vadd.f32 %v2738, %v2790
        %2792 = vmatprep.mubr.bf16.mxu0 0
        %2793 = vmatmul.mubr.bf16.gmra.mrb[0].mxu0 %v2695
        %v2794 = vpop.f32.mrb[0].mxu0
        %v2795 = vadd.f32 %v2742, %v2794
        %v2796 = vpop.f32.mrb[0].mxu0
        %v2797 = vadd.f32 %v2744, %v2796
        %v2798 = vpop.f32.mrb[0].mxu0
        %v2799 = vadd.f32 %v2746, %v2798
        %v2800 = vpop.f32.mrb[0].mxu0
        %v2801 = vadd.f32 %v2748, %v2800
        %2802 = vdwg.mxu0
        %v2803 = vmax.f32 %v2785, 0.0
        %v2804 = vmax.f32 %v2787, 0.0
        %v2805 = vmax.f32 %v2789, 0.0
        %v2806 = vmax.f32 %v2791, 0.0
        %v2807 = vmax.f32 %v2795, 0.0
        %v2808 = vmax.f32 %v2797, 0.0
        %v2809 = vmax.f32 %v2799, 0.0
        %v2810 = vmax.f32 %v2801, 0.0
        %s2811 = scalar_lea.vmem %s440, 32 [#allocation4]
        %v2812 = vld [vmem:[%s2811] sm:$0xff]
        %v2813 = vld [vmem:[%s2811 + $0x8] sm:$0xff]
        %v2814 = vld [vmem:[%s2811 + $0x10] sm:$0xff]
        %v2815 = vld [vmem:[%s2811 + $0x18] sm:$0xff]
        %2817 = vset.pattern.permute.xlu0 0
        %2818 = vperm.xlu0 %2817, %v2812
        %v2819 = vpop.permute.xlu0 %2818
        %2822 = vset.pattern.permute.xlu0 0
        %2823 = vperm.xlu0 %2822, %v2813
        %v2824 = vpop.permute.xlu0 %2823
        %2827 = vset.pattern.permute.xlu0 0
        %2828 = vperm.xlu0 %2827, %v2814
        %v2829 = vpop.permute.xlu0 %2828
        %2832 = vset.pattern.permute.xlu0 0
        %2833 = vperm.xlu0 %2832, %v2815
        %v2834 = vpop.permute.xlu0 %2833
        %v2836 = vmul.f32 %v2819, %v2803
        %v2837 = vmul.f32 %v2819, %v2804
        %v2838 = vmul.f32 %v2824, %v2805
        %v2839 = vmul.f32 %v2824, %v2806
        %v2840 = vmul.f32 %v2829, %v2807
        %v2841 = vmul.f32 %v2829, %v2808
        %v2842 = vmul.f32 %v2834, %v2809
        %v2843 = vmul.f32 %v2834, %v2810
        %s2844 = scalar_lea.vmem %s447, 32 [#allocation5]
        %v2845 = vld [vmem:[%s2844] sm:$0xff]
        %v2846 = vld [vmem:[%s2844 + $0x8] sm:$0xff]
        %v2847 = vld [vmem:[%s2844 + $0x10] sm:$0xff]
        %v2848 = vld [vmem:[%s2844 + $0x18] sm:$0xff]
        %2850 = vset.pattern.permute.xlu0 0
        %2851 = vperm.xlu0 %2850, %v2845
        %v2852 = vpop.permute.xlu0 %2851
        %2855 = vset.pattern.permute.xlu0 0
        %2856 = vperm.xlu0 %2855, %v2846
        %v2857 = vpop.permute.xlu0 %2856
        %2860 = vset.pattern.permute.xlu0 0
        %2861 = vperm.xlu0 %2860, %v2847
        %v2862 = vpop.permute.xlu0 %2861
        %2865 = vset.pattern.permute.xlu0 0
        %2866 = vperm.xlu0 %2865, %v2848
        %v2867 = vpop.permute.xlu0 %2866
        %v2869 = vadd.f32 %v2836, %v2852
        %v2870 = vadd.f32 %v2837, %v2852
        %v2871 = vadd.f32 %v2838, %v2857
        %v2872 = vadd.f32 %v2839, %v2857
        %v2873 = vadd.f32 %v2840, %v2862
        %v2874 = vadd.f32 %v2841, %v2862
        %v2875 = vadd.f32 %v2842, %v2867
        %v2876 = vadd.f32 %v2843, %v2867
        %v2877 = vld [vmem:[%s7] sm:$0x3]
        %v2878 = vpack.c.bf16 %v2871, %v2869
        %v2879 = vpack.c.bf16 %v2872, %v2870
        %v2880 = vpack.c.bf16 %v2875, %v2873
        %v2881 = vpack.c.bf16 %v2876, %v2874
        %v2882 = vld [vmem:[%s8] sm:$0x7]
        %2884 = vset.pattern.permute.xlu0 0
        %2885 = vperm.xlu0 %2884, %v2882
        %v2886 = vpop.permute.xlu0 %2885
        %v2889 = vsel %vm1686, %v2877, 0
        %2891 = vmatprep.subr.bf16.mxu0 %v2879
        %2892 = vmatpush1.bf16.msra.mxu0 %v2878
        %2893 = vmatprep.subr.bf16.mxu0 %v2881
        %2894 = vmatpush1.bf16.msra.mxu0 %v2880
        %2895 = vmatprep.subr.bf16.mxu0 0
        %2896 = vmatpush1.bf16.msra.mxu0 0
        %2897 = vmatprep.subr.bf16.mxu0 0
        %2898 = vmatpush1.bf16.msra.mxu0 0
        %2899 = vmatprep.subr.bf16.mxu0 0
        %2900 = vmatpush1.bf16.msra.mxu0 0
        %2901 = vmatprep.subr.bf16.mxu0 0
        %2902 = vmatpush1.bf16.msra.mxu0 0
        %2903 = vmatprep.subr.bf16.mxu0 0
        %2904 = vmatpush1.bf16.msra.mxu0 0
        %2905 = vmatprep.subr.bf16.mxu0 0
        %2906 = vmatpush1.bf16.msra.mxu0 0
        %2907 = vmatprep.subr.bf16.mxu0 0
        %2908 = vmatpush1.bf16.msra.mxu0 0
        %2909 = vmatprep.subr.bf16.mxu0 0
        %2910 = vmatpush1.bf16.msra.mxu0 0
        %2911 = vmatprep.subr.bf16.mxu0 0
        %2912 = vmatpush1.bf16.msra.mxu0 0
        %2913 = vmatprep.subr.bf16.mxu0 0
        %2914 = vmatpush1.bf16.msra.mxu0 0
        %2915 = vmatprep.subr.bf16.mxu0 0
        %2916 = vmatpush1.bf16.msra.mxu0 0
        %2917 = vmatprep.subr.bf16.mxu0 0
        %2918 = vmatpush1.bf16.msra.mxu0 0
        %2919 = vmatprep.subr.bf16.mxu0 0
        %2920 = vmatpush1.bf16.msra.mxu0 0
        %2921 = vmatprep.subr.bf16.mxu0 0
        %2922 = vmatpush1.bf16.msra.mxu0 0
        %2923 = vmatprep.mubr.bf16.mxu0 0
        %2924 = vmatmul.mubr.bf16.gmra.mrb[0].mxu0 %v2889
        %v2925 = vpop.f32.mrb[0].mxu0
        %v2926 = vadd.f32 %v2886, %v2925
        %v2927 = vpop.f32.mrb[0].mxu0
        %v2928 = vadd.f32 %v2886, %v2927
        %v2929 = vpop.f32.mrb[0].mxu0
        %v2930 = vpop.f32.mrb[0].mxu0
        %2931 = vdwg.mxu0
        %v2934 = vcombine.low %v2926, %v2928
        %2936 = vst [vmem:[%s498] sm:$0x77] %v2934
        %p2937 = scmp.lt.s32.totalorder %s20, 1
        %s2938 = scalar_select %p2937, %s20, 1
        %s2939 = smul.addr %s2938, 2
        %s2940 = smul.addr %s2939, 4
        %s2941 = scalar_lea.vmem %s9, %s2940
        // Predicated region
        $region133: #{utility_network_forward.1} parent=123 // pred_check
          %p2942 = pneg %p242
        $region134: #{utility_network_forward.1} parent=123 // pred_check_branch
          %2944 = sbr.rel (%p2942) target = $region136
        $region135: #{utility_network_forward.1} parent=123 // pred_region
          _
        $region136: #{utility_network_forward.1} parent=123 // pred_fallthru
          _
      $region124: #{utility_network_forward.1} parent=5 // pred_fallthru
        _
      %p2945 = scmp.le.s32.totalorder 2, %s15
      // Predicated region
      $region137: #{utility_network_forward.1} parent=5 // pred_check
        %p2946 = pneg %p2945
      $region138: #{utility_network_forward.1} parent=5 // pred_check_branch
        %2948 = sbr.rel (%p2946) target = $region140
      $region139: #{utility_network_forward.1} parent=5 // pred_region
        %s2949 = ssub.s32 %s15, 2
        // Predicated region
        $region141: #{utility_network_forward.1} parent=139 // pred_check
          %p2950 = pneg %p248
        $region142: #{utility_network_forward.1} parent=139 // pred_check_branch
          %2952 = sbr.rel (%p2950) target = $region144
        $region143: #{utility_network_forward.1} parent=139 // pred_region
          %p2953 = scmp.lt.s32.totalorder %s21, 1
          %s2954 = scalar_select %p2953, %s21, 1
          %s2955 = smul.addr %s2954, 2
          %s2956 = smul.addr %s2955, 4
          %s2957 = scalar_lea.vmem %s9, %s2956
        $region144: #{utility_network_forward.1} parent=139 // pred_fallthru
          _
      $region140: #{utility_network_forward.1} parent=5 // pred_fallthru
        _
    $region6: #{utility_network_forward.1} parent=1 // loop_footer
      %s19 = sadd.s32 1, %s15
    $region7: #{utility_network_forward.1} parent=1 // loop_footer_branch
      %14 = sbr.rel target = $region3
    $region8: #{utility_network_forward.1} parent=1 // loop_exit
      _

</llo_original>
